<compile_context>
chip_gen: v7x
topology: tpu7x:2x2x1
jax: 0.10.0
libtpu: 0.0.40
codegen_flags: <defaults>
</compile_context>

<pallas_src>
import functools

import jax
import jax.numpy as jnp
from jax import lax
from jax.experimental import pallas as pl
from jax.experimental.pallas import tpu as pltpu


# ------------------------------ Pallas kernel ------------------------------

def _make_fused_kernel(*, b, c_t, c_oo, kt, ks, t, n, pad_top, halo, eps):
    """temporal1(GLU) -> spatio(ks x grouped Linear+ReLU) -> temporal2(ReLU)
    -> BatchNorm2d(train stats) -> dropout(identity), all in one grid step.

    Layout: per-channel rows, batch-concatenated positions on lanes:
    (c, b*T*N) lane-dense slabs in NCHW-flat order."""
    tn = t * n
    L = b * tn
    nd = 2 * c_t - 1                       # number of spatio lane deltas
    ltot = L + 2 * halo
    inv_count = 1.0 / float(b * tn)

    def kernel(x_ref, w1_ref, b1_ref, w2_ref, b2_ref, tmask_ref,
               spc_ref, spb_ref, gamma_ref, beta_ref, o_ref, pad_ref):
        # ---- gather batches side-by-side on lanes (x_ref is time-padded) ----
        def batch_cat(off):
            return jnp.concatenate(
                [x_ref[bi, :, off:off + tn] for bi in range(b)], axis=-1)

        # ---- temporal conv 1 (+ GLU): one K = kt*c_t MXU matmul -------------
        taps1 = [batch_cat(dt * n) for dt in range(kt)]     # kt x (c_t, L) f32
        skip1 = taps1[pad_top]                              # center tap = residual
        xcat = jnp.concatenate(taps1, axis=0)               # (kt*c_t, L)
        c1 = jnp.dot(w1_ref[...], xcat.astype(jnp.bfloat16),
                     preferred_element_type=jnp.float32) + b1_ref[...]
        y = (c1[:c_t] + skip1) * jax.nn.sigmoid(c1[c_t:])   # GLU (f32, VPU/EUP)

        # zero the shared shifted-read scratch once (halo stays zero after)
        pad_ref[...] = jnp.zeros((c_t, ltot), jnp.float32)

        # ---- spatio layer: ks x grouped (c_t x c_t) mixes --------------------
        # PyTorch reshape(-1, c_t) mixes groups of c_t consecutive flat
        # elements -> per-delta coefficient rows (zero where the delta would
        # cross a group boundary) instead of a (tn, tn) block-diagonal weight.
        for i in range(ks):
            pad_ref[:, halo:halo + L] = y                    # aligned center store
            acc = y * spc_ref[i * nd + (c_t - 1)] + spb_ref[i]
            for k in range(nd):
                d = k - (c_t - 1)
                if d == 0:
                    continue
                acc = acc + (pad_ref[:, halo + d:halo + d + L]
                             * spc_ref[i * nd + k])
            y = jnp.maximum(acc, 0.0)

        # ---- temporal conv 2 + ReLU(conv + y): one MXU matmul ----------------
        pad_ref[:, halo:halo + L] = y
        taps2 = []
        for dt in range(kt):
            if dt == pad_top:
                taps2.append(y)
            else:
                off = halo + (dt - pad_top) * n
                taps2.append(pad_ref[:, off:off + L] * tmask_ref[dt])
        ycat = jnp.concatenate(taps2, axis=0)                # (kt*c_t, L)
        c2 = jnp.dot(w2_ref[...], ycat.astype(jnp.bfloat16),
                     preferred_element_type=jnp.float32) + b2_ref[...]
        act = jnp.maximum(c2 + y, 0.0)                       # c_t == c_oo residual

        # ---- BatchNorm2d (training batch stats), fused, two-pass -------------
        mean = jnp.sum(act, axis=-1, keepdims=True) * inv_count
        cen = act - mean
        var = jnp.sum(cen * cen, axis=-1, keepdims=True) * inv_count
        outn = cen * (gamma_ref[...] * lax.rsqrt(var + eps)) + beta_ref[...]

        # dropout: keep_prob == 1.0 -> identity
        # TODO(synk): keep_prob < 1.0 would need pltpu.prng_* in-kernel masking.
        for bi in range(b):
            o_ref[bi] = outn[:, bi * tn:(bi + 1) * tn]

    return kernel


# ------------------------------ full block --------------------------------

def st_conv_block_forward(x, params, *, ks, kt, channels, keep_prob, eps=1e-5):
    c_si, c_t, c_oo = channels
    b, c_in, t, n = x.shape
    tn = t * n
    L = b * tn
    pad_top = (kt - 1) // 2
    pad_bot = (kt - 1) - pad_top
    tpn = (t + kt - 1) * n
    nd = 2 * c_t - 1
    needed_halo = max(pad_top * n, pad_bot * n, c_t - 1, 1)
    halo = ((needed_halo + 127) // 128) * 128       # 128-aligned center stores

    assert c_in == c_si
    if c_si > c_t:
        # TODO(synk): c_in > c_out needs the 1x1-conv projection path.
        raise NotImplementedError("c_in > c_out projection not implemented")
    # TODO(synk): c_t != c_oo would need channel zero-pad on the conv2 residual.
    assert c_t == c_oo, "fused kernel assumes c_t == c_oo"
    assert tn % c_t == 0, "T*N must be a multiple of c_t (grouped spatio mix)"

    f32 = jnp.float32

    # channel zero-pad to c_t and 'same' time-pad once, on the raw NCHW input.
    x1p = jnp.pad(x, ((0, 0), (0, c_t - c_si), (pad_top, pad_bot), (0, 0)))
    x1p = x1p.reshape(b, c_t, tpn).astype(f32)

    # temporal conv weights stacked over taps -> single K = kt*c_t matmuls.
    # column order: [tap0 | tap1 | ...], each tap block ordered by input chan.
    w1s = jnp.transpose(params["w_t1"][:, :, :, 0], (0, 2, 1)).reshape(
        2 * c_t, kt * c_t).astype(jnp.bfloat16)          # bf16 MXU operands
    w2s = jnp.transpose(params["w_t2"][:, :, :, 0], (0, 2, 1)).reshape(
        c_oo, kt * c_t).astype(jnp.bfloat16)
    b1 = params["b_t1"].reshape(2 * c_t, 1).astype(f32)
    b2 = params["b_t2"].reshape(c_oo, 1).astype(f32)

    # conv-2 per-tap time-boundary masks over the batch-concatenated lanes.
    t_idx = jnp.arange(t)
    tmask = jnp.stack([
        jnp.tile(jnp.repeat(((t_idx + (dt - pad_top) >= 0)
                             & (t_idx + (dt - pad_top) < t)).astype(f32), n), b)
        for dt in range(kt)]).reshape(kt, 1, L)

    # spatio grouped-mix coefficient rows (replaces the (ks, tn, tn) block-diag
    # weight): coef[layer, delta][lane] = W[l, l+delta] with l = lane mod c_t,
    # zero where l+delta falls outside the group.
    lidx = jnp.arange(c_t)
    rows = []
    for i in range(ks):
        for k in range(nd):
            d = k - (c_t - 1)
            src = lidx + d
            ok = (src >= 0) & (src < c_t)
            vals = jnp.where(ok, params["w_s"][i, lidx, jnp.clip(src, 0, c_t - 1)],
                             0.0)
            rows.append(jnp.tile(vals, L // c_t))
    spc = jnp.stack(rows).reshape(ks * nd, 1, L).astype(f32)
    spb = jnp.stack([jnp.tile(params["b_s"][i, 0], L // c_t)
                     for i in range(ks)]).reshape(ks, 1, L).astype(f32)

    gamma = params["gamma"].reshape(c_oo, 1).astype(f32)
    beta = params["beta"].reshape(c_oo, 1).astype(f32)

    kernel = _make_fused_kernel(b=b, c_t=c_t, c_oo=c_oo, kt=kt, ks=ks, t=t, n=n,
                                pad_top=pad_top, halo=halo, eps=eps)

    kk = kt * c_t
    flops = (2 * (2 * c_t) * kk * L            # temporal conv 1 (value + gate)
             + ks * nd * 2 * c_t * L           # spatio grouped mixes (VPU)
             + 2 * c_oo * kk * L               # temporal conv 2
             + 10 * c_oo * L)                  # GLU / residual / BN elementwise
    bytes_accessed = (4 * b * c_t * tpn                     # x (f32)
                      + 2 * (2 * c_t + c_oo) * kk           # bf16 weights
                      + 4 * (2 * c_t + 3 * c_oo)            # biases, gamma, beta
                      + 4 * (kt + ks * nd + ks) * L         # masks + coef rows
                      + 4 * b * c_oo * tn)                  # output

    out = pl.pallas_call(
        kernel,
        out_shape=jax.ShapeDtypeStruct((b, c_oo, tn), f32),
        grid=(1,),
        in_specs=[
            pl.BlockSpec((b, c_t, tpn), lambda i: (0, 0, 0)),      # x (padded)
            pl.BlockSpec((2 * c_t, kk), lambda i: (0, 0)),         # w1 stacked
            pl.BlockSpec((2 * c_t, 1), lambda i: (0, 0)),          # b1
            pl.BlockSpec((c_oo, kk), lambda i: (0, 0)),            # w2 stacked
            pl.BlockSpec((c_oo, 1), lambda i: (0, 0)),             # b2
            pl.BlockSpec((kt, 1, L), lambda i: (0, 0, 0)),         # time masks
            pl.BlockSpec((ks * nd, 1, L), lambda i: (0, 0, 0)),    # spatio coef
            pl.BlockSpec((ks, 1, L), lambda i: (0, 0, 0)),         # spatio bias
            pl.BlockSpec((c_oo, 1), lambda i: (0, 0)),             # gamma
            pl.BlockSpec((c_oo, 1), lambda i: (0, 0)),             # beta
        ],
        out_specs=pl.BlockSpec((b, c_oo, tn), lambda i: (0, 0, 0)),
        scratch_shapes=[pltpu.VMEM((c_t, L + 2 * halo), f32)],     # shared halo buf
        compiler_params=pltpu.CompilerParams(
            dimension_semantics=("arbitrary",)),
        cost_estimate=pl.CostEstimate(flops=flops,
                                      transcendentals=c_t * L + c_oo,
                                      bytes_accessed=bytes_accessed),
    )(x1p, w1s, b1, w2s, b2, tmask, spc, spb, gamma, beta)

    return out.reshape(b, c_oo, t, n)


# --------------------------- pure-JAX references ---------------------------

def _channel_match(x, c_out):
    """PyTorch branch: zero-pad channels when c_in < c_out, identity if equal."""
    b, c_in, h, w = x.shape
    if c_in == c_out:
        return x
    if c_in < c_out:
        fill = jnp.zeros((b, c_out - c_in, h, w), x.dtype)
        return jnp.concatenate([x, fill], axis=1)
    raise NotImplementedError("c_in > c_out projection not implemented")


def _reference_forward(x, params, *, ks, kt, channels, conv_dtype=jnp.float32):
    """Reference.  conv_dtype=bfloat16 mirrors the kernel's MXU operand cast."""
    c_si, c_t, c_oo = channels

    def same_conv(xin, w, bconv):
        pad_top = (kt - 1) // 2
        pad_bot = (kt - 1) - pad_top
        xp = jnp.pad(xin, ((0, 0), (0, 0), (pad_top, pad_bot), (0, 0)))
        out = lax.conv_general_dilated(
            xp.astype(conv_dtype), w.astype(conv_dtype),
            window_strides=(1, 1), padding="VALID",
            dimension_numbers=("NCHW", "OIHW", "NCHW"),
            preferred_element_type=jnp.float32)
        return out + bconv[None, :, None, None]

    x1 = _channel_match(x, c_t)
    conv = same_conv(x1, params["w_t1"], params["b_t1"])
    y = (conv[:, :c_t] + x1) * jax.nn.sigmoid(conv[:, c_t:])

    b, c, h, w = y.shape
    rows = y.reshape(-1, c_t)
    for i in range(ks):
        rows = jnp.maximum(rows @ params["w_s"][i].T + params["b_s"][i, 0], 0.0)
    y = rows.reshape(b, c_t, h, w)

    x2 = _channel_match(y, c_oo)
    conv2 = same_conv(x2, params["w_t2"], params["b_t2"])
    y = jnp.maximum(conv2 + x2, 0.0)

    mean = jnp.mean(y, axis=(0, 2, 3), keepdims=True)
    var = jnp.mean(jnp.square(y - mean), axis=(0, 2, 3), keepdims=True)
    y = (y - mean) * lax.rsqrt(var + 1e-5)
    return (y * params["gamma"][None, :, None, None]
            + params["beta"][None, :, None, None])


# ---------------------------------- main -----------------------------------

if __name__ == "__main__":
    # small shapes: batch=2, channels=(4, 8, 8), time=16, nodes=16
    B, T, N = 2, 16, 16
    ks, kt = 3, 3
    channels = (4, 8, 8)
    c_si, c_t, c_oo = channels
    keep_prob = 1.0

    key = jax.random.PRNGKey(0)
    kx, k1, k2, k3, k4, k5, k6, k7, k8 = jax.random.split(key, 9)

    x = jax.random.normal(kx, (B, c_si, T, N), jnp.float32)
    params = {
        "w_t1": 0.1 * jax.random.normal(k1, (2 * c_t, c_t, kt, 1), jnp.float32),
        "b_t1": 0.1 * jax.random.normal(k2, (2 * c_t,), jnp.float32),
        "w_s": 0.1 * jax.random.normal(k3, (ks, c_t, c_t), jnp.float32),
        "b_s": 0.1 * jax.random.normal(k4, (ks, 1, c_t), jnp.float32),
        "w_t2": 0.1 * jax.random.normal(k5, (c_oo, c_t, kt, 1), jnp.float32),
        "b_t2": 0.1 * jax.random.normal(k6, (c_oo,), jnp.float32),
        "gamma": 1.0 + 0.1 * jax.random.normal(k7, (c_oo,), jnp.float32),
        "beta": 0.1 * jax.random.normal(k8, (c_oo,), jnp.float32),
    }

    fwd = jax.jit(functools.partial(
        st_conv_block_forward, ks=ks, kt=kt, channels=channels,
        keep_prob=keep_prob))
    out = jax.block_until_ready(fwd(x, params))

    # matched reference (same bf16 conv-operand rounding): checks structure.
    ref_m = jax.block_until_ready(_reference_forward(
        x, params, ks=ks, kt=kt, channels=channels, conv_dtype=jnp.bfloat16))
    # full-f32 reference: sanity bound on the bf16 operand error.
    ref_f = jax.block_until_ready(_reference_forward(
        x, params, ks=ks, kt=kt, channels=channels, conv_dtype=jnp.float32))

    assert out.shape == (B, c_oo, T, N), out.shape
    assert bool(jnp.all(jnp.isfinite(out)))
    err_m = float(jnp.max(jnp.abs(out - ref_m)))
    assert bool(jnp.allclose(out, ref_m, rtol=5e-3, atol=5e-3)), err_m
    err_f = float(jnp.max(jnp.abs(out - ref_f)))
    assert bool(jnp.allclose(out, ref_f, rtol=5e-2, atol=5e-2)), err_f
    print("KERNEL_OK")
</pallas_src>

<mosaic_0001>
module attributes {stable_mosaic.version = 11 : i64} {
  func.func @kernel(%arg0: i32, %arg1: memref<2x8x288xf32, #tpu.memory_space<vmem>>, %arg2: memref<16x24xbf16, #tpu.memory_space<vmem>>, %arg3: memref<16x1xf32, #tpu.memory_space<vmem>>, %arg4: memref<8x24xbf16, #tpu.memory_space<vmem>>, %arg5: memref<8x1xf32, #tpu.memory_space<vmem>>, %arg6: memref<3x1x512xf32, #tpu.memory_space<vmem>>, %arg7: memref<45x1x512xf32, #tpu.memory_space<vmem>>, %arg8: memref<3x1x512xf32, #tpu.memory_space<vmem>>, %arg9: memref<8x1xf32, #tpu.memory_space<vmem>>, %arg10: memref<8x1xf32, #tpu.memory_space<vmem>>, %arg11: memref<2x8x256xf32, #tpu.memory_space<vmem>>, %arg12: memref<8x768xf32, #tpu.memory_space<vmem>>) attributes {dimension_semantics = [#tpu.dimension_semantics<arbitrary>], iteration_bounds = array<i64: 1>, scalar_prefetch = 0 : i64, scratch_operands = 1 : i64, tpu.core_type = #tpu.core_type<tc>, window_params = [{pipeline_mode = #tpu.pipeline_mode<synchronous>, transform_indices = @transform_0, window_bounds = array<i64: 2, 8, 288>}, {pipeline_mode = #tpu.pipeline_mode<synchronous>, transform_indices = @transform_1, window_bounds = array<i64: 16, 24>}, {pipeline_mode = #tpu.pipeline_mode<synchronous>, transform_indices = @transform_2, window_bounds = array<i64: 16, 1>}, {pipeline_mode = #tpu.pipeline_mode<synchronous>, transform_indices = @transform_3, window_bounds = array<i64: 8, 24>}, {pipeline_mode = #tpu.pipeline_mode<synchronous>, transform_indices = @transform_4, window_bounds = array<i64: 8, 1>}, {pipeline_mode = #tpu.pipeline_mode<synchronous>, transform_indices = @transform_5, window_bounds = array<i64: 3, 1, 512>}, {pipeline_mode = #tpu.pipeline_mode<synchronous>, transform_indices = @transform_6, window_bounds = array<i64: 45, 1, 512>}, {pipeline_mode = #tpu.pipeline_mode<synchronous>, transform_indices = @transform_7, window_bounds = array<i64: 3, 1, 512>}, {pipeline_mode = #tpu.pipeline_mode<synchronous>, transform_indices = @transform_8, window_bounds = array<i64: 8, 1>}, {pipeline_mode = #tpu.pipeline_mode<synchronous>, transform_indices = @transform_9, window_bounds = array<i64: 8, 1>}, {pipeline_mode = #tpu.pipeline_mode<synchronous>, transform_indices = @transform_10, window_bounds = array<i64: 2, 8, 256>}]} {
    %c0 = arith.constant 0 : index
    %c0_0 = arith.constant 0 : index
    %c0_1 = arith.constant 0 : index
    %0 = vector.load %arg1[%c0, %c0_0, %c0_1] : memref<2x8x288xf32, #tpu.memory_space<vmem>>, vector<1x8x256xf32>
    %1 = vector.shape_cast %0 : vector<1x8x256xf32> to vector<8x256xf32>
    %c1 = arith.constant 1 : index
    %c0_2 = arith.constant 0 : index
    %c0_3 = arith.constant 0 : index
    %2 = vector.load %arg1[%c1, %c0_2, %c0_3] : memref<2x8x288xf32, #tpu.memory_space<vmem>>, vector<1x8x256xf32>
    %3 = vector.shape_cast %2 : vector<1x8x256xf32> to vector<8x256xf32>
    %4 = tpu.concatenate %1, %3 in 1 : vector<8x256xf32>, vector<8x256xf32> -> vector<8x512xf32>
    %c0_4 = arith.constant 0 : index
    %c0_5 = arith.constant 0 : index
    %c16 = arith.constant 16 : index
    %5 = vector.load %arg1[%c0_4, %c0_5, %c16] : memref<2x8x288xf32, #tpu.memory_space<vmem>>, vector<1x8x256xf32>
    %6 = vector.shape_cast %5 : vector<1x8x256xf32> to vector<8x256xf32>
    %c1_6 = arith.constant 1 : index
    %c0_7 = arith.constant 0 : index
    %c16_8 = arith.constant 16 : index
    %7 = vector.load %arg1[%c1_6, %c0_7, %c16_8] : memref<2x8x288xf32, #tpu.memory_space<vmem>>, vector<1x8x256xf32>
    %8 = vector.shape_cast %7 : vector<1x8x256xf32> to vector<8x256xf32>
    %9 = tpu.concatenate %6, %8 in 1 : vector<8x256xf32>, vector<8x256xf32> -> vector<8x512xf32>
    %c0_9 = arith.constant 0 : index
    %c0_10 = arith.constant 0 : index
    %c32 = arith.constant 32 : index
    %10 = vector.load %arg1[%c0_9, %c0_10, %c32] : memref<2x8x288xf32, #tpu.memory_space<vmem>>, vector<1x8x256xf32>
    %11 = vector.shape_cast %10 : vector<1x8x256xf32> to vector<8x256xf32>
    %c1_11 = arith.constant 1 : index
    %c0_12 = arith.constant 0 : index
    %c32_13 = arith.constant 32 : index
    %12 = vector.load %arg1[%c1_11, %c0_12, %c32_13] : memref<2x8x288xf32, #tpu.memory_space<vmem>>, vector<1x8x256xf32>
    %13 = vector.shape_cast %12 : vector<1x8x256xf32> to vector<8x256xf32>
    %14 = tpu.concatenate %11, %13 in 1 : vector<8x256xf32>, vector<8x256xf32> -> vector<8x512xf32>
    %15 = tpu.concatenate %4, %9, %14 in 0 : vector<8x512xf32>, vector<8x512xf32>, vector<8x512xf32> -> vector<24x512xf32>
    %c0_14 = arith.constant 0 : index
    %c0_15 = arith.constant 0 : index
    %16 = vector.load %arg2[%c0_14, %c0_15] : memref<16x24xbf16, #tpu.memory_space<vmem>>, vector<16x24xbf16>
    %17 = arith.truncf %15 : vector<24x512xf32> to vector<24x512xbf16>
    %cst = arith.constant dense<0.000000e+00> : vector<16x512xf32>
    %18 = tpu.matmul %16, %17, %cst {dimension_numbers = #tpu.dot_dimension_numbers<[1], [0], [0], [1], [0, 0, 1, 1], [], []>} : vector<16x24xbf16>, vector<24x512xbf16>, vector<16x512xf32> -> vector<16x512xf32>
    %c0_16 = arith.constant 0 : index
    %c0_17 = arith.constant 0 : index
    %19 = vector.load %arg3[%c0_16, %c0_17] : memref<16x1xf32, #tpu.memory_space<vmem>>, vector<16x1xf32>
    %20 = vector.broadcast %19 : vector<16x1xf32> to vector<16x512xf32>
    %21 = arith.addf %18, %20 : vector<16x512xf32>
    %22 = vector.extract_strided_slice %21 {offsets = [0, 0], sizes = [8, 512], strides = [1, 1]} : vector<16x512xf32> to vector<8x512xf32>
    %23 = arith.addf %22, %9 : vector<8x512xf32>
    %24 = vector.extract_strided_slice %21 {offsets = [8, 0], sizes = [8, 512], strides = [1, 1]} : vector<16x512xf32> to vector<8x512xf32>
    %25 = arith.negf %24 : vector<8x512xf32>
    %26 = math.exp %25 : vector<8x512xf32>
    %cst_18 = arith.constant 1.000000e+00 : f32
    %27 = vector.broadcast %cst_18 : f32 to vector<8x512xf32>
    %28 = arith.addf %27, %26 : vector<8x512xf32>
    %29 = arith.divf %27, %28 : vector<8x512xf32>
    %30 = arith.mulf %23, %29 : vector<8x512xf32>
    %cst_19 = arith.constant 0.000000e+00 : f32
    %31 = vector.broadcast %cst_19 : f32 to vector<8x768xf32>
    %c0_20 = arith.constant 0 : index
    %c0_21 = arith.constant 0 : index
    %32 = vector.load %arg12[%c0_20, %c0_21] : memref<8x768xf32, #tpu.memory_space<vmem>>, vector<8x768xf32>
    tpu.vector_store %arg12[%c0_20, %c0_21], %31 {strides = array<i32>} : memref<8x768xf32, #tpu.memory_space<vmem>>, vector<8x768xf32>,
    %c0_22 = arith.constant 0 : index
    %c128 = arith.constant 128 : index
    %33 = vector.load %arg12[%c0_22, %c128] : memref<8x768xf32, #tpu.memory_space<vmem>>, vector<8x512xf32>
    tpu.vector_store %arg12[%c0_22, %c128], %30 {strides = array<i32>} : memref<8x768xf32, #tpu.memory_space<vmem>>, vector<8x512xf32>,
    %c7 = arith.constant 7 : index
    %c0_23 = arith.constant 0 : index
    %c0_24 = arith.constant 0 : index
    %34 = vector.load %arg7[%c7, %c0_23, %c0_24] : memref<45x1x512xf32, #tpu.memory_space<vmem>>, vector<1x1x512xf32>
    %35 = vector.shape_cast %34 : vector<1x1x512xf32> to vector<1x512xf32>
    %36 = vector.broadcast %35 : vector<1x512xf32> to vector<8x512xf32>
    %37 = arith.mulf %30, %36 : vector<8x512xf32>
    %c0_25 = arith.constant 0 : index
    %c0_26 = arith.constant 0 : index
    %c0_27 = arith.constant 0 : index
    %38 = vector.load %arg8[%c0_25, %c0_26, %c0_27] : memref<3x1x512xf32, #tpu.memory_space<vmem>>, vector<1x1x512xf32>
    %39 = vector.shape_cast %38 : vector<1x1x512xf32> to vector<1x512xf32>
    %40 = vector.broadcast %39 : vector<1x512xf32> to vector<8x512xf32>
    %41 = arith.addf %37, %40 : vector<8x512xf32>
    %c0_28 = arith.constant 0 : index
    %c121 = arith.constant 121 : index
    %42 = vector.load %arg12[%c0_28, %c121] : memref<8x768xf32, #tpu.memory_space<vmem>>, vector<8x512xf32>
    %c0_29 = arith.constant 0 : index
    %c0_30 = arith.constant 0 : index
    %c0_31 = arith.constant 0 : index
    %43 = vector.load %arg7[%c0_29, %c0_30, %c0_31] : memref<45x1x512xf32, #tpu.memory_space<vmem>>, vector<1x1x512xf32>
    %44 = vector.shape_cast %43 : vector<1x1x512xf32> to vector<1x512xf32>
    %45 = vector.broadcast %44 : vector<1x512xf32> to vector<8x512xf32>
    %46 = arith.mulf %42, %45 : vector<8x512xf32>
    %47 = arith.addf %41, %46 : vector<8x512xf32>
    %c0_32 = arith.constant 0 : index
    %c122 = arith.constant 122 : index
    %48 = vector.load %arg12[%c0_32, %c122] : memref<8x768xf32, #tpu.memory_space<vmem>>, vector<8x512xf32>
    %c1_33 = arith.constant 1 : index
    %c0_34 = arith.constant 0 : index
    %c0_35 = arith.constant 0 : index
    %49 = vector.load %arg7[%c1_33, %c0_34, %c0_35] : memref<45x1x512xf32, #tpu.memory_space<vmem>>, vector<1x1x512xf32>
    %50 = vector.shape_cast %49 : vector<1x1x512xf32> to vector<1x512xf32>
    %51 = vector.broadcast %50 : vector<1x512xf32> to vector<8x512xf32>
    %52 = arith.mulf %48, %51 : vector<8x512xf32>
    %53 = arith.addf %47, %52 : vector<8x512xf32>
    %c0_36 = arith.constant 0 : index
    %c123 = arith.constant 123 : index
    %54 = vector.load %arg12[%c0_36, %c123] : memref<8x768xf32, #tpu.memory_space<vmem>>, vector<8x512xf32>
    %c2 = arith.constant 2 : index
    %c0_37 = arith.constant 0 : index
    %c0_38 = arith.constant 0 : index
    %55 = vector.load %arg7[%c2, %c0_37, %c0_38] : memref<45x1x512xf32, #tpu.memory_space<vmem>>, vector<1x1x512xf32>
    %56 = vector.shape_cast %55 : vector<1x1x512xf32> to vector<1x512xf32>
    %57 = vector.broadcast %56 : vector<1x512xf32> to vector<8x512xf32>
    %58 = arith.mulf %54, %57 : vector<8x512xf32>
    %59 = arith.addf %53, %58 : vector<8x512xf32>
    %c0_39 = arith.constant 0 : index
    %c124 = arith.constant 124 : index
    %60 = vector.load %arg12[%c0_39, %c124] : memref<8x768xf32, #tpu.memory_space<vmem>>, vector<8x512xf32>
    %c3 = arith.constant 3 : index
    %c0_40 = arith.constant 0 : index
    %c0_41 = arith.constant 0 : index
    %61 = vector.load %arg7[%c3, %c0_40, %c0_41] : memref<45x1x512xf32, #tpu.memory_space<vmem>>, vector<1x1x512xf32>
    %62 = vector.shape_cast %61 : vector<1x1x512xf32> to vector<1x512xf32>
    %63 = vector.broadcast %62 : vector<1x512xf32> to vector<8x512xf32>
    %64 = arith.mulf %60, %63 : vector<8x512xf32>
    %65 = arith.addf %59, %64 : vector<8x512xf32>
    %c0_42 = arith.constant 0 : index
    %c125 = arith.constant 125 : index
    %66 = vector.load %arg12[%c0_42, %c125] : memref<8x768xf32, #tpu.memory_space<vmem>>, vector<8x512xf32>
    %c4 = arith.constant 4 : index
    %c0_43 = arith.constant 0 : index
    %c0_44 = arith.constant 0 : index
    %67 = vector.load %arg7[%c4, %c0_43, %c0_44] : memref<45x1x512xf32, #tpu.memory_space<vmem>>, vector<1x1x512xf32>
    %68 = vector.shape_cast %67 : vector<1x1x512xf32> to vector<1x512xf32>
    %69 = vector.broadcast %68 : vector<1x512xf32> to vector<8x512xf32>
    %70 = arith.mulf %66, %69 : vector<8x512xf32>
    %71 = arith.addf %65, %70 : vector<8x512xf32>
    %c0_45 = arith.constant 0 : index
    %c126 = arith.constant 126 : index
    %72 = vector.load %arg12[%c0_45, %c126] : memref<8x768xf32, #tpu.memory_space<vmem>>, vector<8x512xf32>
    %c5 = arith.constant 5 : index
    %c0_46 = arith.constant 0 : index
    %c0_47 = arith.constant 0 : index
    %73 = vector.load %arg7[%c5, %c0_46, %c0_47] : memref<45x1x512xf32, #tpu.memory_space<vmem>>, vector<1x1x512xf32>
    %74 = vector.shape_cast %73 : vector<1x1x512xf32> to vector<1x512xf32>
    %75 = vector.broadcast %74 : vector<1x512xf32> to vector<8x512xf32>
    %76 = arith.mulf %72, %75 : vector<8x512xf32>
    %77 = arith.addf %71, %76 : vector<8x512xf32>
    %c0_48 = arith.constant 0 : index
    %c127 = arith.constant 127 : index
    %78 = vector.load %arg12[%c0_48, %c127] : memref<8x768xf32, #tpu.memory_space<vmem>>, vector<8x512xf32>
    %c6 = arith.constant 6 : index
    %c0_49 = arith.constant 0 : index
    %c0_50 = arith.constant 0 : index
    %79 = vector.load %arg7[%c6, %c0_49, %c0_50] : memref<45x1x512xf32, #tpu.memory_space<vmem>>, vector<1x1x512xf32>
    %80 = vector.shape_cast %79 : vector<1x1x512xf32> to vector<1x512xf32>
    %81 = vector.broadcast %80 : vector<1x512xf32> to vector<8x512xf32>
    %82 = arith.mulf %78, %81 : vector<8x512xf32>
    %83 = arith.addf %77, %82 : vector<8x512xf32>
    %c0_51 = arith.constant 0 : index
    %c129 = arith.constant 129 : index
    %84 = vector.load %arg12[%c0_51, %c129] : memref<8x768xf32, #tpu.memory_space<vmem>>, vector<8x512xf32>
    %c8 = arith.constant 8 : index
    %c0_52 = arith.constant 0 : index
    %c0_53 = arith.constant 0 : index
    %85 = vector.load %arg7[%c8, %c0_52, %c0_53] : memref<45x1x512xf32, #tpu.memory_space<vmem>>, vector<1x1x512xf32>
    %86 = vector.shape_cast %85 : vector<1x1x512xf32> to vector<1x512xf32>
    %87 = vector.broadcast %86 : vector<1x512xf32> to vector<8x512xf32>
    %88 = arith.mulf %84, %87 : vector<8x512xf32>
    %89 = arith.addf %83, %88 : vector<8x512xf32>
    %c0_54 = arith.constant 0 : index
    %c130 = arith.constant 130 : index
    %90 = vector.load %arg12[%c0_54, %c130] : memref<8x768xf32, #tpu.memory_space<vmem>>, vector<8x512xf32>
    %c9 = arith.constant 9 : index
    %c0_55 = arith.constant 0 : index
    %c0_56 = arith.constant 0 : index
    %91 = vector.load %arg7[%c9, %c0_55, %c0_56] : memref<45x1x512xf32, #tpu.memory_space<vmem>>, vector<1x1x512xf32>
    %92 = vector.shape_cast %91 : vector<1x1x512xf32> to vector<1x512xf32>
    %93 = vector.broadcast %92 : vector<1x512xf32> to vector<8x512xf32>
    %94 = arith.mulf %90, %93 : vector<8x512xf32>
    %95 = arith.addf %89, %94 : vector<8x512xf32>
    %c0_57 = arith.constant 0 : index
    %c131 = arith.constant 131 : index
    %96 = vector.load %arg12[%c0_57, %c131] : memref<8x768xf32, #tpu.memory_space<vmem>>, vector<8x512xf32>
    %c10 = arith.constant 10 : index
    %c0_58 = arith.constant 0 : index
    %c0_59 = arith.constant 0 : index
    %97 = vector.load %arg7[%c10, %c0_58, %c0_59] : memref<45x1x512xf32, #tpu.memory_space<vmem>>, vector<1x1x512xf32>
    %98 = vector.shape_cast %97 : vector<1x1x512xf32> to vector<1x512xf32>
    %99 = vector.broadcast %98 : vector<1x512xf32> to vector<8x512xf32>
    %100 = arith.mulf %96, %99 : vector<8x512xf32>
    %101 = arith.addf %95, %100 : vector<8x512xf32>
    %c0_60 = arith.constant 0 : index
    %c132 = arith.constant 132 : index
    %102 = vector.load %arg12[%c0_60, %c132] : memref<8x768xf32, #tpu.memory_space<vmem>>, vector<8x512xf32>
    %c11 = arith.constant 11 : index
    %c0_61 = arith.constant 0 : index
    %c0_62 = arith.constant 0 : index
    %103 = vector.load %arg7[%c11, %c0_61, %c0_62] : memref<45x1x512xf32, #tpu.memory_space<vmem>>, vector<1x1x512xf32>
    %104 = vector.shape_cast %103 : vector<1x1x512xf32> to vector<1x512xf32>
    %105 = vector.broadcast %104 : vector<1x512xf32> to vector<8x512xf32>
    %106 = arith.mulf %102, %105 : vector<8x512xf32>
    %107 = arith.addf %101, %106 : vector<8x512xf32>
    %c0_63 = arith.constant 0 : index
    %c133 = arith.constant 133 : index
    %108 = vector.load %arg12[%c0_63, %c133] : memref<8x768xf32, #tpu.memory_space<vmem>>, vector<8x512xf32>
    %c12 = arith.constant 12 : index
    %c0_64 = arith.constant 0 : index
    %c0_65 = arith.constant 0 : index
    %109 = vector.load %arg7[%c12, %c0_64, %c0_65] : memref<45x1x512xf32, #tpu.memory_space<vmem>>, vector<1x1x512xf32>
    %110 = vector.shape_cast %109 : vector<1x1x512xf32> to vector<1x512xf32>
    %111 = vector.broadcast %110 : vector<1x512xf32> to vector<8x512xf32>
    %112 = arith.mulf %108, %111 : vector<8x512xf32>
    %113 = arith.addf %107, %112 : vector<8x512xf32>
    %c0_66 = arith.constant 0 : index
    %c134 = arith.constant 134 : index
    %114 = vector.load %arg12[%c0_66, %c134] : memref<8x768xf32, #tpu.memory_space<vmem>>, vector<8x512xf32>
    %c13 = arith.constant 13 : index
    %c0_67 = arith.constant 0 : index
    %c0_68 = arith.constant 0 : index
    %115 = vector.load %arg7[%c13, %c0_67, %c0_68] : memref<45x1x512xf32, #tpu.memory_space<vmem>>, vector<1x1x512xf32>
    %116 = vector.shape_cast %115 : vector<1x1x512xf32> to vector<1x512xf32>
    %117 = vector.broadcast %116 : vector<1x512xf32> to vector<8x512xf32>
    %118 = arith.mulf %114, %117 : vector<8x512xf32>
    %119 = arith.addf %113, %118 : vector<8x512xf32>
    %c0_69 = arith.constant 0 : index
    %c135 = arith.constant 135 : index
    %120 = vector.load %arg12[%c0_69, %c135] : memref<8x768xf32, #tpu.memory_space<vmem>>, vector<8x512xf32>
    %c14 = arith.constant 14 : index
    %c0_70 = arith.constant 0 : index
    %c0_71 = arith.constant 0 : index
    %121 = vector.load %arg7[%c14, %c0_70, %c0_71] : memref<45x1x512xf32, #tpu.memory_space<vmem>>, vector<1x1x512xf32>
    %122 = vector.shape_cast %121 : vector<1x1x512xf32> to vector<1x512xf32>
    %123 = vector.broadcast %122 : vector<1x512xf32> to vector<8x512xf32>
    %124 = arith.mulf %120, %123 : vector<8x512xf32>
    %125 = arith.addf %119, %124 : vector<8x512xf32>
    %cst_72 = arith.constant 0.000000e+00 : f32
    %126 = vector.broadcast %cst_72 : f32 to vector<8x512xf32>
    %127 = arith.maximumf %125, %126 : vector<8x512xf32>
    %c0_73 = arith.constant 0 : index
    %c128_74 = arith.constant 128 : index
    %128 = vector.load %arg12[%c0_73, %c128_74] : memref<8x768xf32, #tpu.memory_space<vmem>>, vector<8x512xf32>
    tpu.vector_store %arg12[%c0_73, %c128_74], %127 {strides = array<i32>} : memref<8x768xf32, #tpu.memory_space<vmem>>, vector<8x512xf32>,
    %c22 = arith.constant 22 : index
    %c0_75 = arith.constant 0 : index
    %c0_76 = arith.constant 0 : index
    %129 = vector.load %arg7[%c22, %c0_75, %c0_76] : memref<45x1x512xf32, #tpu.memory_space<vmem>>, vector<1x1x512xf32>
    %130 = vector.shape_cast %129 : vector<1x1x512xf32> to vector<1x512xf32>
    %131 = vector.broadcast %130 : vector<1x512xf32> to vector<8x512xf32>
    %132 = arith.mulf %127, %131 : vector<8x512xf32>
    %c1_77 = arith.constant 1 : index
    %c0_78 = arith.constant 0 : index
    %c0_79 = arith.constant 0 : index
    %133 = vector.load %arg8[%c1_77, %c0_78, %c0_79] : memref<3x1x512xf32, #tpu.memory_space<vmem>>, vector<1x1x512xf32>
    %134 = vector.shape_cast %133 : vector<1x1x512xf32> to vector<1x512xf32>
    %135 = vector.broadcast %134 : vector<1x512xf32> to vector<8x512xf32>
    %136 = arith.addf %132, %135 : vector<8x512xf32>
    %c0_80 = arith.constant 0 : index
    %c121_81 = arith.constant 121 : index
    %137 = vector.load %arg12[%c0_80, %c121_81] : memref<8x768xf32, #tpu.memory_space<vmem>>, vector<8x512xf32>
    %c15 = arith.constant 15 : index
    %c0_82 = arith.constant 0 : index
    %c0_83 = arith.constant 0 : index
    %138 = vector.load %arg7[%c15, %c0_82, %c0_83] : memref<45x1x512xf32, #tpu.memory_space<vmem>>, vector<1x1x512xf32>
    %139 = vector.shape_cast %138 : vector<1x1x512xf32> to vector<1x512xf32>
    %140 = vector.broadcast %139 : vector<1x512xf32> to vector<8x512xf32>
    %141 = arith.mulf %137, %140 : vector<8x512xf32>
    %142 = arith.addf %136, %141 : vector<8x512xf32>
    %c0_84 = arith.constant 0 : index
    %c122_85 = arith.constant 122 : index
    %143 = vector.load %arg12[%c0_84, %c122_85] : memref<8x768xf32, #tpu.memory_space<vmem>>, vector<8x512xf32>
    %c16_86 = arith.constant 16 : index
    %c0_87 = arith.constant 0 : index
    %c0_88 = arith.constant 0 : index
    %144 = vector.load %arg7[%c16_86, %c0_87, %c0_88] : memref<45x1x512xf32, #tpu.memory_space<vmem>>, vector<1x1x512xf32>
    %145 = vector.shape_cast %144 : vector<1x1x512xf32> to vector<1x512xf32>
    %146 = vector.broadcast %145 : vector<1x512xf32> to vector<8x512xf32>
    %147 = arith.mulf %143, %146 : vector<8x512xf32>
    %148 = arith.addf %142, %147 : vector<8x512xf32>
    %c0_89 = arith.constant 0 : index
    %c123_90 = arith.constant 123 : index
    %149 = vector.load %arg12[%c0_89, %c123_90] : memref<8x768xf32, #tpu.memory_space<vmem>>, vector<8x512xf32>
    %c17 = arith.constant 17 : index
    %c0_91 = arith.constant 0 : index
    %c0_92 = arith.constant 0 : index
    %150 = vector.load %arg7[%c17, %c0_91, %c0_92] : memref<45x1x512xf32, #tpu.memory_space<vmem>>, vector<1x1x512xf32>
    %151 = vector.shape_cast %150 : vector<1x1x512xf32> to vector<1x512xf32>
    %152 = vector.broadcast %151 : vector<1x512xf32> to vector<8x512xf32>
    %153 = arith.mulf %149, %152 : vector<8x512xf32>
    %154 = arith.addf %148, %153 : vector<8x512xf32>
    %c0_93 = arith.constant 0 : index
    %c124_94 = arith.constant 124 : index
    %155 = vector.load %arg12[%c0_93, %c124_94] : memref<8x768xf32, #tpu.memory_space<vmem>>, vector<8x512xf32>
    %c18 = arith.constant 18 : index
    %c0_95 = arith.constant 0 : index
    %c0_96 = arith.constant 0 : index
    %156 = vector.load %arg7[%c18, %c0_95, %c0_96] : memref<45x1x512xf32, #tpu.memory_space<vmem>>, vector<1x1x512xf32>
    %157 = vector.shape_cast %156 : vector<1x1x512xf32> to vector<1x512xf32>
    %158 = vector.broadcast %157 : vector<1x512xf32> to vector<8x512xf32>
    %159 = arith.mulf %155, %158 : vector<8x512xf32>
    %160 = arith.addf %154, %159 : vector<8x512xf32>
    %c0_97 = arith.constant 0 : index
    %c125_98 = arith.constant 125 : index
    %161 = vector.load %arg12[%c0_97, %c125_98] : memref<8x768xf32, #tpu.memory_space<vmem>>, vector<8x512xf32>
    %c19 = arith.constant 19 : index
    %c0_99 = arith.constant 0 : index
    %c0_100 = arith.constant 0 : index
    %162 = vector.load %arg7[%c19, %c0_99, %c0_100] : memref<45x1x512xf32, #tpu.memory_space<vmem>>, vector<1x1x512xf32>
    %163 = vector.shape_cast %162 : vector<1x1x512xf32> to vector<1x512xf32>
    %164 = vector.broadcast %163 : vector<1x512xf32> to vector<8x512xf32>
    %165 = arith.mulf %161, %164 : vector<8x512xf32>
    %166 = arith.addf %160, %165 : vector<8x512xf32>
    %c0_101 = arith.constant 0 : index
    %c126_102 = arith.constant 126 : index
    %167 = vector.load %arg12[%c0_101, %c126_102] : memref<8x768xf32, #tpu.memory_space<vmem>>, vector<8x512xf32>
    %c20 = arith.constant 20 : index
    %c0_103 = arith.constant 0 : index
    %c0_104 = arith.constant 0 : index
    %168 = vector.load %arg7[%c20, %c0_103, %c0_104] : memref<45x1x512xf32, #tpu.memory_space<vmem>>, vector<1x1x512xf32>
    %169 = vector.shape_cast %168 : vector<1x1x512xf32> to vector<1x512xf32>
    %170 = vector.broadcast %169 : vector<1x512xf32> to vector<8x512xf32>
    %171 = arith.mulf %167, %170 : vector<8x512xf32>
    %172 = arith.addf %166, %171 : vector<8x512xf32>
    %c0_105 = arith.constant 0 : index
    %c127_106 = arith.constant 127 : index
    %173 = vector.load %arg12[%c0_105, %c127_106] : memref<8x768xf32, #tpu.memory_space<vmem>>, vector<8x512xf32>
    %c21 = arith.constant 21 : index
    %c0_107 = arith.constant 0 : index
    %c0_108 = arith.constant 0 : index
    %174 = vector.load %arg7[%c21, %c0_107, %c0_108] : memref<45x1x512xf32, #tpu.memory_space<vmem>>, vector<1x1x512xf32>
    %175 = vector.shape_cast %174 : vector<1x1x512xf32> to vector<1x512xf32>
    %176 = vector.broadcast %175 : vector<1x512xf32> to vector<8x512xf32>
    %177 = arith.mulf %173, %176 : vector<8x512xf32>
    %178 = arith.addf %172, %177 : vector<8x512xf32>
    %c0_109 = arith.constant 0 : index
    %c129_110 = arith.constant 129 : index
    %179 = vector.load %arg12[%c0_109, %c129_110] : memref<8x768xf32, #tpu.memory_space<vmem>>, vector<8x512xf32>
    %c23 = arith.constant 23 : index
    %c0_111 = arith.constant 0 : index
    %c0_112 = arith.constant 0 : index
    %180 = vector.load %arg7[%c23, %c0_111, %c0_112] : memref<45x1x512xf32, #tpu.memory_space<vmem>>, vector<1x1x512xf32>
    %181 = vector.shape_cast %180 : vector<1x1x512xf32> to vector<1x512xf32>
    %182 = vector.broadcast %181 : vector<1x512xf32> to vector<8x512xf32>
    %183 = arith.mulf %179, %182 : vector<8x512xf32>
    %184 = arith.addf %178, %183 : vector<8x512xf32>
    %c0_113 = arith.constant 0 : index
    %c130_114 = arith.constant 130 : index
    %185 = vector.load %arg12[%c0_113, %c130_114] : memref<8x768xf32, #tpu.memory_space<vmem>>, vector<8x512xf32>
    %c24 = arith.constant 24 : index
    %c0_115 = arith.constant 0 : index
    %c0_116 = arith.constant 0 : index
    %186 = vector.load %arg7[%c24, %c0_115, %c0_116] : memref<45x1x512xf32, #tpu.memory_space<vmem>>, vector<1x1x512xf32>
    %187 = vector.shape_cast %186 : vector<1x1x512xf32> to vector<1x512xf32>
    %188 = vector.broadcast %187 : vector<1x512xf32> to vector<8x512xf32>
    %189 = arith.mulf %185, %188 : vector<8x512xf32>
    %190 = arith.addf %184, %189 : vector<8x512xf32>
    %c0_117 = arith.constant 0 : index
    %c131_118 = arith.constant 131 : index
    %191 = vector.load %arg12[%c0_117, %c131_118] : memref<8x768xf32, #tpu.memory_space<vmem>>, vector<8x512xf32>
    %c25 = arith.constant 25 : index
    %c0_119 = arith.constant 0 : index
    %c0_120 = arith.constant 0 : index
    %192 = vector.load %arg7[%c25, %c0_119, %c0_120] : memref<45x1x512xf32, #tpu.memory_space<vmem>>, vector<1x1x512xf32>
    %193 = vector.shape_cast %192 : vector<1x1x512xf32> to vector<1x512xf32>
    %194 = vector.broadcast %193 : vector<1x512xf32> to vector<8x512xf32>
    %195 = arith.mulf %191, %194 : vector<8x512xf32>
    %196 = arith.addf %190, %195 : vector<8x512xf32>
    %c0_121 = arith.constant 0 : index
    %c132_122 = arith.constant 132 : index
    %197 = vector.load %arg12[%c0_121, %c132_122] : memref<8x768xf32, #tpu.memory_space<vmem>>, vector<8x512xf32>
    %c26 = arith.constant 26 : index
    %c0_123 = arith.constant 0 : index
    %c0_124 = arith.constant 0 : index
    %198 = vector.load %arg7[%c26, %c0_123, %c0_124] : memref<45x1x512xf32, #tpu.memory_space<vmem>>, vector<1x1x512xf32>
    %199 = vector.shape_cast %198 : vector<1x1x512xf32> to vector<1x512xf32>
    %200 = vector.broadcast %199 : vector<1x512xf32> to vector<8x512xf32>
    %201 = arith.mulf %197, %200 : vector<8x512xf32>
    %202 = arith.addf %196, %201 : vector<8x512xf32>
    %c0_125 = arith.constant 0 : index
    %c133_126 = arith.constant 133 : index
    %203 = vector.load %arg12[%c0_125, %c133_126] : memref<8x768xf32, #tpu.memory_space<vmem>>, vector<8x512xf32>
    %c27 = arith.constant 27 : index
    %c0_127 = arith.constant 0 : index
    %c0_128 = arith.constant 0 : index
    %204 = vector.load %arg7[%c27, %c0_127, %c0_128] : memref<45x1x512xf32, #tpu.memory_space<vmem>>, vector<1x1x512xf32>
    %205 = vector.shape_cast %204 : vector<1x1x512xf32> to vector<1x512xf32>
    %206 = vector.broadcast %205 : vector<1x512xf32> to vector<8x512xf32>
    %207 = arith.mulf %203, %206 : vector<8x512xf32>
    %208 = arith.addf %202, %207 : vector<8x512xf32>
    %c0_129 = arith.constant 0 : index
    %c134_130 = arith.constant 134 : index
    %209 = vector.load %arg12[%c0_129, %c134_130] : memref<8x768xf32, #tpu.memory_space<vmem>>, vector<8x512xf32>
    %c28 = arith.constant 28 : index
    %c0_131 = arith.constant 0 : index
    %c0_132 = arith.constant 0 : index
    %210 = vector.load %arg7[%c28, %c0_131, %c0_132] : memref<45x1x512xf32, #tpu.memory_space<vmem>>, vector<1x1x512xf32>
    %211 = vector.shape_cast %210 : vector<1x1x512xf32> to vector<1x512xf32>
    %212 = vector.broadcast %211 : vector<1x512xf32> to vector<8x512xf32>
    %213 = arith.mulf %209, %212 : vector<8x512xf32>
    %214 = arith.addf %208, %213 : vector<8x512xf32>
    %c0_133 = arith.constant 0 : index
    %c135_134 = arith.constant 135 : index
    %215 = vector.load %arg12[%c0_133, %c135_134] : memref<8x768xf32, #tpu.memory_space<vmem>>, vector<8x512xf32>
    %c29 = arith.constant 29 : index
    %c0_135 = arith.constant 0 : index
    %c0_136 = arith.constant 0 : index
    %216 = vector.load %arg7[%c29, %c0_135, %c0_136] : memref<45x1x512xf32, #tpu.memory_space<vmem>>, vector<1x1x512xf32>
    %217 = vector.shape_cast %216 : vector<1x1x512xf32> to vector<1x512xf32>
    %218 = vector.broadcast %217 : vector<1x512xf32> to vector<8x512xf32>
    %219 = arith.mulf %215, %218 : vector<8x512xf32>
    %220 = arith.addf %214, %219 : vector<8x512xf32>
    %cst_137 = arith.constant 0.000000e+00 : f32
    %221 = vector.broadcast %cst_137 : f32 to vector<8x512xf32>
    %222 = arith.maximumf %220, %221 : vector<8x512xf32>
    %c0_138 = arith.constant 0 : index
    %c128_139 = arith.constant 128 : index
    %223 = vector.load %arg12[%c0_138, %c128_139] : memref<8x768xf32, #tpu.memory_space<vmem>>, vector<8x512xf32>
    tpu.vector_store %arg12[%c0_138, %c128_139], %222 {strides = array<i32>} : memref<8x768xf32, #tpu.memory_space<vmem>>, vector<8x512xf32>,
    %c37 = arith.constant 37 : index
    %c0_140 = arith.constant 0 : index
    %c0_141 = arith.constant 0 : index
    %224 = vector.load %arg7[%c37, %c0_140, %c0_141] : memref<45x1x512xf32, #tpu.memory_space<vmem>>, vector<1x1x512xf32>
    %225 = vector.shape_cast %224 : vector<1x1x512xf32> to vector<1x512xf32>
    %226 = vector.broadcast %225 : vector<1x512xf32> to vector<8x512xf32>
    %227 = arith.mulf %222, %226 : vector<8x512xf32>
    %c2_142 = arith.constant 2 : index
    %c0_143 = arith.constant 0 : index
    %c0_144 = arith.constant 0 : index
    %228 = vector.load %arg8[%c2_142, %c0_143, %c0_144] : memref<3x1x512xf32, #tpu.memory_space<vmem>>, vector<1x1x512xf32>
    %229 = vector.shape_cast %228 : vector<1x1x512xf32> to vector<1x512xf32>
    %230 = vector.broadcast %229 : vector<1x512xf32> to vector<8x512xf32>
    %231 = arith.addf %227, %230 : vector<8x512xf32>
    %c0_145 = arith.constant 0 : index
    %c121_146 = arith.constant 121 : index
    %232 = vector.load %arg12[%c0_145, %c121_146] : memref<8x768xf32, #tpu.memory_space<vmem>>, vector<8x512xf32>
    %c30 = arith.constant 30 : index
    %c0_147 = arith.constant 0 : index
    %c0_148 = arith.constant 0 : index
    %233 = vector.load %arg7[%c30, %c0_147, %c0_148] : memref<45x1x512xf32, #tpu.memory_space<vmem>>, vector<1x1x512xf32>
    %234 = vector.shape_cast %233 : vector<1x1x512xf32> to vector<1x512xf32>
    %235 = vector.broadcast %234 : vector<1x512xf32> to vector<8x512xf32>
    %236 = arith.mulf %232, %235 : vector<8x512xf32>
    %237 = arith.addf %231, %236 : vector<8x512xf32>
    %c0_149 = arith.constant 0 : index
    %c122_150 = arith.constant 122 : index
    %238 = vector.load %arg12[%c0_149, %c122_150] : memref<8x768xf32, #tpu.memory_space<vmem>>, vector<8x512xf32>
    %c31 = arith.constant 31 : index
    %c0_151 = arith.constant 0 : index
    %c0_152 = arith.constant 0 : index
    %239 = vector.load %arg7[%c31, %c0_151, %c0_152] : memref<45x1x512xf32, #tpu.memory_space<vmem>>, vector<1x1x512xf32>
    %240 = vector.shape_cast %239 : vector<1x1x512xf32> to vector<1x512xf32>
    %241 = vector.broadcast %240 : vector<1x512xf32> to vector<8x512xf32>
    %242 = arith.mulf %238, %241 : vector<8x512xf32>
    %243 = arith.addf %237, %242 : vector<8x512xf32>
    %c0_153 = arith.constant 0 : index
    %c123_154 = arith.constant 123 : index
    %244 = vector.load %arg12[%c0_153, %c123_154] : memref<8x768xf32, #tpu.memory_space<vmem>>, vector<8x512xf32>
    %c32_155 = arith.constant 32 : index
    %c0_156 = arith.constant 0 : index
    %c0_157 = arith.constant 0 : index
    %245 = vector.load %arg7[%c32_155, %c0_156, %c0_157] : memref<45x1x512xf32, #tpu.memory_space<vmem>>, vector<1x1x512xf32>
    %246 = vector.shape_cast %245 : vector<1x1x512xf32> to vector<1x512xf32>
    %247 = vector.broadcast %246 : vector<1x512xf32> to vector<8x512xf32>
    %248 = arith.mulf %244, %247 : vector<8x512xf32>
    %249 = arith.addf %243, %248 : vector<8x512xf32>
    %c0_158 = arith.constant 0 : index
    %c124_159 = arith.constant 124 : index
    %250 = vector.load %arg12[%c0_158, %c124_159] : memref<8x768xf32, #tpu.memory_space<vmem>>, vector<8x512xf32>
    %c33 = arith.constant 33 : index
    %c0_160 = arith.constant 0 : index
    %c0_161 = arith.constant 0 : index
    %251 = vector.load %arg7[%c33, %c0_160, %c0_161] : memref<45x1x512xf32, #tpu.memory_space<vmem>>, vector<1x1x512xf32>
    %252 = vector.shape_cast %251 : vector<1x1x512xf32> to vector<1x512xf32>
    %253 = vector.broadcast %252 : vector<1x512xf32> to vector<8x512xf32>
    %254 = arith.mulf %250, %253 : vector<8x512xf32>
    %255 = arith.addf %249, %254 : vector<8x512xf32>
    %c0_162 = arith.constant 0 : index
    %c125_163 = arith.constant 125 : index
    %256 = vector.load %arg12[%c0_162, %c125_163] : memref<8x768xf32, #tpu.memory_space<vmem>>, vector<8x512xf32>
    %c34 = arith.constant 34 : index
    %c0_164 = arith.constant 0 : index
    %c0_165 = arith.constant 0 : index
    %257 = vector.load %arg7[%c34, %c0_164, %c0_165] : memref<45x1x512xf32, #tpu.memory_space<vmem>>, vector<1x1x512xf32>
    %258 = vector.shape_cast %257 : vector<1x1x512xf32> to vector<1x512xf32>
    %259 = vector.broadcast %258 : vector<1x512xf32> to vector<8x512xf32>
    %260 = arith.mulf %256, %259 : vector<8x512xf32>
    %261 = arith.addf %255, %260 : vector<8x512xf32>
    %c0_166 = arith.constant 0 : index
    %c126_167 = arith.constant 126 : index
    %262 = vector.load %arg12[%c0_166, %c126_167] : memref<8x768xf32, #tpu.memory_space<vmem>>, vector<8x512xf32>
    %c35 = arith.constant 35 : index
    %c0_168 = arith.constant 0 : index
    %c0_169 = arith.constant 0 : index
    %263 = vector.load %arg7[%c35, %c0_168, %c0_169] : memref<45x1x512xf32, #tpu.memory_space<vmem>>, vector<1x1x512xf32>
    %264 = vector.shape_cast %263 : vector<1x1x512xf32> to vector<1x512xf32>
    %265 = vector.broadcast %264 : vector<1x512xf32> to vector<8x512xf32>
    %266 = arith.mulf %262, %265 : vector<8x512xf32>
    %267 = arith.addf %261, %266 : vector<8x512xf32>
    %c0_170 = arith.constant 0 : index
    %c127_171 = arith.constant 127 : index
    %268 = vector.load %arg12[%c0_170, %c127_171] : memref<8x768xf32, #tpu.memory_space<vmem>>, vector<8x512xf32>
    %c36 = arith.constant 36 : index
    %c0_172 = arith.constant 0 : index
    %c0_173 = arith.constant 0 : index
    %269 = vector.load %arg7[%c36, %c0_172, %c0_173] : memref<45x1x512xf32, #tpu.memory_space<vmem>>, vector<1x1x512xf32>
    %270 = vector.shape_cast %269 : vector<1x1x512xf32> to vector<1x512xf32>
    %271 = vector.broadcast %270 : vector<1x512xf32> to vector<8x512xf32>
    %272 = arith.mulf %268, %271 : vector<8x512xf32>
    %273 = arith.addf %267, %272 : vector<8x512xf32>
    %c0_174 = arith.constant 0 : index
    %c129_175 = arith.constant 129 : index
    %274 = vector.load %arg12[%c0_174, %c129_175] : memref<8x768xf32, #tpu.memory_space<vmem>>, vector<8x512xf32>
    %c38 = arith.constant 38 : index
    %c0_176 = arith.constant 0 : index
    %c0_177 = arith.constant 0 : index
    %275 = vector.load %arg7[%c38, %c0_176, %c0_177] : memref<45x1x512xf32, #tpu.memory_space<vmem>>, vector<1x1x512xf32>
    %276 = vector.shape_cast %275 : vector<1x1x512xf32> to vector<1x512xf32>
    %277 = vector.broadcast %276 : vector<1x512xf32> to vector<8x512xf32>
    %278 = arith.mulf %274, %277 : vector<8x512xf32>
    %279 = arith.addf %273, %278 : vector<8x512xf32>
    %c0_178 = arith.constant 0 : index
    %c130_179 = arith.constant 130 : index
    %280 = vector.load %arg12[%c0_178, %c130_179] : memref<8x768xf32, #tpu.memory_space<vmem>>, vector<8x512xf32>
    %c39 = arith.constant 39 : index
    %c0_180 = arith.constant 0 : index
    %c0_181 = arith.constant 0 : index
    %281 = vector.load %arg7[%c39, %c0_180, %c0_181] : memref<45x1x512xf32, #tpu.memory_space<vmem>>, vector<1x1x512xf32>
    %282 = vector.shape_cast %281 : vector<1x1x512xf32> to vector<1x512xf32>
    %283 = vector.broadcast %282 : vector<1x512xf32> to vector<8x512xf32>
    %284 = arith.mulf %280, %283 : vector<8x512xf32>
    %285 = arith.addf %279, %284 : vector<8x512xf32>
    %c0_182 = arith.constant 0 : index
    %c131_183 = arith.constant 131 : index
    %286 = vector.load %arg12[%c0_182, %c131_183] : memref<8x768xf32, #tpu.memory_space<vmem>>, vector<8x512xf32>
    %c40 = arith.constant 40 : index
    %c0_184 = arith.constant 0 : index
    %c0_185 = arith.constant 0 : index
    %287 = vector.load %arg7[%c40, %c0_184, %c0_185] : memref<45x1x512xf32, #tpu.memory_space<vmem>>, vector<1x1x512xf32>
    %288 = vector.shape_cast %287 : vector<1x1x512xf32> to vector<1x512xf32>
    %289 = vector.broadcast %288 : vector<1x512xf32> to vector<8x512xf32>
    %290 = arith.mulf %286, %289 : vector<8x512xf32>
    %291 = arith.addf %285, %290 : vector<8x512xf32>
    %c0_186 = arith.constant 0 : index
    %c132_187 = arith.constant 132 : index
    %292 = vector.load %arg12[%c0_186, %c132_187] : memref<8x768xf32, #tpu.memory_space<vmem>>, vector<8x512xf32>
    %c41 = arith.constant 41 : index
    %c0_188 = arith.constant 0 : index
    %c0_189 = arith.constant 0 : index
    %293 = vector.load %arg7[%c41, %c0_188, %c0_189] : memref<45x1x512xf32, #tpu.memory_space<vmem>>, vector<1x1x512xf32>
    %294 = vector.shape_cast %293 : vector<1x1x512xf32> to vector<1x512xf32>
    %295 = vector.broadcast %294 : vector<1x512xf32> to vector<8x512xf32>
    %296 = arith.mulf %292, %295 : vector<8x512xf32>
    %297 = arith.addf %291, %296 : vector<8x512xf32>
    %c0_190 = arith.constant 0 : index
    %c133_191 = arith.constant 133 : index
    %298 = vector.load %arg12[%c0_190, %c133_191] : memref<8x768xf32, #tpu.memory_space<vmem>>, vector<8x512xf32>
    %c42 = arith.constant 42 : index
    %c0_192 = arith.constant 0 : index
    %c0_193 = arith.constant 0 : index
    %299 = vector.load %arg7[%c42, %c0_192, %c0_193] : memref<45x1x512xf32, #tpu.memory_space<vmem>>, vector<1x1x512xf32>
    %300 = vector.shape_cast %299 : vector<1x1x512xf32> to vector<1x512xf32>
    %301 = vector.broadcast %300 : vector<1x512xf32> to vector<8x512xf32>
    %302 = arith.mulf %298, %301 : vector<8x512xf32>
    %303 = arith.addf %297, %302 : vector<8x512xf32>
    %c0_194 = arith.constant 0 : index
    %c134_195 = arith.constant 134 : index
    %304 = vector.load %arg12[%c0_194, %c134_195] : memref<8x768xf32, #tpu.memory_space<vmem>>, vector<8x512xf32>
    %c43 = arith.constant 43 : index
    %c0_196 = arith.constant 0 : index
    %c0_197 = arith.constant 0 : index
    %305 = vector.load %arg7[%c43, %c0_196, %c0_197] : memref<45x1x512xf32, #tpu.memory_space<vmem>>, vector<1x1x512xf32>
    %306 = vector.shape_cast %305 : vector<1x1x512xf32> to vector<1x512xf32>
    %307 = vector.broadcast %306 : vector<1x512xf32> to vector<8x512xf32>
    %308 = arith.mulf %304, %307 : vector<8x512xf32>
    %309 = arith.addf %303, %308 : vector<8x512xf32>
    %c0_198 = arith.constant 0 : index
    %c135_199 = arith.constant 135 : index
    %310 = vector.load %arg12[%c0_198, %c135_199] : memref<8x768xf32, #tpu.memory_space<vmem>>, vector<8x512xf32>
    %c44 = arith.constant 44 : index
    %c0_200 = arith.constant 0 : index
    %c0_201 = arith.constant 0 : index
    %311 = vector.load %arg7[%c44, %c0_200, %c0_201] : memref<45x1x512xf32, #tpu.memory_space<vmem>>, vector<1x1x512xf32>
    %312 = vector.shape_cast %311 : vector<1x1x512xf32> to vector<1x512xf32>
    %313 = vector.broadcast %312 : vector<1x512xf32> to vector<8x512xf32>
    %314 = arith.mulf %310, %313 : vector<8x512xf32>
    %315 = arith.addf %309, %314 : vector<8x512xf32>
    %cst_202 = arith.constant 0.000000e+00 : f32
    %316 = vector.broadcast %cst_202 : f32 to vector<8x512xf32>
    %317 = arith.maximumf %315, %316 : vector<8x512xf32>
    %c0_203 = arith.constant 0 : index
    %c128_204 = arith.constant 128 : index
    %318 = vector.load %arg12[%c0_203, %c128_204] : memref<8x768xf32, #tpu.memory_space<vmem>>, vector<8x512xf32>
    tpu.vector_store %arg12[%c0_203, %c128_204], %317 {strides = array<i32>} : memref<8x768xf32, #tpu.memory_space<vmem>>, vector<8x512xf32>,
    %c0_205 = arith.constant 0 : index
    %c112 = arith.constant 112 : index
    %319 = vector.load %arg12[%c0_205, %c112] : memref<8x768xf32, #tpu.memory_space<vmem>>, vector<8x512xf32>
    %c0_206 = arith.constant 0 : index
    %c0_207 = arith.constant 0 : index
    %c0_208 = arith.constant 0 : index
    %320 = vector.load %arg6[%c0_206, %c0_207, %c0_208] : memref<3x1x512xf32, #tpu.memory_space<vmem>>, vector<1x1x512xf32>
    %321 = vector.shape_cast %320 : vector<1x1x512xf32> to vector<1x512xf32>
    %322 = vector.broadcast %321 : vector<1x512xf32> to vector<8x512xf32>
    %323 = arith.mulf %319, %322 : vector<8x512xf32>
    %c0_209 = arith.constant 0 : index
    %c144 = arith.constant 144 : index
    %324 = vector.load %arg12[%c0_209, %c144] : memref<8x768xf32, #tpu.memory_space<vmem>>, vector<8x512xf32>
    %c2_210 = arith.constant 2 : index
    %c0_211 = arith.constant 0 : index
    %c0_212 = arith.constant 0 : index
    %325 = vector.load %arg6[%c2_210, %c0_211, %c0_212] : memref<3x1x512xf32, #tpu.memory_space<vmem>>, vector<1x1x512xf32>
    %326 = vector.shape_cast %325 : vector<1x1x512xf32> to vector<1x512xf32>
    %327 = vector.broadcast %326 : vector<1x512xf32> to vector<8x512xf32>
    %328 = arith.mulf %324, %327 : vector<8x512xf32>
    %329 = tpu.concatenate %323, %317, %328 in 0 : vector<8x512xf32>, vector<8x512xf32>, vector<8x512xf32> -> vector<24x512xf32>
    %c0_213 = arith.constant 0 : index
    %c0_214 = arith.constant 0 : index
    %330 = vector.load %arg4[%c0_213, %c0_214] : memref<8x24xbf16, #tpu.memory_space<vmem>>, vector<8x24xbf16>
    %331 = arith.truncf %329 : vector<24x512xf32> to vector<24x512xbf16>
    %cst_215 = arith.constant dense<0.000000e+00> : vector<8x512xf32>
    %332 = tpu.matmul %330, %331, %cst_215 {dimension_numbers = #tpu.dot_dimension_numbers<[1], [0], [0], [1], [0, 0, 1, 1], [], []>} : vector<8x24xbf16>, vector<24x512xbf16>, vector<8x512xf32> -> vector<8x512xf32>
    %c0_216 = arith.constant 0 : index
    %c0_217 = arith.constant 0 : index
    %333 = vector.load %arg5[%c0_216, %c0_217] : memref<8x1xf32, #tpu.memory_space<vmem>>, vector<8x1xf32>
    %334 = vector.broadcast %333 : vector<8x1xf32> to vector<8x512xf32>
    %335 = arith.addf %332, %334 : vector<8x512xf32>
    %336 = arith.addf %335, %317 : vector<8x512xf32>
    %cst_218 = arith.constant 0.000000e+00 : f32
    %337 = vector.broadcast %cst_218 : f32 to vector<8x512xf32>
    %338 = arith.maximumf %336, %337 : vector<8x512xf32>
    %cst_219 = arith.constant dense<0.000000e+00> : vector<8xf32>
    %339 = vector.multi_reduction <add>, %338, %cst_219 [1] : vector<8x512xf32> to vector<8xf32>
    %340 = vector.shape_cast %339 : vector<8xf32> to vector<8x1xf32>
    %cst_220 = arith.constant 0.001953125 : f32
    %341 = vector.broadcast %cst_220 : f32 to vector<8x1xf32>
    %342 = arith.mulf %340, %341 : vector<8x1xf32>
    %343 = vector.broadcast %342 : vector<8x1xf32> to vector<8x512xf32>
    %344 = arith.subf %338, %343 : vector<8x512xf32>
    %345 = arith.mulf %344, %344 : vector<8x512xf32>
    %cst_221 = arith.constant dense<0.000000e+00> : vector<8xf32>
    %346 = vector.multi_reduction <add>, %345, %cst_221 [1] : vector<8x512xf32> to vector<8xf32>
    %347 = vector.shape_cast %346 : vector<8xf32> to vector<8x1xf32>
    %cst_222 = arith.constant 0.001953125 : f32
    %348 = vector.broadcast %cst_222 : f32 to vector<8x1xf32>
    %349 = arith.mulf %347, %348 : vector<8x1xf32>
    %c0_223 = arith.constant 0 : index
    %c0_224 = arith.constant 0 : index
    %350 = vector.load %arg9[%c0_223, %c0_224] : memref<8x1xf32, #tpu.memory_space<vmem>>, vector<8x1xf32>
    %cst_225 = arith.constant 9.99999974E-6 : f32
    %351 = vector.broadcast %cst_225 : f32 to vector<8x1xf32>
    %352 = arith.addf %349, %351 : vector<8x1xf32>
    %353 = math.rsqrt %352 : vector<8x1xf32>
    %354 = arith.mulf %350, %353 : vector<8x1xf32>
    %355 = vector.broadcast %354 : vector<8x1xf32> to vector<8x512xf32>
    %356 = arith.mulf %344, %355 : vector<8x512xf32>
    %c0_226 = arith.constant 0 : index
    %c0_227 = arith.constant 0 : index
    %357 = vector.load %arg10[%c0_226, %c0_227] : memref<8x1xf32, #tpu.memory_space<vmem>>, vector<8x1xf32>
    %358 = vector.broadcast %357 : vector<8x1xf32> to vector<8x512xf32>
    %359 = arith.addf %356, %358 : vector<8x512xf32>
    %360 = vector.extract_strided_slice %359 {offsets = [0, 0], sizes = [8, 256], strides = [1, 1]} : vector<8x512xf32> to vector<8x256xf32>
    %c0_228 = arith.constant 0 : index
    %c0_229 = arith.constant 0 : index
    %c0_230 = arith.constant 0 : index
    %361 = vector.load %arg11[%c0_228, %c0_229, %c0_230] : memref<2x8x256xf32, #tpu.memory_space<vmem>>, vector<1x8x256xf32>
    %362 = vector.shape_cast %361 : vector<1x8x256xf32> to vector<8x256xf32>
    %363 = vector.shape_cast %360 : vector<8x256xf32> to vector<1x8x256xf32>
    tpu.vector_store %arg11[%c0_228, %c0_229, %c0_230], %363 {strides = array<i32>} : memref<2x8x256xf32, #tpu.memory_space<vmem>>, vector<1x8x256xf32>,
    %364 = vector.extract_strided_slice %359 {offsets = [0, 256], sizes = [8, 256], strides = [1, 1]} : vector<8x512xf32> to vector<8x256xf32>
    %c1_231 = arith.constant 1 : index
    %c0_232 = arith.constant 0 : index
    %c0_233 = arith.constant 0 : index
    %365 = vector.load %arg11[%c1_231, %c0_232, %c0_233] : memref<2x8x256xf32, #tpu.memory_space<vmem>>, vector<1x8x256xf32>
    %366 = vector.shape_cast %365 : vector<1x8x256xf32> to vector<8x256xf32>
    %367 = vector.shape_cast %364 : vector<8x256xf32> to vector<1x8x256xf32>
    tpu.vector_store %arg11[%c1_231, %c0_232, %c0_233], %367 {strides = array<i32>} : memref<2x8x256xf32, #tpu.memory_space<vmem>>, vector<1x8x256xf32>,
    return
  }
  func.func @transform_0(%arg0: i32) -> (i32, i32, i32) {
    %c0_i32 = arith.constant 0 : i32
    %c0_i32_0 = arith.constant 0 : i32
    %c0_i32_1 = arith.constant 0 : i32
    %c0_i32_2 = arith.constant 0 : i32
    return %c0_i32, %c0_i32_0, %c0_i32_1 : i32, i32, i32
  }
  func.func @transform_1(%arg0: i32) -> (i32, i32) {
    %c0_i32 = arith.constant 0 : i32
    %c0_i32_0 = arith.constant 0 : i32
    %c0_i32_1 = arith.constant 0 : i32
    return %c0_i32, %c0_i32_0 : i32, i32
  }
  func.func @transform_2(%arg0: i32) -> (i32, i32) {
    %c0_i32 = arith.constant 0 : i32
    %c0_i32_0 = arith.constant 0 : i32
    %c0_i32_1 = arith.constant 0 : i32
    return %c0_i32, %c0_i32_0 : i32, i32
  }
  func.func @transform_3(%arg0: i32) -> (i32, i32) {
    %c0_i32 = arith.constant 0 : i32
    %c0_i32_0 = arith.constant 0 : i32
    %c0_i32_1 = arith.constant 0 : i32
    return %c0_i32, %c0_i32_0 : i32, i32
  }
  func.func @transform_4(%arg0: i32) -> (i32, i32) {
    %c0_i32 = arith.constant 0 : i32
    %c0_i32_0 = arith.constant 0 : i32
    %c0_i32_1 = arith.constant 0 : i32
    return %c0_i32, %c0_i32_0 : i32, i32
  }
  func.func @transform_5(%arg0: i32) -> (i32, i32, i32) {
    %c0_i32 = arith.constant 0 : i32
    %c0_i32_0 = arith.constant 0 : i32
    %c0_i32_1 = arith.constant 0 : i32
    %c0_i32_2 = arith.constant 0 : i32
    return %c0_i32, %c0_i32_0, %c0_i32_1 : i32, i32, i32
  }
  func.func @transform_6(%arg0: i32) -> (i32, i32, i32) {
    %c0_i32 = arith.constant 0 : i32
    %c0_i32_0 = arith.constant 0 : i32
    %c0_i32_1 = arith.constant 0 : i32
    %c0_i32_2 = arith.constant 0 : i32
    return %c0_i32, %c0_i32_0, %c0_i32_1 : i32, i32, i32
  }
  func.func @transform_7(%arg0: i32) -> (i32, i32, i32) {
    %c0_i32 = arith.constant 0 : i32
    %c0_i32_0 = arith.constant 0 : i32
    %c0_i32_1 = arith.constant 0 : i32
    %c0_i32_2 = arith.constant 0 : i32
    return %c0_i32, %c0_i32_0, %c0_i32_1 : i32, i32, i32
  }
  func.func @transform_8(%arg0: i32) -> (i32, i32) {
    %c0_i32 = arith.constant 0 : i32
    %c0_i32_0 = arith.constant 0 : i32
    %c0_i32_1 = arith.constant 0 : i32
    return %c0_i32, %c0_i32_0 : i32, i32
  }
  func.func @transform_9(%arg0: i32) -> (i32, i32) {
    %c0_i32 = arith.constant 0 : i32
    %c0_i32_0 = arith.constant 0 : i32
    %c0_i32_1 = arith.constant 0 : i32
    return %c0_i32, %c0_i32_0 : i32, i32
  }
  func.func @transform_10(%arg0: i32) -> (i32, i32, i32) {
    %c0_i32 = arith.constant 0 : i32
    %c0_i32_0 = arith.constant 0 : i32
    %c0_i32_1 = arith.constant 0 : i32
    %c0_i32_2 = arith.constant 0 : i32
    return %c0_i32, %c0_i32_0, %c0_i32_1 : i32, i32, i32
  }
}

</mosaic_0001>

<llo_original>
// kernel: tile.256
$region0: #{tile.256}
  %s0 = inlined_call_operand.vmem [shape: f32[16,16], index: 0, kind: input, shape index: {}]
  %s1 = inlined_call_operand.vmem [shape: f32[256], index: 1, kind: output, shape index: {}]
  $region1: #{tile.256} parent=0
    #allocation0 [shape = 'u8[4096]{0}', space=vmem, size = 0x1000, scoped, tag = 'scoped mem for output reshape']
    %s2 = smov 3
    %v3 = vld [vmem:[%s0] ss:$8 sm:%s2]
    %vm4 = vcmask 130048
    %5 = vst.msk [vmem:[#allocation0] sm:$0x3] %vm4, %v3
    %s6 = scalar_lea.vmem %s0, 7
    %s7 = smov 3
    %v8 = vld [vmem:[%s6] ss:$8 sm:%s7]
    %9 = vrot.lane.b32.xlu0 %v8, 112
    %v10 = vpop.permute.xlu0 %9
    %vm11 = vcmask 1048448
    %12 = vst.msk [vmem:[#allocation0] sm:$0x3] %vm11, %v10
    %s13 = scalar_lea.vmem %s0, 6
    %s14 = smov 3
    %v15 = vld [vmem:[%s13] ss:$8 sm:%s14]
    %16 = vrot.lane.b32.xlu0 %v15, 96
    %v17 = vpop.permute.xlu0 %16
    %vm18 = vcmask 917248
    %19 = vst.msk [vmem:[#allocation0] sm:$0x3] %vm18, %v17
    %s20 = scalar_lea.vmem %s0, 5
    %s21 = smov 3
    %v22 = vld [vmem:[%s20] ss:$8 sm:%s21]
    %23 = vrot.lane.b32.xlu0 %v22, 80
    %v24 = vpop.permute.xlu0 %23
    %vm25 = vcmask 786048
    %26 = vst.msk [vmem:[#allocation0] sm:$0x3] %vm25, %v24
    %s27 = scalar_lea.vmem %s0, 4
    %s28 = smov 3
    %v29 = vld [vmem:[%s27] ss:$8 sm:%s28]
    %30 = vrot.lane.b32.xlu0 %v29, 64
    %v31 = vpop.permute.xlu0 %30
    %vm32 = vcmask 654848
    %33 = vst.msk [vmem:[#allocation0] sm:$0x3] %vm32, %v31
    %s34 = scalar_lea.vmem %s0, 3
    %s35 = smov 3
    %v36 = vld [vmem:[%s34] ss:$8 sm:%s35]
    %37 = vrot.lane.b32.xlu0 %v36, 48
    %v38 = vpop.permute.xlu0 %37
    %vm39 = vcmask 523648
    %40 = vst.msk [vmem:[#allocation0] sm:$0x3] %vm39, %v38
    %s41 = scalar_lea.vmem %s0, 2
    %s42 = smov 3
    %v43 = vld [vmem:[%s41] ss:$8 sm:%s42]
    %44 = vrot.lane.b32.xlu0 %v43, 32
    %v45 = vpop.permute.xlu0 %44
    %vm46 = vcmask 392448
    %47 = vst.msk [vmem:[#allocation0] sm:$0x3] %vm46, %v45
    %s48 = scalar_lea.vmem %s0, 1
    %s49 = smov 3
    %v50 = vld [vmem:[%s48] ss:$8 sm:%s49]
    %51 = vrot.lane.b32.xlu0 %v50, 16
    %v52 = vpop.permute.xlu0 %51
    %vm53 = vcmask 261248
    %54 = vst.msk [vmem:[#allocation0] sm:$0x3] %vm53, %v52
    %s56 = sshllo.u32 0, 2
    %v58 = vld [vmem:[#allocation0] sm:%s56]
    %s59 = sshllo.u32 0, 2
    %60 = vst [vmem:[%s1] sm:%s59] %v58

// kernel: tile.264
$region0: #{tile.264}
  #allocation0 [shape = 's32[1]{0}', space=sflag, size = 0x4, scoped, tag = 'scoped memory for tile.264']
  %s0 = inlined_call_operand.vmem [shape: f32[8], index: 0, kind: input, shape index: {}]
  %s1 = inlined_call_operand.vmem [shape: f32[64,8], index: 1, kind: output, shape index: {}]
  // Predicated region
  $region2: #{tile.264} parent=0 // pred_check
    _
  $region3: #{tile.264} parent=0 // pred_check_branch
    %3 = sbr.rel (0) target = $region5
  $region4: #{tile.264} parent=0 // pred_region
    _
  $region5: #{tile.264} parent=0 // pred_fallthru
    _
  %v4 = vld [vmem:[%s0] ss:$0 sm:$0xff]
  %5 = vst [vmem:[%s1] sm:$0xff] %v4
  %s6 = scalar_lea.vmem %s1, 8
  %7 = vst [vmem:[%s6] sm:$0xff] %v4
  %s8 = scalar_lea.vmem %s1, 16
  %9 = vst [vmem:[%s8] sm:$0xff] %v4
  %s10 = scalar_lea.vmem %s1, 24
  %11 = vst [vmem:[%s10] sm:$0xff] %v4
  %s12 = scalar_lea.vmem %s1, 32
  %13 = vst [vmem:[%s12] sm:$0xff] %v4
  %s14 = scalar_lea.vmem %s1, 40
  %15 = vst [vmem:[%s14] sm:$0xff] %v4
  %s16 = scalar_lea.vmem %s1, 48
  %17 = vst [vmem:[%s16] sm:$0xff] %v4
  %s18 = scalar_lea.vmem %s1, 56
  %19 = vst [vmem:[%s18] sm:$0xff] %v4

// kernel: tile.441
$region0: #{tile.441}
  %s0 = inlined_call_operand.vmem [shape: f32[64,8], index: 0, kind: input, shape index: {}]
  %s1 = inlined_call_operand.vmem [shape: f32[1,512], index: 1, kind: output, shape index: {}]
  $region1: #{tile.441} parent=0
    #allocation0 [shape = 'u8[16384]{0}', space=vmem, size = 0x4000, scoped, tag = 'scoped mem for output reshape']
    %s2 = smov 3
    %v3 = vld [vmem:[%s0] ss:$16 sm:%s2]
    %s4 = smov 12
    %v5 = vld [vmem:[%s0] ss:$16 sm:%s4]
    %vm6 = vcmask 1043458
    %v7 = vsel %vm6, %v5, %v3
    %vm8 = vcmask 64512
    %9 = vst.msk [vmem:[#allocation0] ss:$8 sm:$0xf] %vm8, %v7
    %s10 = scalar_lea.vmem %s0, 15
    %s11 = smov 3
    %v12 = vld [vmem:[%s10] ss:$16 sm:%s11]
    %s13 = scalar_lea.vmem %s0, 15
    %s14 = smov 12
    %v15 = vld [vmem:[%s13] ss:$16 sm:%s14]
    %vm16 = vcmask 1043458
    %v17 = vsel %vm16, %v15, %v12
    %18 = vrot.lane.b32.xlu0 %v17, 120
    %v19 = vpop.permute.xlu0 %18
    %vm20 = vcmask 1048512
    %21 = vst.msk [vmem:[#allocation0] ss:$8 sm:$0xf] %vm20, %v19
    %s22 = scalar_lea.vmem %s0, 14
    %s23 = smov 3
    %v24 = vld [vmem:[%s22] ss:$16 sm:%s23]
    %s25 = scalar_lea.vmem %s0, 14
    %s26 = smov 12
    %v27 = vld [vmem:[%s25] ss:$16 sm:%s26]
    %vm28 = vcmask 1043458
    %v29 = vsel %vm28, %v27, %v24
    %30 = vrot.lane.b32.xlu0 %v29, 112
    %v31 = vpop.permute.xlu0 %30
    %vm32 = vcmask 982912
    %33 = vst.msk [vmem:[#allocation0] ss:$8 sm:$0xf] %vm32, %v31
    %s34 = scalar_lea.vmem %s0, 13
    %s35 = smov 3
    %v36 = vld [vmem:[%s34] ss:$16 sm:%s35]
    %s37 = scalar_lea.vmem %s0, 13
    %s38 = smov 12
    %v39 = vld [vmem:[%s37] ss:$16 sm:%s38]
    %vm40 = vcmask 1043458
    %v41 = vsel %vm40, %v39, %v36
    %42 = vrot.lane.b32.xlu0 %v41, 104
    %v43 = vpop.permute.xlu0 %42
    %vm44 = vcmask 917312
    %45 = vst.msk [vmem:[#allocation0] ss:$8 sm:$0xf] %vm44, %v43
    %s46 = scalar_lea.vmem %s0, 12
    %s47 = smov 3
    %v48 = vld [vmem:[%s46] ss:$16 sm:%s47]
    %s49 = scalar_lea.vmem %s0, 12
    %s50 = smov 12
    %v51 = vld [vmem:[%s49] ss:$16 sm:%s50]
    %vm52 = vcmask 1043458
    %v53 = vsel %vm52, %v51, %v48
    %54 = vrot.lane.b32.xlu0 %v53, 96
    %v55 = vpop.permute.xlu0 %54
    %vm56 = vcmask 851712
    %57 = vst.msk [vmem:[#allocation0] ss:$8 sm:$0xf] %vm56, %v55
    %s58 = scalar_lea.vmem %s0, 11
    %s59 = smov 3
    %v60 = vld [vmem:[%s58] ss:$16 sm:%s59]
    %s61 = scalar_lea.vmem %s0, 11
    %s62 = smov 12
    %v63 = vld [vmem:[%s61] ss:$16 sm:%s62]
    %vm64 = vcmask 1043458
    %v65 = vsel %vm64, %v63, %v60
    %66 = vrot.lane.b32.xlu0 %v65, 88
    %v67 = vpop.permute.xlu0 %66
    %vm68 = vcmask 786112
    %69 = vst.msk [vmem:[#allocation0] ss:$8 sm:$0xf] %vm68, %v67
    %s70 = scalar_lea.vmem %s0, 10
    %s71 = smov 3
    %v72 = vld [vmem:[%s70] ss:$16 sm:%s71]
    %s73 = scalar_lea.vmem %s0, 10
    %s74 = smov 12
    %v75 = vld [vmem:[%s73] ss:$16 sm:%s74]
    %vm76 = vcmask 1043458
    %v77 = vsel %vm76, %v75, %v72
    %78 = vrot.lane.b32.xlu0 %v77, 80
    %v79 = vpop.permute.xlu0 %78
    %vm80 = vcmask 720512
    %81 = vst.msk [vmem:[#allocation0] ss:$8 sm:$0xf] %vm80, %v79
    %s82 = scalar_lea.vmem %s0, 9
    %s83 = smov 3
    %v84 = vld [vmem:[%s82] ss:$16 sm:%s83]
    %s85 = scalar_lea.vmem %s0, 9
    %s86 = smov 12
    %v87 = vld [vmem:[%s85] ss:$16 sm:%s86]
    %vm88 = vcmask 1043458
    %v89 = vsel %vm88, %v87, %v84
    %90 = vrot.lane.b32.xlu0 %v89, 72
    %v91 = vpop.permute.xlu0 %90
    %vm92 = vcmask 654912
    %93 = vst.msk [vmem:[#allocation0] ss:$8 sm:$0xf] %vm92, %v91
    %s94 = scalar_lea.vmem %s0, 8
    %s95 = smov 3
    %v96 = vld [vmem:[%s94] ss:$16 sm:%s95]
    %s97 = scalar_lea.vmem %s0, 8
    %s98 = smov 12
    %v99 = vld [vmem:[%s97] ss:$16 sm:%s98]
    %vm100 = vcmask 1043458
    %v101 = vsel %vm100, %v99, %v96
    %102 = vrot.lane.b32.xlu0 %v101, 64
    %v103 = vpop.permute.xlu0 %102
    %vm104 = vcmask 589312
    %105 = vst.msk [vmem:[#allocation0] ss:$8 sm:$0xf] %vm104, %v103
    %s106 = scalar_lea.vmem %s0, 7
    %s107 = smov 3
    %v108 = vld [vmem:[%s106] ss:$16 sm:%s107]
    %s109 = scalar_lea.vmem %s0, 7
    %s110 = smov 12
    %v111 = vld [vmem:[%s109] ss:$16 sm:%s110]
    %vm112 = vcmask 1043458
    %v113 = vsel %vm112, %v111, %v108
    %114 = vrot.lane.b32.xlu0 %v113, 56
    %v115 = vpop.permute.xlu0 %114
    %vm116 = vcmask 523712
    %117 = vst.msk [vmem:[#allocation0] ss:$8 sm:$0xf] %vm116, %v115
    %s118 = scalar_lea.vmem %s0, 6
    %s119 = smov 3
    %v120 = vld [vmem:[%s118] ss:$16 sm:%s119]
    %s121 = scalar_lea.vmem %s0, 6
    %s122 = smov 12
    %v123 = vld [vmem:[%s121] ss:$16 sm:%s122]
    %vm124 = vcmask 1043458
    %v125 = vsel %vm124, %v123, %v120
    %126 = vrot.lane.b32.xlu0 %v125, 48
    %v127 = vpop.permute.xlu0 %126
    %vm128 = vcmask 458112
    %129 = vst.msk [vmem:[#allocation0] ss:$8 sm:$0xf] %vm128, %v127
    %s130 = scalar_lea.vmem %s0, 5
    %s131 = smov 3
    %v132 = vld [vmem:[%s130] ss:$16 sm:%s131]
    %s133 = scalar_lea.vmem %s0, 5
    %s134 = smov 12
    %v135 = vld [vmem:[%s133] ss:$16 sm:%s134]
    %vm136 = vcmask 1043458
    %v137 = vsel %vm136, %v135, %v132
    %138 = vrot.lane.b32.xlu0 %v137, 40
    %v139 = vpop.permute.xlu0 %138
    %vm140 = vcmask 392512
    %141 = vst.msk [vmem:[#allocation0] ss:$8 sm:$0xf] %vm140, %v139
    %s142 = scalar_lea.vmem %s0, 4
    %s143 = smov 3
    %v144 = vld [vmem:[%s142] ss:$16 sm:%s143]
    %s145 = scalar_lea.vmem %s0, 4
    %s146 = smov 12
    %v147 = vld [vmem:[%s145] ss:$16 sm:%s146]
    %vm148 = vcmask 1043458
    %v149 = vsel %vm148, %v147, %v144
    %150 = vrot.lane.b32.xlu0 %v149, 32
    %v151 = vpop.permute.xlu0 %150
    %vm152 = vcmask 326912
    %153 = vst.msk [vmem:[#allocation0] ss:$8 sm:$0xf] %vm152, %v151
    %s154 = scalar_lea.vmem %s0, 3
    %s155 = smov 3
    %v156 = vld [vmem:[%s154] ss:$16 sm:%s155]
    %s157 = scalar_lea.vmem %s0, 3
    %s158 = smov 12
    %v159 = vld [vmem:[%s157] ss:$16 sm:%s158]
    %vm160 = vcmask 1043458
    %v161 = vsel %vm160, %v159, %v156
    %162 = vrot.lane.b32.xlu0 %v161, 24
    %v163 = vpop.permute.xlu0 %162
    %vm164 = vcmask 261312
    %165 = vst.msk [vmem:[#allocation0] ss:$8 sm:$0xf] %vm164, %v163
    %s166 = scalar_lea.vmem %s0, 2
    %s167 = smov 3
    %v168 = vld [vmem:[%s166] ss:$16 sm:%s167]
    %s169 = scalar_lea.vmem %s0, 2
    %s170 = smov 12
    %v171 = vld [vmem:[%s169] ss:$16 sm:%s170]
    %vm172 = vcmask 1043458
    %v173 = vsel %vm172, %v171, %v168
    %174 = vrot.lane.b32.xlu0 %v173, 16
    %v175 = vpop.permute.xlu0 %174
    %vm176 = vcmask 195712
    %177 = vst.msk [vmem:[#allocation0] ss:$8 sm:$0xf] %vm176, %v175
    %s178 = scalar_lea.vmem %s0, 1
    %s179 = smov 3
    %v180 = vld [vmem:[%s178] ss:$16 sm:%s179]
    %s181 = scalar_lea.vmem %s0, 1
    %s182 = smov 12
    %v183 = vld [vmem:[%s181] ss:$16 sm:%s182]
    %vm184 = vcmask 1043458
    %v185 = vsel %vm184, %v183, %v180
    %186 = vrot.lane.b32.xlu0 %v185, 8
    %v187 = vpop.permute.xlu0 %186
    %vm188 = vcmask 130112
    %189 = vst.msk [vmem:[#allocation0] ss:$8 sm:$0xf] %vm188, %v187
    %s191 = sshllo.u32 0, 1
    %v193 = vld [vmem:[#allocation0] sm:%s191]
    %s194 = sshllo.u32 0, 1
    %195 = vst [vmem:[%s1] sm:%s194] %v193
    %s196 = scalar_lea.vmem [#allocation0], 8
    %v197 = vld [vmem:[%s196] sm:%s191]
    %s198 = sshllo.u32 0, 1
    %s199 = scalar_lea.vmem %s1, 1
    %200 = vst [vmem:[%s199] sm:%s198] %v197
    %s201 = scalar_lea.vmem [#allocation0], 16
    %v202 = vld [vmem:[%s201] sm:%s191]
    %s203 = sshllo.u32 0, 1
    %s204 = smul.addr 1, 2
    %s205 = scalar_lea.vmem %s1, %s204
    %206 = vst [vmem:[%s205] sm:%s203] %v202
    %s207 = scalar_lea.vmem [#allocation0], 24
    %v208 = vld [vmem:[%s207] sm:%s191]
    %s209 = sshllo.u32 0, 1
    %s210 = smul.addr 1, 3
    %s211 = scalar_lea.vmem %s1, %s210
    %212 = vst [vmem:[%s211] sm:%s209] %v208

// kernel: st_conv_block_forward.1
$region0: #{st_conv_block_forward.1}
  #allocation0 [shape = 'u32[]', space=smem, size = 0x4, offset = 0x4, fixed_abs, tag = 'smem constant byte address 0x4 - core index']
  #allocation1 [shape = 'u32[144,128]{1,0:T(1,128)}', space=vmem, size = 0x12000, scoped, tag = 'internal scratch']
  #allocation2 [shape = 'f32[8,768]{1,0:T(8,128)}', space=vmem, size = 0x6000, scoped, tag = 'scratch operand']
  %s0 = inlined_call_operand.vmem [shape: f32[2,8,288], index: 0, kind: input, shape index: {}]
  %s1 = inlined_call_operand.vmem [shape: bf16[16,24], index: 1, kind: input, shape index: {}]
  %s2 = inlined_call_operand.vmem [shape: f32[16,1], index: 2, kind: input, shape index: {}]
  %s3 = inlined_call_operand.vmem [shape: bf16[8,24], index: 3, kind: input, shape index: {}]
  %s4 = inlined_call_operand.vmem [shape: f32[8,1], index: 4, kind: input, shape index: {}]
  %s5 = inlined_call_operand.vmem [shape: f32[3,1,512], index: 5, kind: input, shape index: {}]
  %s6 = inlined_call_operand.vmem [shape: f32[45,1,512], index: 6, kind: input, shape index: {}]
  %s7 = inlined_call_operand.vmem [shape: f32[3,1,512], index: 7, kind: input, shape index: {}]
  %s8 = inlined_call_operand.vmem [shape: f32[8,1], index: 8, kind: input, shape index: {}]
  %s9 = inlined_call_operand.vmem [shape: f32[8,1], index: 9, kind: input, shape index: {}]
  %s10 = inlined_call_operand.vmem [shape: f32[2,8,256], index: 10, kind: output, shape index: {}]
  %s11 = sld [smem:[#allocation0]]
  $region50: #{st_conv_block_forward.1} parent=0
    _
  %s13 = ssub.s32 1, %s11
  %s14 = scalar_select 0, %s13, %s11
  // Predicated region
  $region2: #{st_conv_block_forward.1} parent=0 // pred_check
    _
  $region3: #{st_conv_block_forward.1} parent=0 // pred_check_branch
    %16 = sbr.rel (0) target = $region5
  $region4: #{st_conv_block_forward.1} parent=0 // pred_region
    _
  $region5: #{st_conv_block_forward.1} parent=0 // pred_fallthru
    _
  // Predicated region
  $region6: #{st_conv_block_forward.1} parent=0 // pred_check
    _
  $region7: #{st_conv_block_forward.1} parent=0 // pred_check_branch
    %18 = sbr.rel (0) target = $region9
  $region8: #{st_conv_block_forward.1} parent=0 // pred_region
    _
  $region9: #{st_conv_block_forward.1} parent=0 // pred_fallthru
    _
  // Predicated region
  $region10: #{st_conv_block_forward.1} parent=0 // pred_check
    _
  $region11: #{st_conv_block_forward.1} parent=0 // pred_check_branch
    %20 = sbr.rel (0) target = $region13
  $region12: #{st_conv_block_forward.1} parent=0 // pred_region
    _
  $region13: #{st_conv_block_forward.1} parent=0 // pred_fallthru
    _
  // Predicated region
  $region14: #{st_conv_block_forward.1} parent=0 // pred_check
    _
  $region15: #{st_conv_block_forward.1} parent=0 // pred_check_branch
    %22 = sbr.rel (0) target = $region17
  $region16: #{st_conv_block_forward.1} parent=0 // pred_region
    _
  $region17: #{st_conv_block_forward.1} parent=0 // pred_fallthru
    _
  // Predicated region
  $region18: #{st_conv_block_forward.1} parent=0 // pred_check
    _
  $region19: #{st_conv_block_forward.1} parent=0 // pred_check_branch
    %24 = sbr.rel (0) target = $region21
  $region20: #{st_conv_block_forward.1} parent=0 // pred_region
    _
  $region21: #{st_conv_block_forward.1} parent=0 // pred_fallthru
    _
  // Predicated region
  $region22: #{st_conv_block_forward.1} parent=0 // pred_check
    _
  $region23: #{st_conv_block_forward.1} parent=0 // pred_check_branch
    %26 = sbr.rel (0) target = $region25
  $region24: #{st_conv_block_forward.1} parent=0 // pred_region
    _
  $region25: #{st_conv_block_forward.1} parent=0 // pred_fallthru
    _
  // Predicated region
  $region26: #{st_conv_block_forward.1} parent=0 // pred_check
    _
  $region27: #{st_conv_block_forward.1} parent=0 // pred_check_branch
    %28 = sbr.rel (0) target = $region29
  $region28: #{st_conv_block_forward.1} parent=0 // pred_region
    _
  $region29: #{st_conv_block_forward.1} parent=0 // pred_fallthru
    _
  // Predicated region
  $region30: #{st_conv_block_forward.1} parent=0 // pred_check
    _
  $region31: #{st_conv_block_forward.1} parent=0 // pred_check_branch
    %30 = sbr.rel (0) target = $region33
  $region32: #{st_conv_block_forward.1} parent=0 // pred_region
    _
  $region33: #{st_conv_block_forward.1} parent=0 // pred_fallthru
    _
  // Predicated region
  $region34: #{st_conv_block_forward.1} parent=0 // pred_check
    _
  $region35: #{st_conv_block_forward.1} parent=0 // pred_check_branch
    %32 = sbr.rel (0) target = $region37
  $region36: #{st_conv_block_forward.1} parent=0 // pred_region
    _
  $region37: #{st_conv_block_forward.1} parent=0 // pred_fallthru
    _
  // Predicated region
  $region38: #{st_conv_block_forward.1} parent=0 // pred_check
    _
  $region39: #{st_conv_block_forward.1} parent=0 // pred_check_branch
    %34 = sbr.rel (0) target = $region41
  $region40: #{st_conv_block_forward.1} parent=0 // pred_region
    _
  $region41: #{st_conv_block_forward.1} parent=0 // pred_fallthru
    _
  %v36 = vld [vmem:[%s0] sm:$0xff]
  %v37 = vld [vmem:[%s0 + $0x8] sm:$0xff]
  %s38 = scalar_lea.vmem %s0, 24
  %v39 = vld [vmem:[%s38] sm:$0xff]
  %v40 = vld [vmem:[%s38 + $0x8] sm:$0xff]
  %v41 = vld [vmem:[%s0 + $0x10] sm:$0xff]
  %v42 = vld [vmem:[%s38 + $0x10] sm:$0xff]
  %46 = vrot.lane.b32.xlu0 %v36, 112
  %v47 = vpop.permute.xlu0 %46
  %48 = vrot.lane.b32.xlu0 %v37, 112
  %v49 = vpop.permute.xlu0 %48
  %50 = vrot.lane.b32.xlu0 %v41, 112
  %v51 = vpop.permute.xlu0 %50
  %vm52 = vcmask 916480
  %v53 = vsel %vm52, %v47, %v49
  %v54 = vsel %vm52, %v49, %v51
  %60 = vrot.lane.b32.xlu0 %v39, 112
  %v61 = vpop.permute.xlu0 %60
  %62 = vrot.lane.b32.xlu0 %v40, 112
  %v63 = vpop.permute.xlu0 %62
  %64 = vrot.lane.b32.xlu0 %v42, 112
  %v65 = vpop.permute.xlu0 %64
  %v66 = vsel %vm52, %v61, %v63
  %v67 = vsel %vm52, %v63, %v65
  %70 = vrot.lane.b32.xlu0 %v36, 96
  %v71 = vpop.permute.xlu0 %70
  %72 = vrot.lane.b32.xlu0 %v37, 96
  %v73 = vpop.permute.xlu0 %72
  %74 = vrot.lane.b32.xlu0 %v41, 96
  %v75 = vpop.permute.xlu0 %74
  %vm76 = vcmask 785408
  %v77 = vsel %vm76, %v71, %v73
  %v78 = vsel %vm76, %v73, %v75
  %81 = vrot.lane.b32.xlu0 %v39, 96
  %v82 = vpop.permute.xlu0 %81
  %83 = vrot.lane.b32.xlu0 %v40, 96
  %v84 = vpop.permute.xlu0 %83
  %85 = vrot.lane.b32.xlu0 %v42, 96
  %v86 = vpop.permute.xlu0 %85
  %v87 = vsel %vm76, %v82, %v84
  %v88 = vsel %vm76, %v84, %v86
  %v91 = vld [vmem:[%s1] sm:$0xf]
  %v92 = vld [vmem:[%s1 + $0x4] sm:$0xf]
  %v93 = vpack.c.bf16 %v53, %v36
  %v94 = vpack.c.bf16 %v54, %v37
  %v95 = vpack.c.bf16 %v66, %v39
  %v96 = vpack.c.bf16 %v67, %v40
  %v97 = vpack.c.bf16 %v77, %v77
  %v98 = vpack.c.bf16 %v78, %v78
  %v99 = vpack.c.bf16 %v87, %v87
  %v100 = vpack.c.bf16 %v88, %v88
  %v101 = vld [vmem:[%s2] sm:$0xff]
  %v102 = vld [vmem:[%s2 + $0x8] sm:$0xff]
  %104 = vset.pattern.permute.xlu0 0
  %105 = vperm.xlu0 %104, %v101
  %v106 = vpop.permute.xlu0 %105
  %109 = vset.pattern.permute.xlu0 0
  %110 = vperm.xlu0 %109, %v102
  %v111 = vpop.permute.xlu0 %110
  %v115 = vunpack.c.l.b16 %v91
  %v116 = vunpack.c.l.b16 %v92
  %v117 = vpack.c.b16 %v116, %v115
  %vm118 = vcmask 195584
  %v120 = vsel %vm118, %v117, 0
  %vm122 = vcmask 1043456
  %v124 = vsel %vm122, %v97, 0
  %v127 = vsel %vm122, %v98, 0
  %v130 = vsel %vm122, %v99, 0
  %v133 = vsel %vm122, %v100, 0
  %135 = vmatprep.subr.bf16.mxu0 %v94
  %136 = vmatpush1.bf16.msra.mxu0 %v93
  %137 = vmatprep.subr.bf16.mxu0 %v127
  %138 = vmatpush1.bf16.msra.mxu0 %v124
  %139 = vmatprep.subr.bf16.mxu0 0
  %140 = vmatpush1.bf16.msra.mxu0 0
  %141 = vmatprep.subr.bf16.mxu0 0
  %142 = vmatpush1.bf16.msra.mxu0 0
  %143 = vmatprep.subr.bf16.mxu0 0
  %144 = vmatpush1.bf16.msra.mxu0 0
  %145 = vmatprep.subr.bf16.mxu0 0
  %146 = vmatpush1.bf16.msra.mxu0 0
  %147 = vmatprep.subr.bf16.mxu0 0
  %148 = vmatpush1.bf16.msra.mxu0 0
  %149 = vmatprep.subr.bf16.mxu0 0
  %150 = vmatpush1.bf16.msra.mxu0 0
  %151 = vmatprep.subr.bf16.mxu0 0
  %152 = vmatpush1.bf16.msra.mxu0 0
  %153 = vmatprep.subr.bf16.mxu0 0
  %154 = vmatpush1.bf16.msra.mxu0 0
  %155 = vmatprep.subr.bf16.mxu0 0
  %156 = vmatpush1.bf16.msra.mxu0 0
  %157 = vmatprep.subr.bf16.mxu0 0
  %158 = vmatpush1.bf16.msra.mxu0 0
  %159 = vmatprep.subr.bf16.mxu0 0
  %160 = vmatpush1.bf16.msra.mxu0 0
  %161 = vmatprep.subr.bf16.mxu0 0
  %162 = vmatpush1.bf16.msra.mxu0 0
  %163 = vmatprep.subr.bf16.mxu0 0
  %164 = vmatpush1.bf16.msra.mxu0 0
  %165 = vmatprep.subr.bf16.mxu0 0
  %166 = vmatpush1.bf16.msra.mxu0 0
  %167 = vmatprep.mubr.bf16.mxu0 0
  %168 = vmatmul.mubr.bf16.gmra.mrb[0].mxu0 %v120
  %v169 = vpop.f32.mrb[0].mxu0
  %v170 = vadd.f32 %v106, %v169
  %v171 = vpop.f32.mrb[0].mxu0
  %v172 = vadd.f32 %v106, %v171
  %v173 = vpop.f32.mrb[0].mxu0
  %v174 = vadd.f32 %v111, %v173
  %v175 = vpop.f32.mrb[0].mxu0
  %v176 = vadd.f32 %v111, %v175
  %177 = vdwg.mxu0
  %178 = vmatprep.subr.bf16.mxu0 %v96
  %179 = vmatpush1.bf16.msra.mxu0 %v95
  %180 = vmatprep.subr.bf16.mxu0 %v133
  %181 = vmatpush1.bf16.msra.mxu0 %v130
  %182 = vmatprep.subr.bf16.mxu0 0
  %183 = vmatpush1.bf16.msra.mxu0 0
  %184 = vmatprep.subr.bf16.mxu0 0
  %185 = vmatpush1.bf16.msra.mxu0 0
  %186 = vmatprep.subr.bf16.mxu0 0
  %187 = vmatpush1.bf16.msra.mxu0 0
  %188 = vmatprep.subr.bf16.mxu0 0
  %189 = vmatpush1.bf16.msra.mxu0 0
  %190 = vmatprep.subr.bf16.mxu0 0
  %191 = vmatpush1.bf16.msra.mxu0 0
  %192 = vmatprep.subr.bf16.mxu0 0
  %193 = vmatpush1.bf16.msra.mxu0 0
  %194 = vmatprep.subr.bf16.mxu0 0
  %195 = vmatpush1.bf16.msra.mxu0 0
  %196 = vmatprep.subr.bf16.mxu0 0
  %197 = vmatpush1.bf16.msra.mxu0 0
  %198 = vmatprep.subr.bf16.mxu0 0
  %199 = vmatpush1.bf16.msra.mxu0 0
  %200 = vmatprep.subr.bf16.mxu0 0
  %201 = vmatpush1.bf16.msra.mxu0 0
  %202 = vmatprep.subr.bf16.mxu0 0
  %203 = vmatpush1.bf16.msra.mxu0 0
  %204 = vmatprep.subr.bf16.mxu0 0
  %205 = vmatpush1.bf16.msra.mxu0 0
  %206 = vmatprep.subr.bf16.mxu0 0
  %207 = vmatpush1.bf16.msra.mxu0 0
  %208 = vmatprep.subr.bf16.mxu0 0
  %209 = vmatpush1.bf16.msra.mxu0 0
  %210 = vmatprep.mubr.bf16.mxu0 0
  %211 = vmatmul.mubr.bf16.gmra.mrb[0].mxu0 %v120
  %v212 = vpop.f32.mrb[0].mxu0
  %v213 = vadd.f32 %v106, %v212
  %v214 = vpop.f32.mrb[0].mxu0
  %v215 = vadd.f32 %v106, %v214
  %v216 = vpop.f32.mrb[0].mxu0
  %v217 = vadd.f32 %v111, %v216
  %v218 = vpop.f32.mrb[0].mxu0
  %v219 = vadd.f32 %v111, %v218
  %220 = vdwg.mxu0
  %v221 = vadd.f32 %v170, %v53
  %v222 = vadd.f32 %v172, %v54
  %v223 = vadd.f32 %v213, %v66
  %v224 = vadd.f32 %v215, %v67
  %v225 = vxor.u32 %v174, 2147483648
  %v226 = vxor.u32 %v176, 2147483648
  %v227 = vxor.u32 %v217, 2147483648
  %v228 = vxor.u32 %v219, 2147483648
  %v229 = vmul.f32 %v225, 1.442695
  %v230 = vpow.pop %v229
  %v231 = vmul.f32 %v226, 1.442695
  %v232 = vpow.pop %v231
  %v233 = vmul.f32 %v227, 1.442695
  %v234 = vpow.pop %v233
  %v235 = vmul.f32 %v228, 1.442695
  %v236 = vpow.pop %v235
  %v237 = vadd.f32 %v230, 1.0
  %v238 = vadd.f32 %v232, 1.0
  %v239 = vadd.f32 %v234, 1.0
  %v240 = vadd.f32 %v236, 1.0
  %v241 = vrcp.pop %v237
  %v242 = vmul.f32 1.0, %v241
  %v243 = vrcp.pop %v238
  %v244 = vmul.f32 1.0, %v243
  %v245 = vrcp.pop %v239
  %v246 = vmul.f32 1.0, %v245
  %v247 = vrcp.pop %v240
  %v248 = vmul.f32 1.0, %v247
  %v249 = vmul.f32 %v221, %v242
  %v250 = vmul.f32 %v222, %v244
  %v251 = vmul.f32 %v223, %v246
  %v252 = vmul.f32 %v224, %v248
  %253 = vst [vmem:[#allocation2] sm:$0xff] 0.0
  %254 = vst [vmem:[#allocation2 + $0x8] sm:$0xff] 0.0
  %255 = vst [vmem:[#allocation2 + $0x10] sm:$0xff] 0.0
  %256 = vst [vmem:[#allocation2 + $0x18] sm:$0xff] 0.0
  %257 = vst [vmem:[#allocation2 + $0x20] sm:$0xff] 0.0
  %258 = vst [vmem:[#allocation2 + $0x28] sm:$0xff] 0.0
  %259 = vst [vmem:[#allocation2 + $0x8] sm:$0xff] %v249
  %260 = vst [vmem:[#allocation2 + $0x10] sm:$0xff] %v250
  %261 = vst [vmem:[#allocation2 + $0x18] sm:$0xff] %v251
  %262 = vst [vmem:[#allocation2 + $0x20] sm:$0xff] %v252
  %s263 = scalar_lea.vmem %s6, 28
  %v264 = vld [vmem:[%s263] sm:$0xf]
  %v266 = vlaneseq
  %v267 = vshrl.u32 %v266, 7
  %v268 = vsub.s32 0, %v267
  %v269 = vrot.slane %v264, %v268
  %v270 = vlaneseq
  %v271 = vshrl.u32 %v270, 7
  %v272 = vsub.s32 1, %v271
  %v273 = vrot.slane %v264, %v272
  %v274 = vlaneseq
  %v275 = vshrl.u32 %v274, 7
  %v276 = vsub.s32 2, %v275
  %v277 = vrot.slane %v264, %v276
  %v278 = vlaneseq
  %v279 = vshrl.u32 %v278, 7
  %v280 = vsub.s32 3, %v279
  %v281 = vrot.slane %v264, %v280
  %v286 = vmul.f32 %v249, %v269
  %v287 = vmul.f32 %v250, %v273
  %v288 = vmul.f32 %v251, %v277
  %v289 = vmul.f32 %v252, %v281
  %v290 = vld [vmem:[%s7] sm:$0xf]
  %v292 = vlaneseq
  %v293 = vshrl.u32 %v292, 7
  %v294 = vsub.s32 0, %v293
  %v295 = vrot.slane %v290, %v294
  %v296 = vlaneseq
  %v297 = vshrl.u32 %v296, 7
  %v298 = vsub.s32 1, %v297
  %v299 = vrot.slane %v290, %v298
  %v300 = vlaneseq
  %v301 = vshrl.u32 %v300, 7
  %v302 = vsub.s32 2, %v301
  %v303 = vrot.slane %v290, %v302
  %v304 = vlaneseq
  %v305 = vshrl.u32 %v304, 7
  %v306 = vsub.s32 3, %v305
  %v307 = vrot.slane %v290, %v306
  %v312 = vadd.f32 %v286, %v295
  %v313 = vadd.f32 %v287, %v299
  %v314 = vadd.f32 %v288, %v303
  %v315 = vadd.f32 %v289, %v307
  %v316 = vld [vmem:[#allocation2] sm:$0xff]
  %v317 = vld [vmem:[#allocation2 + $0x8] sm:$0xff]
  %v318 = vld [vmem:[#allocation2 + $0x10] sm:$0xff]
  %v319 = vld [vmem:[#allocation2 + $0x18] sm:$0xff]
  %v320 = vld [vmem:[#allocation2 + $0x20] sm:$0xff]
  %v321 = vld [vmem:[%s6] sm:$0xf]
  %v323 = vlaneseq
  %v324 = vshrl.u32 %v323, 7
  %v325 = vsub.s32 0, %v324
  %v326 = vrot.slane %v321, %v325
  %v327 = vlaneseq
  %v328 = vshrl.u32 %v327, 7
  %v329 = vsub.s32 1, %v328
  %v330 = vrot.slane %v321, %v329
  %v331 = vlaneseq
  %v332 = vshrl.u32 %v331, 7
  %v333 = vsub.s32 2, %v332
  %v334 = vrot.slane %v321, %v333
  %v335 = vlaneseq
  %v336 = vshrl.u32 %v335, 7
  %v337 = vsub.s32 3, %v336
  %v338 = vrot.slane %v321, %v337
  %339 = vrot.lane.b32.xlu0 %v326, 121
  %v340 = vpop.permute.xlu0 %339
  %341 = vrot.lane.b32.xlu0 %v330, 121
  %v342 = vpop.permute.xlu0 %341
  %343 = vrot.lane.b32.xlu0 %v334, 121
  %v344 = vpop.permute.xlu0 %343
  %345 = vrot.lane.b32.xlu0 %v338, 121
  %v346 = vpop.permute.xlu0 %345
  %vm347 = vcmask 990208
  %v348 = vsel %vm347, %v340, %v342
  %v349 = vsel %vm347, %v342, %v344
  %v350 = vsel %vm347, %v344, %v346
  %v356 = vmul.f32 %v316, %v340
  %v357 = vmul.f32 %v317, %v348
  %v358 = vmul.f32 %v318, %v349
  %v359 = vmul.f32 %v319, %v350
  %v360 = vmul.f32 %v320, %v346
  %366 = vrot.lane.b32.xlu0 %v356, 7
  %v367 = vpop.permute.xlu0 %366
  %368 = vrot.lane.b32.xlu0 %v357, 7
  %v369 = vpop.permute.xlu0 %368
  %370 = vrot.lane.b32.xlu0 %v358, 7
  %v371 = vpop.permute.xlu0 %370
  %372 = vrot.lane.b32.xlu0 %v359, 7
  %v373 = vpop.permute.xlu0 %372
  %374 = vrot.lane.b32.xlu0 %v360, 7
  %v375 = vpop.permute.xlu0 %374
  %vm376 = vcmask 56320
  %v377 = vsel %vm376, %v367, %v369
  %v378 = vsel %vm376, %v369, %v371
  %v379 = vsel %vm376, %v371, %v373
  %v380 = vsel %vm376, %v373, %v375
  %v385 = vadd.f32 %v312, %v377
  %v386 = vadd.f32 %v313, %v378
  %v387 = vadd.f32 %v314, %v379
  %v388 = vadd.f32 %v315, %v380
  %s389 = scalar_lea.vmem %s6, 4
  %v390 = vld [vmem:[%s389] sm:$0xf]
  %v392 = vlaneseq
  %v393 = vshrl.u32 %v392, 7
  %v394 = vsub.s32 0, %v393
  %v395 = vrot.slane %v390, %v394
  %v396 = vlaneseq
  %v397 = vshrl.u32 %v396, 7
  %v398 = vsub.s32 1, %v397
  %v399 = vrot.slane %v390, %v398
  %v400 = vlaneseq
  %v401 = vshrl.u32 %v400, 7
  %v402 = vsub.s32 2, %v401
  %v403 = vrot.slane %v390, %v402
  %v404 = vlaneseq
  %v405 = vshrl.u32 %v404, 7
  %v406 = vsub.s32 3, %v405
  %v407 = vrot.slane %v390, %v406
  %408 = vrot.lane.b32.xlu0 %v395, 122
  %v409 = vpop.permute.xlu0 %408
  %410 = vrot.lane.b32.xlu0 %v399, 122
  %v411 = vpop.permute.xlu0 %410
  %412 = vrot.lane.b32.xlu0 %v403, 122
  %v413 = vpop.permute.xlu0 %412
  %414 = vrot.lane.b32.xlu0 %v407, 122
  %v415 = vpop.permute.xlu0 %414
  %vm416 = vcmask 998400
  %v417 = vsel %vm416, %v409, %v411
  %v418 = vsel %vm416, %v411, %v413
  %v419 = vsel %vm416, %v413, %v415
  %v425 = vmul.f32 %v316, %v409
  %v426 = vmul.f32 %v317, %v417
  %v427 = vmul.f32 %v318, %v418
  %v428 = vmul.f32 %v319, %v419
  %v429 = vmul.f32 %v320, %v415
  %435 = vrot.lane.b32.xlu0 %v425, 6
  %v436 = vpop.permute.xlu0 %435
  %437 = vrot.lane.b32.xlu0 %v426, 6
  %v438 = vpop.permute.xlu0 %437
  %439 = vrot.lane.b32.xlu0 %v427, 6
  %v440 = vpop.permute.xlu0 %439
  %441 = vrot.lane.b32.xlu0 %v428, 6
  %v442 = vpop.permute.xlu0 %441
  %443 = vrot.lane.b32.xlu0 %v429, 6
  %v444 = vpop.permute.xlu0 %443
  %vm445 = vcmask 48128
  %v446 = vsel %vm445, %v436, %v438
  %v447 = vsel %vm445, %v438, %v440
  %v448 = vsel %vm445, %v440, %v442
  %v449 = vsel %vm445, %v442, %v444
  %v454 = vadd.f32 %v385, %v446
  %v455 = vadd.f32 %v386, %v447
  %v456 = vadd.f32 %v387, %v448
  %v457 = vadd.f32 %v388, %v449
  %s458 = scalar_lea.vmem %s6, 8
  %v459 = vld [vmem:[%s458] sm:$0xf]
  %v461 = vlaneseq
  %v462 = vshrl.u32 %v461, 7
  %v463 = vsub.s32 0, %v462
  %v464 = vrot.slane %v459, %v463
  %v465 = vlaneseq
  %v466 = vshrl.u32 %v465, 7
  %v467 = vsub.s32 1, %v466
  %v468 = vrot.slane %v459, %v467
  %v469 = vlaneseq
  %v470 = vshrl.u32 %v469, 7
  %v471 = vsub.s32 2, %v470
  %v472 = vrot.slane %v459, %v471
  %v473 = vlaneseq
  %v474 = vshrl.u32 %v473, 7
  %v475 = vsub.s32 3, %v474
  %v476 = vrot.slane %v459, %v475
  %477 = vrot.lane.b32.xlu0 %v464, 123
  %v478 = vpop.permute.xlu0 %477
  %479 = vrot.lane.b32.xlu0 %v468, 123
  %v480 = vpop.permute.xlu0 %479
  %481 = vrot.lane.b32.xlu0 %v472, 123
  %v482 = vpop.permute.xlu0 %481
  %483 = vrot.lane.b32.xlu0 %v476, 123
  %v484 = vpop.permute.xlu0 %483
  %vm485 = vcmask 1006592
  %v486 = vsel %vm485, %v478, %v480
  %v487 = vsel %vm485, %v480, %v482
  %v488 = vsel %vm485, %v482, %v484
  %v494 = vmul.f32 %v316, %v478
  %v495 = vmul.f32 %v317, %v486
  %v496 = vmul.f32 %v318, %v487
  %v497 = vmul.f32 %v319, %v488
  %v498 = vmul.f32 %v320, %v484
  %504 = vrot.lane.b32.xlu0 %v494, 5
  %v505 = vpop.permute.xlu0 %504
  %506 = vrot.lane.b32.xlu0 %v495, 5
  %v507 = vpop.permute.xlu0 %506
  %508 = vrot.lane.b32.xlu0 %v496, 5
  %v509 = vpop.permute.xlu0 %508
  %510 = vrot.lane.b32.xlu0 %v497, 5
  %v511 = vpop.permute.xlu0 %510
  %512 = vrot.lane.b32.xlu0 %v498, 5
  %v513 = vpop.permute.xlu0 %512
  %vm514 = vcmask 39936
  %v515 = vsel %vm514, %v505, %v507
  %v516 = vsel %vm514, %v507, %v509
  %v517 = vsel %vm514, %v509, %v511
  %v518 = vsel %vm514, %v511, %v513
  %v523 = vadd.f32 %v454, %v515
  %v524 = vadd.f32 %v455, %v516
  %v525 = vadd.f32 %v456, %v517
  %v526 = vadd.f32 %v457, %v518
  %s527 = scalar_lea.vmem %s6, 12
  %v528 = vld [vmem:[%s527] sm:$0xf]
  %v530 = vlaneseq
  %v531 = vshrl.u32 %v530, 7
  %v532 = vsub.s32 0, %v531
  %v533 = vrot.slane %v528, %v532
  %v534 = vlaneseq
  %v535 = vshrl.u32 %v534, 7
  %v536 = vsub.s32 1, %v535
  %v537 = vrot.slane %v528, %v536
  %v538 = vlaneseq
  %v539 = vshrl.u32 %v538, 7
  %v540 = vsub.s32 2, %v539
  %v541 = vrot.slane %v528, %v540
  %v542 = vlaneseq
  %v543 = vshrl.u32 %v542, 7
  %v544 = vsub.s32 3, %v543
  %v545 = vrot.slane %v528, %v544
  %546 = vrot.lane.b32.xlu0 %v533, 124
  %v547 = vpop.permute.xlu0 %546
  %548 = vrot.lane.b32.xlu0 %v537, 124
  %v549 = vpop.permute.xlu0 %548
  %550 = vrot.lane.b32.xlu0 %v541, 124
  %v551 = vpop.permute.xlu0 %550
  %552 = vrot.lane.b32.xlu0 %v545, 124
  %v553 = vpop.permute.xlu0 %552
  %vm554 = vcmask 1014784
  %v555 = vsel %vm554, %v547, %v549
  %v556 = vsel %vm554, %v549, %v551
  %v557 = vsel %vm554, %v551, %v553
  %v563 = vmul.f32 %v316, %v547
  %v564 = vmul.f32 %v317, %v555
  %v565 = vmul.f32 %v318, %v556
  %v566 = vmul.f32 %v319, %v557
  %v567 = vmul.f32 %v320, %v553
  %573 = vrot.lane.b32.xlu0 %v563, 4
  %v574 = vpop.permute.xlu0 %573
  %575 = vrot.lane.b32.xlu0 %v564, 4
  %v576 = vpop.permute.xlu0 %575
  %577 = vrot.lane.b32.xlu0 %v565, 4
  %v578 = vpop.permute.xlu0 %577
  %579 = vrot.lane.b32.xlu0 %v566, 4
  %v580 = vpop.permute.xlu0 %579
  %581 = vrot.lane.b32.xlu0 %v567, 4
  %v582 = vpop.permute.xlu0 %581
  %vm583 = vcmask 31744
  %v584 = vsel %vm583, %v574, %v576
  %v585 = vsel %vm583, %v576, %v578
  %v586 = vsel %vm583, %v578, %v580
  %v587 = vsel %vm583, %v580, %v582
  %v592 = vadd.f32 %v523, %v584
  %v593 = vadd.f32 %v524, %v585
  %v594 = vadd.f32 %v525, %v586
  %v595 = vadd.f32 %v526, %v587
  %s596 = scalar_lea.vmem %s6, 16
  %v597 = vld [vmem:[%s596] sm:$0xf]
  %v599 = vlaneseq
  %v600 = vshrl.u32 %v599, 7
  %v601 = vsub.s32 0, %v600
  %v602 = vrot.slane %v597, %v601
  %v603 = vlaneseq
  %v604 = vshrl.u32 %v603, 7
  %v605 = vsub.s32 1, %v604
  %v606 = vrot.slane %v597, %v605
  %v607 = vlaneseq
  %v608 = vshrl.u32 %v607, 7
  %v609 = vsub.s32 2, %v608
  %v610 = vrot.slane %v597, %v609
  %v611 = vlaneseq
  %v612 = vshrl.u32 %v611, 7
  %v613 = vsub.s32 3, %v612
  %v614 = vrot.slane %v597, %v613
  %615 = vrot.lane.b32.xlu0 %v602, 125
  %v616 = vpop.permute.xlu0 %615
  %617 = vrot.lane.b32.xlu0 %v606, 125
  %v618 = vpop.permute.xlu0 %617
  %619 = vrot.lane.b32.xlu0 %v610, 125
  %v620 = vpop.permute.xlu0 %619
  %621 = vrot.lane.b32.xlu0 %v614, 125
  %v622 = vpop.permute.xlu0 %621
  %vm623 = vcmask 1022976
  %v624 = vsel %vm623, %v616, %v618
  %v625 = vsel %vm623, %v618, %v620
  %v626 = vsel %vm623, %v620, %v622
  %v632 = vmul.f32 %v316, %v616
  %v633 = vmul.f32 %v317, %v624
  %v634 = vmul.f32 %v318, %v625
  %v635 = vmul.f32 %v319, %v626
  %v636 = vmul.f32 %v320, %v622
  %642 = vrot.lane.b32.xlu0 %v632, 3
  %v643 = vpop.permute.xlu0 %642
  %644 = vrot.lane.b32.xlu0 %v633, 3
  %v645 = vpop.permute.xlu0 %644
  %646 = vrot.lane.b32.xlu0 %v634, 3
  %v647 = vpop.permute.xlu0 %646
  %648 = vrot.lane.b32.xlu0 %v635, 3
  %v649 = vpop.permute.xlu0 %648
  %650 = vrot.lane.b32.xlu0 %v636, 3
  %v651 = vpop.permute.xlu0 %650
  %vm652 = vcmask 23552
  %v653 = vsel %vm652, %v643, %v645
  %v654 = vsel %vm652, %v645, %v647
  %v655 = vsel %vm652, %v647, %v649
  %v656 = vsel %vm652, %v649, %v651
  %v661 = vadd.f32 %v592, %v653
  %v662 = vadd.f32 %v593, %v654
  %v663 = vadd.f32 %v594, %v655
  %v664 = vadd.f32 %v595, %v656
  %s665 = scalar_lea.vmem %s6, 20
  %v666 = vld [vmem:[%s665] sm:$0xf]
  %v668 = vlaneseq
  %v669 = vshrl.u32 %v668, 7
  %v670 = vsub.s32 0, %v669
  %v671 = vrot.slane %v666, %v670
  %v672 = vlaneseq
  %v673 = vshrl.u32 %v672, 7
  %v674 = vsub.s32 1, %v673
  %v675 = vrot.slane %v666, %v674
  %v676 = vlaneseq
  %v677 = vshrl.u32 %v676, 7
  %v678 = vsub.s32 2, %v677
  %v679 = vrot.slane %v666, %v678
  %v680 = vlaneseq
  %v681 = vshrl.u32 %v680, 7
  %v682 = vsub.s32 3, %v681
  %v683 = vrot.slane %v666, %v682
  %684 = vrot.lane.b32.xlu0 %v671, 126
  %v685 = vpop.permute.xlu0 %684
  %686 = vrot.lane.b32.xlu0 %v675, 126
  %v687 = vpop.permute.xlu0 %686
  %688 = vrot.lane.b32.xlu0 %v679, 126
  %v689 = vpop.permute.xlu0 %688
  %690 = vrot.lane.b32.xlu0 %v683, 126
  %v691 = vpop.permute.xlu0 %690
  %vm692 = vcmask 1031168
  %v693 = vsel %vm692, %v685, %v687
  %v694 = vsel %vm692, %v687, %v689
  %v695 = vsel %vm692, %v689, %v691
  %v701 = vmul.f32 %v316, %v685
  %v702 = vmul.f32 %v317, %v693
  %v703 = vmul.f32 %v318, %v694
  %v704 = vmul.f32 %v319, %v695
  %v705 = vmul.f32 %v320, %v691
  %711 = vrot.lane.b32.xlu0 %v701, 2
  %v712 = vpop.permute.xlu0 %711
  %713 = vrot.lane.b32.xlu0 %v702, 2
  %v714 = vpop.permute.xlu0 %713
  %715 = vrot.lane.b32.xlu0 %v703, 2
  %v716 = vpop.permute.xlu0 %715
  %717 = vrot.lane.b32.xlu0 %v704, 2
  %v718 = vpop.permute.xlu0 %717
  %719 = vrot.lane.b32.xlu0 %v705, 2
  %v720 = vpop.permute.xlu0 %719
  %vm721 = vcmask 15360
  %v722 = vsel %vm721, %v712, %v714
  %v723 = vsel %vm721, %v714, %v716
  %v724 = vsel %vm721, %v716, %v718
  %v725 = vsel %vm721, %v718, %v720
  %v730 = vadd.f32 %v661, %v722
  %v731 = vadd.f32 %v662, %v723
  %v732 = vadd.f32 %v663, %v724
  %v733 = vadd.f32 %v664, %v725
  %s734 = scalar_lea.vmem %s6, 24
  %v735 = vld [vmem:[%s734] sm:$0xf]
  %v737 = vlaneseq
  %v738 = vshrl.u32 %v737, 7
  %v739 = vsub.s32 0, %v738
  %v740 = vrot.slane %v735, %v739
  %v741 = vlaneseq
  %v742 = vshrl.u32 %v741, 7
  %v743 = vsub.s32 1, %v742
  %v744 = vrot.slane %v735, %v743
  %v745 = vlaneseq
  %v746 = vshrl.u32 %v745, 7
  %v747 = vsub.s32 2, %v746
  %v748 = vrot.slane %v735, %v747
  %v749 = vlaneseq
  %v750 = vshrl.u32 %v749, 7
  %v751 = vsub.s32 3, %v750
  %v752 = vrot.slane %v735, %v751
  %753 = vrot.lane.b32.xlu0 %v740, 127
  %v754 = vpop.permute.xlu0 %753
  %755 = vrot.lane.b32.xlu0 %v744, 127
  %v756 = vpop.permute.xlu0 %755
  %757 = vrot.lane.b32.xlu0 %v748, 127
  %v758 = vpop.permute.xlu0 %757
  %759 = vrot.lane.b32.xlu0 %v752, 127
  %v760 = vpop.permute.xlu0 %759
  %vm761 = vcmask 1039360
  %v762 = vsel %vm761, %v754, %v756
  %v763 = vsel %vm761, %v756, %v758
  %v764 = vsel %vm761, %v758, %v760
  %v770 = vmul.f32 %v316, %v754
  %v771 = vmul.f32 %v317, %v762
  %v772 = vmul.f32 %v318, %v763
  %v773 = vmul.f32 %v319, %v764
  %v774 = vmul.f32 %v320, %v760
  %780 = vrot.lane.b32.xlu0 %v770, 1
  %v781 = vpop.permute.xlu0 %780
  %782 = vrot.lane.b32.xlu0 %v771, 1
  %v783 = vpop.permute.xlu0 %782
  %784 = vrot.lane.b32.xlu0 %v772, 1
  %v785 = vpop.permute.xlu0 %784
  %786 = vrot.lane.b32.xlu0 %v773, 1
  %v787 = vpop.permute.xlu0 %786
  %788 = vrot.lane.b32.xlu0 %v774, 1
  %v789 = vpop.permute.xlu0 %788
  %vm790 = vcmask 7168
  %v791 = vsel %vm790, %v781, %v783
  %v792 = vsel %vm790, %v783, %v785
  %v793 = vsel %vm790, %v785, %v787
  %v794 = vsel %vm790, %v787, %v789
  %v799 = vadd.f32 %v730, %v791
  %v800 = vadd.f32 %v731, %v792
  %v801 = vadd.f32 %v732, %v793
  %v802 = vadd.f32 %v733, %v794
  %v803 = vld [vmem:[#allocation2 + $0x8] sm:$0xff]
  %v804 = vld [vmem:[#allocation2 + $0x10] sm:$0xff]
  %v805 = vld [vmem:[#allocation2 + $0x18] sm:$0xff]
  %v806 = vld [vmem:[#allocation2 + $0x20] sm:$0xff]
  %v807 = vld [vmem:[#allocation2 + $0x28] sm:$0xff]
  %s808 = scalar_lea.vmem %s6, 32
  %v809 = vld [vmem:[%s808] sm:$0xf]
  %v811 = vlaneseq
  %v812 = vshrl.u32 %v811, 7
  %v813 = vsub.s32 0, %v812
  %v814 = vrot.slane %v809, %v813
  %v815 = vlaneseq
  %v816 = vshrl.u32 %v815, 7
  %v817 = vsub.s32 1, %v816
  %v818 = vrot.slane %v809, %v817
  %v819 = vlaneseq
  %v820 = vshrl.u32 %v819, 7
  %v821 = vsub.s32 2, %v820
  %v822 = vrot.slane %v809, %v821
  %v823 = vlaneseq
  %v824 = vshrl.u32 %v823, 7
  %v825 = vsub.s32 3, %v824
  %v826 = vrot.slane %v809, %v825
  %827 = vrot.lane.b32.xlu0 %v814, 1
  %v828 = vpop.permute.xlu0 %827
  %829 = vrot.lane.b32.xlu0 %v818, 1
  %v830 = vpop.permute.xlu0 %829
  %831 = vrot.lane.b32.xlu0 %v822, 1
  %v832 = vpop.permute.xlu0 %831
  %833 = vrot.lane.b32.xlu0 %v826, 1
  %v834 = vpop.permute.xlu0 %833
  %v835 = vsel %vm790, %v828, %v830
  %v836 = vsel %vm790, %v830, %v832
  %v837 = vsel %vm790, %v832, %v834
  %v843 = vmul.f32 %v803, %v828
  %v844 = vmul.f32 %v804, %v835
  %v845 = vmul.f32 %v805, %v836
  %v846 = vmul.f32 %v806, %v837
  %v847 = vmul.f32 %v807, %v834
  %853 = vrot.lane.b32.xlu0 %v843, 127
  %v854 = vpop.permute.xlu0 %853
  %855 = vrot.lane.b32.xlu0 %v844, 127
  %v856 = vpop.permute.xlu0 %855
  %857 = vrot.lane.b32.xlu0 %v845, 127
  %v858 = vpop.permute.xlu0 %857
  %859 = vrot.lane.b32.xlu0 %v846, 127
  %v860 = vpop.permute.xlu0 %859
  %861 = vrot.lane.b32.xlu0 %v847, 127
  %v862 = vpop.permute.xlu0 %861
  %v863 = vsel %vm761, %v854, %v856
  %v864 = vsel %vm761, %v856, %v858
  %v865 = vsel %vm761, %v858, %v860
  %v866 = vsel %vm761, %v860, %v862
  %v871 = vadd.f32 %v799, %v863
  %v872 = vadd.f32 %v800, %v864
  %v873 = vadd.f32 %v801, %v865
  %v874 = vadd.f32 %v802, %v866
  %s875 = scalar_lea.vmem %s6, 36
  %v876 = vld [vmem:[%s875] sm:$0xf]
  %v878 = vlaneseq
  %v879 = vshrl.u32 %v878, 7
  %v880 = vsub.s32 0, %v879
  %v881 = vrot.slane %v876, %v880
  %v882 = vlaneseq
  %v883 = vshrl.u32 %v882, 7
  %v884 = vsub.s32 1, %v883
  %v885 = vrot.slane %v876, %v884
  %v886 = vlaneseq
  %v887 = vshrl.u32 %v886, 7
  %v888 = vsub.s32 2, %v887
  %v889 = vrot.slane %v876, %v888
  %v890 = vlaneseq
  %v891 = vshrl.u32 %v890, 7
  %v892 = vsub.s32 3, %v891
  %v893 = vrot.slane %v876, %v892
  %894 = vrot.lane.b32.xlu0 %v881, 2
  %v895 = vpop.permute.xlu0 %894
  %896 = vrot.lane.b32.xlu0 %v885, 2
  %v897 = vpop.permute.xlu0 %896
  %898 = vrot.lane.b32.xlu0 %v889, 2
  %v899 = vpop.permute.xlu0 %898
  %900 = vrot.lane.b32.xlu0 %v893, 2
  %v901 = vpop.permute.xlu0 %900
  %v902 = vsel %vm721, %v895, %v897
  %v903 = vsel %vm721, %v897, %v899
  %v904 = vsel %vm721, %v899, %v901
  %v910 = vmul.f32 %v803, %v895
  %v911 = vmul.f32 %v804, %v902
  %v912 = vmul.f32 %v805, %v903
  %v913 = vmul.f32 %v806, %v904
  %v914 = vmul.f32 %v807, %v901
  %920 = vrot.lane.b32.xlu0 %v910, 126
  %v921 = vpop.permute.xlu0 %920
  %922 = vrot.lane.b32.xlu0 %v911, 126
  %v923 = vpop.permute.xlu0 %922
  %924 = vrot.lane.b32.xlu0 %v912, 126
  %v925 = vpop.permute.xlu0 %924
  %926 = vrot.lane.b32.xlu0 %v913, 126
  %v927 = vpop.permute.xlu0 %926
  %928 = vrot.lane.b32.xlu0 %v914, 126
  %v929 = vpop.permute.xlu0 %928
  %v930 = vsel %vm692, %v921, %v923
  %v931 = vsel %vm692, %v923, %v925
  %v932 = vsel %vm692, %v925, %v927
  %v933 = vsel %vm692, %v927, %v929
  %v938 = vadd.f32 %v871, %v930
  %v939 = vadd.f32 %v872, %v931
  %v940 = vadd.f32 %v873, %v932
  %v941 = vadd.f32 %v874, %v933
  %s942 = scalar_lea.vmem %s6, 40
  %v943 = vld [vmem:[%s942] sm:$0xf]
  %v945 = vlaneseq
  %v946 = vshrl.u32 %v945, 7
  %v947 = vsub.s32 0, %v946
  %v948 = vrot.slane %v943, %v947
  %v949 = vlaneseq
  %v950 = vshrl.u32 %v949, 7
  %v951 = vsub.s32 1, %v950
  %v952 = vrot.slane %v943, %v951
  %v953 = vlaneseq
  %v954 = vshrl.u32 %v953, 7
  %v955 = vsub.s32 2, %v954
  %v956 = vrot.slane %v943, %v955
  %v957 = vlaneseq
  %v958 = vshrl.u32 %v957, 7
  %v959 = vsub.s32 3, %v958
  %v960 = vrot.slane %v943, %v959
  %961 = vrot.lane.b32.xlu0 %v948, 3
  %v962 = vpop.permute.xlu0 %961
  %963 = vrot.lane.b32.xlu0 %v952, 3
  %v964 = vpop.permute.xlu0 %963
  %965 = vrot.lane.b32.xlu0 %v956, 3
  %v966 = vpop.permute.xlu0 %965
  %967 = vrot.lane.b32.xlu0 %v960, 3
  %v968 = vpop.permute.xlu0 %967
  %v969 = vsel %vm652, %v962, %v964
  %v970 = vsel %vm652, %v964, %v966
  %v971 = vsel %vm652, %v966, %v968
  %v977 = vmul.f32 %v803, %v962
  %v978 = vmul.f32 %v804, %v969
  %v979 = vmul.f32 %v805, %v970
  %v980 = vmul.f32 %v806, %v971
  %v981 = vmul.f32 %v807, %v968
  %987 = vrot.lane.b32.xlu0 %v977, 125
  %v988 = vpop.permute.xlu0 %987
  %989 = vrot.lane.b32.xlu0 %v978, 125
  %v990 = vpop.permute.xlu0 %989
  %991 = vrot.lane.b32.xlu0 %v979, 125
  %v992 = vpop.permute.xlu0 %991
  %993 = vrot.lane.b32.xlu0 %v980, 125
  %v994 = vpop.permute.xlu0 %993
  %995 = vrot.lane.b32.xlu0 %v981, 125
  %v996 = vpop.permute.xlu0 %995
  %v997 = vsel %vm623, %v988, %v990
  %v998 = vsel %vm623, %v990, %v992
  %v999 = vsel %vm623, %v992, %v994
  %v1000 = vsel %vm623, %v994, %v996
  %v1005 = vadd.f32 %v938, %v997
  %v1006 = vadd.f32 %v939, %v998
  %v1007 = vadd.f32 %v940, %v999
  %v1008 = vadd.f32 %v941, %v1000
  %s1009 = scalar_lea.vmem %s6, 44
  %v1010 = vld [vmem:[%s1009] sm:$0xf]
  %v1012 = vlaneseq
  %v1013 = vshrl.u32 %v1012, 7
  %v1014 = vsub.s32 0, %v1013
  %v1015 = vrot.slane %v1010, %v1014
  %v1016 = vlaneseq
  %v1017 = vshrl.u32 %v1016, 7
  %v1018 = vsub.s32 1, %v1017
  %v1019 = vrot.slane %v1010, %v1018
  %v1020 = vlaneseq
  %v1021 = vshrl.u32 %v1020, 7
  %v1022 = vsub.s32 2, %v1021
  %v1023 = vrot.slane %v1010, %v1022
  %v1024 = vlaneseq
  %v1025 = vshrl.u32 %v1024, 7
  %v1026 = vsub.s32 3, %v1025
  %v1027 = vrot.slane %v1010, %v1026
  %1028 = vrot.lane.b32.xlu0 %v1015, 4
  %v1029 = vpop.permute.xlu0 %1028
  %1030 = vrot.lane.b32.xlu0 %v1019, 4
  %v1031 = vpop.permute.xlu0 %1030
  %1032 = vrot.lane.b32.xlu0 %v1023, 4
  %v1033 = vpop.permute.xlu0 %1032
  %1034 = vrot.lane.b32.xlu0 %v1027, 4
  %v1035 = vpop.permute.xlu0 %1034
  %v1036 = vsel %vm583, %v1029, %v1031
  %v1037 = vsel %vm583, %v1031, %v1033
  %v1038 = vsel %vm583, %v1033, %v1035
  %v1044 = vmul.f32 %v803, %v1029
  %v1045 = vmul.f32 %v804, %v1036
  %v1046 = vmul.f32 %v805, %v1037
  %v1047 = vmul.f32 %v806, %v1038
  %v1048 = vmul.f32 %v807, %v1035
  %1054 = vrot.lane.b32.xlu0 %v1044, 124
  %v1055 = vpop.permute.xlu0 %1054
  %1056 = vrot.lane.b32.xlu0 %v1045, 124
  %v1057 = vpop.permute.xlu0 %1056
  %1058 = vrot.lane.b32.xlu0 %v1046, 124
  %v1059 = vpop.permute.xlu0 %1058
  %1060 = vrot.lane.b32.xlu0 %v1047, 124
  %v1061 = vpop.permute.xlu0 %1060
  %1062 = vrot.lane.b32.xlu0 %v1048, 124
  %v1063 = vpop.permute.xlu0 %1062
  %v1064 = vsel %vm554, %v1055, %v1057
  %v1065 = vsel %vm554, %v1057, %v1059
  %v1066 = vsel %vm554, %v1059, %v1061
  %v1067 = vsel %vm554, %v1061, %v1063
  %v1072 = vadd.f32 %v1005, %v1064
  %v1073 = vadd.f32 %v1006, %v1065
  %v1074 = vadd.f32 %v1007, %v1066
  %v1075 = vadd.f32 %v1008, %v1067
  %s1076 = scalar_lea.vmem %s6, 48
  %v1077 = vld [vmem:[%s1076] sm:$0xf]
  %v1079 = vlaneseq
  %v1080 = vshrl.u32 %v1079, 7
  %v1081 = vsub.s32 0, %v1080
  %v1082 = vrot.slane %v1077, %v1081
  %v1083 = vlaneseq
  %v1084 = vshrl.u32 %v1083, 7
  %v1085 = vsub.s32 1, %v1084
  %v1086 = vrot.slane %v1077, %v1085
  %v1087 = vlaneseq
  %v1088 = vshrl.u32 %v1087, 7
  %v1089 = vsub.s32 2, %v1088
  %v1090 = vrot.slane %v1077, %v1089
  %v1091 = vlaneseq
  %v1092 = vshrl.u32 %v1091, 7
  %v1093 = vsub.s32 3, %v1092
  %v1094 = vrot.slane %v1077, %v1093
  %1095 = vrot.lane.b32.xlu0 %v1082, 5
  %v1096 = vpop.permute.xlu0 %1095
  %1097 = vrot.lane.b32.xlu0 %v1086, 5
  %v1098 = vpop.permute.xlu0 %1097
  %1099 = vrot.lane.b32.xlu0 %v1090, 5
  %v1100 = vpop.permute.xlu0 %1099
  %1101 = vrot.lane.b32.xlu0 %v1094, 5
  %v1102 = vpop.permute.xlu0 %1101
  %v1103 = vsel %vm514, %v1096, %v1098
  %v1104 = vsel %vm514, %v1098, %v1100
  %v1105 = vsel %vm514, %v1100, %v1102
  %v1111 = vmul.f32 %v803, %v1096
  %v1112 = vmul.f32 %v804, %v1103
  %v1113 = vmul.f32 %v805, %v1104
  %v1114 = vmul.f32 %v806, %v1105
  %v1115 = vmul.f32 %v807, %v1102
  %1121 = vrot.lane.b32.xlu0 %v1111, 123
  %v1122 = vpop.permute.xlu0 %1121
  %1123 = vrot.lane.b32.xlu0 %v1112, 123
  %v1124 = vpop.permute.xlu0 %1123
  %1125 = vrot.lane.b32.xlu0 %v1113, 123
  %v1126 = vpop.permute.xlu0 %1125
  %1127 = vrot.lane.b32.xlu0 %v1114, 123
  %v1128 = vpop.permute.xlu0 %1127
  %1129 = vrot.lane.b32.xlu0 %v1115, 123
  %v1130 = vpop.permute.xlu0 %1129
  %v1131 = vsel %vm485, %v1122, %v1124
  %v1132 = vsel %vm485, %v1124, %v1126
  %v1133 = vsel %vm485, %v1126, %v1128
  %v1134 = vsel %vm485, %v1128, %v1130
  %v1139 = vadd.f32 %v1072, %v1131
  %v1140 = vadd.f32 %v1073, %v1132
  %v1141 = vadd.f32 %v1074, %v1133
  %v1142 = vadd.f32 %v1075, %v1134
  %s1143 = scalar_lea.vmem %s6, 52
  %v1144 = vld [vmem:[%s1143] sm:$0xf]
  %v1146 = vlaneseq
  %v1147 = vshrl.u32 %v1146, 7
  %v1148 = vsub.s32 0, %v1147
  %v1149 = vrot.slane %v1144, %v1148
  %v1150 = vlaneseq
  %v1151 = vshrl.u32 %v1150, 7
  %v1152 = vsub.s32 1, %v1151
  %v1153 = vrot.slane %v1144, %v1152
  %v1154 = vlaneseq
  %v1155 = vshrl.u32 %v1154, 7
  %v1156 = vsub.s32 2, %v1155
  %v1157 = vrot.slane %v1144, %v1156
  %v1158 = vlaneseq
  %v1159 = vshrl.u32 %v1158, 7
  %v1160 = vsub.s32 3, %v1159
  %v1161 = vrot.slane %v1144, %v1160
  %1162 = vrot.lane.b32.xlu0 %v1149, 6
  %v1163 = vpop.permute.xlu0 %1162
  %1164 = vrot.lane.b32.xlu0 %v1153, 6
  %v1165 = vpop.permute.xlu0 %1164
  %1166 = vrot.lane.b32.xlu0 %v1157, 6
  %v1167 = vpop.permute.xlu0 %1166
  %1168 = vrot.lane.b32.xlu0 %v1161, 6
  %v1169 = vpop.permute.xlu0 %1168
  %v1170 = vsel %vm445, %v1163, %v1165
  %v1171 = vsel %vm445, %v1165, %v1167
  %v1172 = vsel %vm445, %v1167, %v1169
  %v1178 = vmul.f32 %v803, %v1163
  %v1179 = vmul.f32 %v804, %v1170
  %v1180 = vmul.f32 %v805, %v1171
  %v1181 = vmul.f32 %v806, %v1172
  %v1182 = vmul.f32 %v807, %v1169
  %1188 = vrot.lane.b32.xlu0 %v1178, 122
  %v1189 = vpop.permute.xlu0 %1188
  %1190 = vrot.lane.b32.xlu0 %v1179, 122
  %v1191 = vpop.permute.xlu0 %1190
  %1192 = vrot.lane.b32.xlu0 %v1180, 122
  %v1193 = vpop.permute.xlu0 %1192
  %1194 = vrot.lane.b32.xlu0 %v1181, 122
  %v1195 = vpop.permute.xlu0 %1194
  %1196 = vrot.lane.b32.xlu0 %v1182, 122
  %v1197 = vpop.permute.xlu0 %1196
  %v1198 = vsel %vm416, %v1189, %v1191
  %v1199 = vsel %vm416, %v1191, %v1193
  %v1200 = vsel %vm416, %v1193, %v1195
  %v1201 = vsel %vm416, %v1195, %v1197
  %v1206 = vadd.f32 %v1139, %v1198
  %v1207 = vadd.f32 %v1140, %v1199
  %v1208 = vadd.f32 %v1141, %v1200
  %v1209 = vadd.f32 %v1142, %v1201
  %s1210 = scalar_lea.vmem %s6, 56
  %v1211 = vld [vmem:[%s1210] sm:$0xf]
  %v1213 = vlaneseq
  %v1214 = vshrl.u32 %v1213, 7
  %v1215 = vsub.s32 0, %v1214
  %v1216 = vrot.slane %v1211, %v1215
  %v1217 = vlaneseq
  %v1218 = vshrl.u32 %v1217, 7
  %v1219 = vsub.s32 1, %v1218
  %v1220 = vrot.slane %v1211, %v1219
  %v1221 = vlaneseq
  %v1222 = vshrl.u32 %v1221, 7
  %v1223 = vsub.s32 2, %v1222
  %v1224 = vrot.slane %v1211, %v1223
  %v1225 = vlaneseq
  %v1226 = vshrl.u32 %v1225, 7
  %v1227 = vsub.s32 3, %v1226
  %v1228 = vrot.slane %v1211, %v1227
  %1229 = vrot.lane.b32.xlu0 %v1216, 7
  %v1230 = vpop.permute.xlu0 %1229
  %1231 = vrot.lane.b32.xlu0 %v1220, 7
  %v1232 = vpop.permute.xlu0 %1231
  %1233 = vrot.lane.b32.xlu0 %v1224, 7
  %v1234 = vpop.permute.xlu0 %1233
  %1235 = vrot.lane.b32.xlu0 %v1228, 7
  %v1236 = vpop.permute.xlu0 %1235
  %v1237 = vsel %vm376, %v1230, %v1232
  %v1238 = vsel %vm376, %v1232, %v1234
  %v1239 = vsel %vm376, %v1234, %v1236
  %v1245 = vmul.f32 %v803, %v1230
  %v1246 = vmul.f32 %v804, %v1237
  %v1247 = vmul.f32 %v805, %v1238
  %v1248 = vmul.f32 %v806, %v1239
  %v1249 = vmul.f32 %v807, %v1236
  %1255 = vrot.lane.b32.xlu0 %v1245, 121
  %v1256 = vpop.permute.xlu0 %1255
  %1257 = vrot.lane.b32.xlu0 %v1246, 121
  %v1258 = vpop.permute.xlu0 %1257
  %1259 = vrot.lane.b32.xlu0 %v1247, 121
  %v1260 = vpop.permute.xlu0 %1259
  %1261 = vrot.lane.b32.xlu0 %v1248, 121
  %v1262 = vpop.permute.xlu0 %1261
  %1263 = vrot.lane.b32.xlu0 %v1249, 121
  %v1264 = vpop.permute.xlu0 %1263
  %v1265 = vsel %vm347, %v1256, %v1258
  %v1266 = vsel %vm347, %v1258, %v1260
  %v1267 = vsel %vm347, %v1260, %v1262
  %v1268 = vsel %vm347, %v1262, %v1264
  %v1273 = vadd.f32 %v1206, %v1265
  %v1274 = vadd.f32 %v1207, %v1266
  %v1275 = vadd.f32 %v1208, %v1267
  %v1276 = vadd.f32 %v1209, %v1268
  %v1277 = vmax.f32 %v1273, 0.0
  %v1278 = vmax.f32 %v1274, 0.0
  %v1279 = vmax.f32 %v1275, 0.0
  %v1280 = vmax.f32 %v1276, 0.0
  %1281 = vst [vmem:[#allocation2 + $0x8] sm:$0xff] %v1277
  %1282 = vst [vmem:[#allocation2 + $0x10] sm:$0xff] %v1278
  %1283 = vst [vmem:[#allocation2 + $0x18] sm:$0xff] %v1279
  %1284 = vst [vmem:[#allocation2 + $0x20] sm:$0xff] %v1280
  %s1285 = scalar_lea.vmem %s6, 88
  %v1286 = vld [vmem:[%s1285] sm:$0xf]
  %v1288 = vlaneseq
  %v1289 = vshrl.u32 %v1288, 7
  %v1290 = vsub.s32 0, %v1289
  %v1291 = vrot.slane %v1286, %v1290
  %v1292 = vlaneseq
  %v1293 = vshrl.u32 %v1292, 7
  %v1294 = vsub.s32 1, %v1293
  %v1295 = vrot.slane %v1286, %v1294
  %v1296 = vlaneseq
  %v1297 = vshrl.u32 %v1296, 7
  %v1298 = vsub.s32 2, %v1297
  %v1299 = vrot.slane %v1286, %v1298
  %v1300 = vlaneseq
  %v1301 = vshrl.u32 %v1300, 7
  %v1302 = vsub.s32 3, %v1301
  %v1303 = vrot.slane %v1286, %v1302
  %v1308 = vmul.f32 %v1277, %v1291
  %v1309 = vmul.f32 %v1278, %v1295
  %v1310 = vmul.f32 %v1279, %v1299
  %v1311 = vmul.f32 %v1280, %v1303
  %s1312 = scalar_lea.vmem %s7, 4
  %v1313 = vld [vmem:[%s1312] sm:$0xf]
  %v1315 = vlaneseq
  %v1316 = vshrl.u32 %v1315, 7
  %v1317 = vsub.s32 0, %v1316
  %v1318 = vrot.slane %v1313, %v1317
  %v1319 = vlaneseq
  %v1320 = vshrl.u32 %v1319, 7
  %v1321 = vsub.s32 1, %v1320
  %v1322 = vrot.slane %v1313, %v1321
  %v1323 = vlaneseq
  %v1324 = vshrl.u32 %v1323, 7
  %v1325 = vsub.s32 2, %v1324
  %v1326 = vrot.slane %v1313, %v1325
  %v1327 = vlaneseq
  %v1328 = vshrl.u32 %v1327, 7
  %v1329 = vsub.s32 3, %v1328
  %v1330 = vrot.slane %v1313, %v1329
  %v1335 = vadd.f32 %v1308, %v1318
  %v1336 = vadd.f32 %v1309, %v1322
  %v1337 = vadd.f32 %v1310, %v1326
  %v1338 = vadd.f32 %v1311, %v1330
  %v1339 = vld [vmem:[#allocation2] sm:$0xff]
  %v1340 = vld [vmem:[#allocation2 + $0x8] sm:$0xff]
  %v1341 = vld [vmem:[#allocation2 + $0x10] sm:$0xff]
  %v1342 = vld [vmem:[#allocation2 + $0x18] sm:$0xff]
  %v1343 = vld [vmem:[#allocation2 + $0x20] sm:$0xff]
  %s1344 = scalar_lea.vmem %s6, 60
  %v1345 = vld [vmem:[%s1344] sm:$0xf]
  %v1347 = vlaneseq
  %v1348 = vshrl.u32 %v1347, 7
  %v1349 = vsub.s32 0, %v1348
  %v1350 = vrot.slane %v1345, %v1349
  %v1351 = vlaneseq
  %v1352 = vshrl.u32 %v1351, 7
  %v1353 = vsub.s32 1, %v1352
  %v1354 = vrot.slane %v1345, %v1353
  %v1355 = vlaneseq
  %v1356 = vshrl.u32 %v1355, 7
  %v1357 = vsub.s32 2, %v1356
  %v1358 = vrot.slane %v1345, %v1357
  %v1359 = vlaneseq
  %v1360 = vshrl.u32 %v1359, 7
  %v1361 = vsub.s32 3, %v1360
  %v1362 = vrot.slane %v1345, %v1361
  %1363 = vrot.lane.b32.xlu0 %v1350, 121
  %v1364 = vpop.permute.xlu0 %1363
  %1365 = vrot.lane.b32.xlu0 %v1354, 121
  %v1366 = vpop.permute.xlu0 %1365
  %1367 = vrot.lane.b32.xlu0 %v1358, 121
  %v1368 = vpop.permute.xlu0 %1367
  %1369 = vrot.lane.b32.xlu0 %v1362, 121
  %v1370 = vpop.permute.xlu0 %1369
  %v1371 = vsel %vm347, %v1364, %v1366
  %v1372 = vsel %vm347, %v1366, %v1368
  %v1373 = vsel %vm347, %v1368, %v1370
  %v1379 = vmul.f32 %v1339, %v1364
  %v1380 = vmul.f32 %v1340, %v1371
  %v1381 = vmul.f32 %v1341, %v1372
  %v1382 = vmul.f32 %v1342, %v1373
  %v1383 = vmul.f32 %v1343, %v1370
  %1389 = vrot.lane.b32.xlu0 %v1379, 7
  %v1390 = vpop.permute.xlu0 %1389
  %1391 = vrot.lane.b32.xlu0 %v1380, 7
  %v1392 = vpop.permute.xlu0 %1391
  %1393 = vrot.lane.b32.xlu0 %v1381, 7
  %v1394 = vpop.permute.xlu0 %1393
  %1395 = vrot.lane.b32.xlu0 %v1382, 7
  %v1396 = vpop.permute.xlu0 %1395
  %1397 = vrot.lane.b32.xlu0 %v1383, 7
  %v1398 = vpop.permute.xlu0 %1397
  %v1399 = vsel %vm376, %v1390, %v1392
  %v1400 = vsel %vm376, %v1392, %v1394
  %v1401 = vsel %vm376, %v1394, %v1396
  %v1402 = vsel %vm376, %v1396, %v1398
  %v1407 = vadd.f32 %v1335, %v1399
  %v1408 = vadd.f32 %v1336, %v1400
  %v1409 = vadd.f32 %v1337, %v1401
  %v1410 = vadd.f32 %v1338, %v1402
  %s1411 = scalar_lea.vmem %s6, 64
  %v1412 = vld [vmem:[%s1411] sm:$0xf]
  %v1414 = vlaneseq
  %v1415 = vshrl.u32 %v1414, 7
  %v1416 = vsub.s32 0, %v1415
  %v1417 = vrot.slane %v1412, %v1416
  %v1418 = vlaneseq
  %v1419 = vshrl.u32 %v1418, 7
  %v1420 = vsub.s32 1, %v1419
  %v1421 = vrot.slane %v1412, %v1420
  %v1422 = vlaneseq
  %v1423 = vshrl.u32 %v1422, 7
  %v1424 = vsub.s32 2, %v1423
  %v1425 = vrot.slane %v1412, %v1424
  %v1426 = vlaneseq
  %v1427 = vshrl.u32 %v1426, 7
  %v1428 = vsub.s32 3, %v1427
  %v1429 = vrot.slane %v1412, %v1428
  %1430 = vrot.lane.b32.xlu0 %v1417, 122
  %v1431 = vpop.permute.xlu0 %1430
  %1432 = vrot.lane.b32.xlu0 %v1421, 122
  %v1433 = vpop.permute.xlu0 %1432
  %1434 = vrot.lane.b32.xlu0 %v1425, 122
  %v1435 = vpop.permute.xlu0 %1434
  %1436 = vrot.lane.b32.xlu0 %v1429, 122
  %v1437 = vpop.permute.xlu0 %1436
  %v1438 = vsel %vm416, %v1431, %v1433
  %v1439 = vsel %vm416, %v1433, %v1435
  %v1440 = vsel %vm416, %v1435, %v1437
  %v1446 = vmul.f32 %v1339, %v1431
  %v1447 = vmul.f32 %v1340, %v1438
  %v1448 = vmul.f32 %v1341, %v1439
  %v1449 = vmul.f32 %v1342, %v1440
  %v1450 = vmul.f32 %v1343, %v1437
  %1456 = vrot.lane.b32.xlu0 %v1446, 6
  %v1457 = vpop.permute.xlu0 %1456
  %1458 = vrot.lane.b32.xlu0 %v1447, 6
  %v1459 = vpop.permute.xlu0 %1458
  %1460 = vrot.lane.b32.xlu0 %v1448, 6
  %v1461 = vpop.permute.xlu0 %1460
  %1462 = vrot.lane.b32.xlu0 %v1449, 6
  %v1463 = vpop.permute.xlu0 %1462
  %1464 = vrot.lane.b32.xlu0 %v1450, 6
  %v1465 = vpop.permute.xlu0 %1464
  %v1466 = vsel %vm445, %v1457, %v1459
  %v1467 = vsel %vm445, %v1459, %v1461
  %v1468 = vsel %vm445, %v1461, %v1463
  %v1469 = vsel %vm445, %v1463, %v1465
  %v1474 = vadd.f32 %v1407, %v1466
  %v1475 = vadd.f32 %v1408, %v1467
  %v1476 = vadd.f32 %v1409, %v1468
  %v1477 = vadd.f32 %v1410, %v1469
  %s1478 = scalar_lea.vmem %s6, 68
  %v1479 = vld [vmem:[%s1478] sm:$0xf]
  %v1481 = vlaneseq
  %v1482 = vshrl.u32 %v1481, 7
  %v1483 = vsub.s32 0, %v1482
  %v1484 = vrot.slane %v1479, %v1483
  %v1485 = vlaneseq
  %v1486 = vshrl.u32 %v1485, 7
  %v1487 = vsub.s32 1, %v1486
  %v1488 = vrot.slane %v1479, %v1487
  %v1489 = vlaneseq
  %v1490 = vshrl.u32 %v1489, 7
  %v1491 = vsub.s32 2, %v1490
  %v1492 = vrot.slane %v1479, %v1491
  %v1493 = vlaneseq
  %v1494 = vshrl.u32 %v1493, 7
  %v1495 = vsub.s32 3, %v1494
  %v1496 = vrot.slane %v1479, %v1495
  %1497 = vrot.lane.b32.xlu0 %v1484, 123
  %v1498 = vpop.permute.xlu0 %1497
  %1499 = vrot.lane.b32.xlu0 %v1488, 123
  %v1500 = vpop.permute.xlu0 %1499
  %1501 = vrot.lane.b32.xlu0 %v1492, 123
  %v1502 = vpop.permute.xlu0 %1501
  %1503 = vrot.lane.b32.xlu0 %v1496, 123
  %v1504 = vpop.permute.xlu0 %1503
  %v1505 = vsel %vm485, %v1498, %v1500
  %v1506 = vsel %vm485, %v1500, %v1502
  %v1507 = vsel %vm485, %v1502, %v1504
  %v1513 = vmul.f32 %v1339, %v1498
  %v1514 = vmul.f32 %v1340, %v1505
  %v1515 = vmul.f32 %v1341, %v1506
  %v1516 = vmul.f32 %v1342, %v1507
  %v1517 = vmul.f32 %v1343, %v1504
  %1523 = vrot.lane.b32.xlu0 %v1513, 5
  %v1524 = vpop.permute.xlu0 %1523
  %1525 = vrot.lane.b32.xlu0 %v1514, 5
  %v1526 = vpop.permute.xlu0 %1525
  %1527 = vrot.lane.b32.xlu0 %v1515, 5
  %v1528 = vpop.permute.xlu0 %1527
  %1529 = vrot.lane.b32.xlu0 %v1516, 5
  %v1530 = vpop.permute.xlu0 %1529
  %1531 = vrot.lane.b32.xlu0 %v1517, 5
  %v1532 = vpop.permute.xlu0 %1531
  %v1533 = vsel %vm514, %v1524, %v1526
  %v1534 = vsel %vm514, %v1526, %v1528
  %v1535 = vsel %vm514, %v1528, %v1530
  %v1536 = vsel %vm514, %v1530, %v1532
  %v1541 = vadd.f32 %v1474, %v1533
  %v1542 = vadd.f32 %v1475, %v1534
  %v1543 = vadd.f32 %v1476, %v1535
  %v1544 = vadd.f32 %v1477, %v1536
  %s1545 = scalar_lea.vmem %s6, 72
  %v1546 = vld [vmem:[%s1545] sm:$0xf]
  %v1548 = vlaneseq
  %v1549 = vshrl.u32 %v1548, 7
  %v1550 = vsub.s32 0, %v1549
  %v1551 = vrot.slane %v1546, %v1550
  %v1552 = vlaneseq
  %v1553 = vshrl.u32 %v1552, 7
  %v1554 = vsub.s32 1, %v1553
  %v1555 = vrot.slane %v1546, %v1554
  %v1556 = vlaneseq
  %v1557 = vshrl.u32 %v1556, 7
  %v1558 = vsub.s32 2, %v1557
  %v1559 = vrot.slane %v1546, %v1558
  %v1560 = vlaneseq
  %v1561 = vshrl.u32 %v1560, 7
  %v1562 = vsub.s32 3, %v1561
  %v1563 = vrot.slane %v1546, %v1562
  %1564 = vrot.lane.b32.xlu0 %v1551, 124
  %v1565 = vpop.permute.xlu0 %1564
  %1566 = vrot.lane.b32.xlu0 %v1555, 124
  %v1567 = vpop.permute.xlu0 %1566
  %1568 = vrot.lane.b32.xlu0 %v1559, 124
  %v1569 = vpop.permute.xlu0 %1568
  %1570 = vrot.lane.b32.xlu0 %v1563, 124
  %v1571 = vpop.permute.xlu0 %1570
  %v1572 = vsel %vm554, %v1565, %v1567
  %v1573 = vsel %vm554, %v1567, %v1569
  %v1574 = vsel %vm554, %v1569, %v1571
  %v1580 = vmul.f32 %v1339, %v1565
  %v1581 = vmul.f32 %v1340, %v1572
  %v1582 = vmul.f32 %v1341, %v1573
  %v1583 = vmul.f32 %v1342, %v1574
  %v1584 = vmul.f32 %v1343, %v1571
  %1590 = vrot.lane.b32.xlu0 %v1580, 4
  %v1591 = vpop.permute.xlu0 %1590
  %1592 = vrot.lane.b32.xlu0 %v1581, 4
  %v1593 = vpop.permute.xlu0 %1592
  %1594 = vrot.lane.b32.xlu0 %v1582, 4
  %v1595 = vpop.permute.xlu0 %1594
  %1596 = vrot.lane.b32.xlu0 %v1583, 4
  %v1597 = vpop.permute.xlu0 %1596
  %1598 = vrot.lane.b32.xlu0 %v1584, 4
  %v1599 = vpop.permute.xlu0 %1598
  %v1600 = vsel %vm583, %v1591, %v1593
  %v1601 = vsel %vm583, %v1593, %v1595
  %v1602 = vsel %vm583, %v1595, %v1597
  %v1603 = vsel %vm583, %v1597, %v1599
  %v1608 = vadd.f32 %v1541, %v1600
  %v1609 = vadd.f32 %v1542, %v1601
  %v1610 = vadd.f32 %v1543, %v1602
  %v1611 = vadd.f32 %v1544, %v1603
  %s1612 = scalar_lea.vmem %s6, 76
  %v1613 = vld [vmem:[%s1612] sm:$0xf]
  %v1615 = vlaneseq
  %v1616 = vshrl.u32 %v1615, 7
  %v1617 = vsub.s32 0, %v1616
  %v1618 = vrot.slane %v1613, %v1617
  %v1619 = vlaneseq
  %v1620 = vshrl.u32 %v1619, 7
  %v1621 = vsub.s32 1, %v1620
  %v1622 = vrot.slane %v1613, %v1621
  %v1623 = vlaneseq
  %v1624 = vshrl.u32 %v1623, 7
  %v1625 = vsub.s32 2, %v1624
  %v1626 = vrot.slane %v1613, %v1625
  %v1627 = vlaneseq
  %v1628 = vshrl.u32 %v1627, 7
  %v1629 = vsub.s32 3, %v1628
  %v1630 = vrot.slane %v1613, %v1629
  %1631 = vrot.lane.b32.xlu0 %v1618, 125
  %v1632 = vpop.permute.xlu0 %1631
  %1633 = vrot.lane.b32.xlu0 %v1622, 125
  %v1634 = vpop.permute.xlu0 %1633
  %1635 = vrot.lane.b32.xlu0 %v1626, 125
  %v1636 = vpop.permute.xlu0 %1635
  %1637 = vrot.lane.b32.xlu0 %v1630, 125
  %v1638 = vpop.permute.xlu0 %1637
  %v1639 = vsel %vm623, %v1632, %v1634
  %v1640 = vsel %vm623, %v1634, %v1636
  %v1641 = vsel %vm623, %v1636, %v1638
  %v1647 = vmul.f32 %v1339, %v1632
  %v1648 = vmul.f32 %v1340, %v1639
  %v1649 = vmul.f32 %v1341, %v1640
  %v1650 = vmul.f32 %v1342, %v1641
  %v1651 = vmul.f32 %v1343, %v1638
  %1657 = vrot.lane.b32.xlu0 %v1647, 3
  %v1658 = vpop.permute.xlu0 %1657
  %1659 = vrot.lane.b32.xlu0 %v1648, 3
  %v1660 = vpop.permute.xlu0 %1659
  %1661 = vrot.lane.b32.xlu0 %v1649, 3
  %v1662 = vpop.permute.xlu0 %1661
  %1663 = vrot.lane.b32.xlu0 %v1650, 3
  %v1664 = vpop.permute.xlu0 %1663
  %1665 = vrot.lane.b32.xlu0 %v1651, 3
  %v1666 = vpop.permute.xlu0 %1665
  %v1667 = vsel %vm652, %v1658, %v1660
  %v1668 = vsel %vm652, %v1660, %v1662
  %v1669 = vsel %vm652, %v1662, %v1664
  %v1670 = vsel %vm652, %v1664, %v1666
  %v1675 = vadd.f32 %v1608, %v1667
  %v1676 = vadd.f32 %v1609, %v1668
  %v1677 = vadd.f32 %v1610, %v1669
  %v1678 = vadd.f32 %v1611, %v1670
  %s1679 = scalar_lea.vmem %s6, 80
  %v1680 = vld [vmem:[%s1679] sm:$0xf]
  %v1682 = vlaneseq
  %v1683 = vshrl.u32 %v1682, 7
  %v1684 = vsub.s32 0, %v1683
  %v1685 = vrot.slane %v1680, %v1684
  %v1686 = vlaneseq
  %v1687 = vshrl.u32 %v1686, 7
  %v1688 = vsub.s32 1, %v1687
  %v1689 = vrot.slane %v1680, %v1688
  %v1690 = vlaneseq
  %v1691 = vshrl.u32 %v1690, 7
  %v1692 = vsub.s32 2, %v1691
  %v1693 = vrot.slane %v1680, %v1692
  %v1694 = vlaneseq
  %v1695 = vshrl.u32 %v1694, 7
  %v1696 = vsub.s32 3, %v1695
  %v1697 = vrot.slane %v1680, %v1696
  %1698 = vrot.lane.b32.xlu0 %v1685, 126
  %v1699 = vpop.permute.xlu0 %1698
  %1700 = vrot.lane.b32.xlu0 %v1689, 126
  %v1701 = vpop.permute.xlu0 %1700
  %1702 = vrot.lane.b32.xlu0 %v1693, 126
  %v1703 = vpop.permute.xlu0 %1702
  %1704 = vrot.lane.b32.xlu0 %v1697, 126
  %v1705 = vpop.permute.xlu0 %1704
  %v1706 = vsel %vm692, %v1699, %v1701
  %v1707 = vsel %vm692, %v1701, %v1703
  %v1708 = vsel %vm692, %v1703, %v1705
  %v1714 = vmul.f32 %v1339, %v1699
  %v1715 = vmul.f32 %v1340, %v1706
  %v1716 = vmul.f32 %v1341, %v1707
  %v1717 = vmul.f32 %v1342, %v1708
  %v1718 = vmul.f32 %v1343, %v1705
  %1724 = vrot.lane.b32.xlu0 %v1714, 2
  %v1725 = vpop.permute.xlu0 %1724
  %1726 = vrot.lane.b32.xlu0 %v1715, 2
  %v1727 = vpop.permute.xlu0 %1726
  %1728 = vrot.lane.b32.xlu0 %v1716, 2
  %v1729 = vpop.permute.xlu0 %1728
  %1730 = vrot.lane.b32.xlu0 %v1717, 2
  %v1731 = vpop.permute.xlu0 %1730
  %1732 = vrot.lane.b32.xlu0 %v1718, 2
  %v1733 = vpop.permute.xlu0 %1732
  %v1734 = vsel %vm721, %v1725, %v1727
  %v1735 = vsel %vm721, %v1727, %v1729
  %v1736 = vsel %vm721, %v1729, %v1731
  %v1737 = vsel %vm721, %v1731, %v1733
  %v1742 = vadd.f32 %v1675, %v1734
  %v1743 = vadd.f32 %v1676, %v1735
  %v1744 = vadd.f32 %v1677, %v1736
  %v1745 = vadd.f32 %v1678, %v1737
  %s1746 = scalar_lea.vmem %s6, 84
  %v1747 = vld [vmem:[%s1746] sm:$0xf]
  %v1749 = vlaneseq
  %v1750 = vshrl.u32 %v1749, 7
  %v1751 = vsub.s32 0, %v1750
  %v1752 = vrot.slane %v1747, %v1751
  %v1753 = vlaneseq
  %v1754 = vshrl.u32 %v1753, 7
  %v1755 = vsub.s32 1, %v1754
  %v1756 = vrot.slane %v1747, %v1755
  %v1757 = vlaneseq
  %v1758 = vshrl.u32 %v1757, 7
  %v1759 = vsub.s32 2, %v1758
  %v1760 = vrot.slane %v1747, %v1759
  %v1761 = vlaneseq
  %v1762 = vshrl.u32 %v1761, 7
  %v1763 = vsub.s32 3, %v1762
  %v1764 = vrot.slane %v1747, %v1763
  %1765 = vrot.lane.b32.xlu0 %v1752, 127
  %v1766 = vpop.permute.xlu0 %1765
  %1767 = vrot.lane.b32.xlu0 %v1756, 127
  %v1768 = vpop.permute.xlu0 %1767
  %1769 = vrot.lane.b32.xlu0 %v1760, 127
  %v1770 = vpop.permute.xlu0 %1769
  %1771 = vrot.lane.b32.xlu0 %v1764, 127
  %v1772 = vpop.permute.xlu0 %1771
  %v1773 = vsel %vm761, %v1766, %v1768
  %v1774 = vsel %vm761, %v1768, %v1770
  %v1775 = vsel %vm761, %v1770, %v1772
  %v1781 = vmul.f32 %v1339, %v1766
  %v1782 = vmul.f32 %v1340, %v1773
  %v1783 = vmul.f32 %v1341, %v1774
  %v1784 = vmul.f32 %v1342, %v1775
  %v1785 = vmul.f32 %v1343, %v1772
  %1791 = vrot.lane.b32.xlu0 %v1781, 1
  %v1792 = vpop.permute.xlu0 %1791
  %1793 = vrot.lane.b32.xlu0 %v1782, 1
  %v1794 = vpop.permute.xlu0 %1793
  %1795 = vrot.lane.b32.xlu0 %v1783, 1
  %v1796 = vpop.permute.xlu0 %1795
  %1797 = vrot.lane.b32.xlu0 %v1784, 1
  %v1798 = vpop.permute.xlu0 %1797
  %1799 = vrot.lane.b32.xlu0 %v1785, 1
  %v1800 = vpop.permute.xlu0 %1799
  %v1801 = vsel %vm790, %v1792, %v1794
  %v1802 = vsel %vm790, %v1794, %v1796
  %v1803 = vsel %vm790, %v1796, %v1798
  %v1804 = vsel %vm790, %v1798, %v1800
  %v1809 = vadd.f32 %v1742, %v1801
  %v1810 = vadd.f32 %v1743, %v1802
  %v1811 = vadd.f32 %v1744, %v1803
  %v1812 = vadd.f32 %v1745, %v1804
  %v1813 = vld [vmem:[#allocation2 + $0x8] sm:$0xff]
  %v1814 = vld [vmem:[#allocation2 + $0x10] sm:$0xff]
  %v1815 = vld [vmem:[#allocation2 + $0x18] sm:$0xff]
  %v1816 = vld [vmem:[#allocation2 + $0x20] sm:$0xff]
  %v1817 = vld [vmem:[#allocation2 + $0x28] sm:$0xff]
  %s1818 = scalar_lea.vmem %s6, 92
  %v1819 = vld [vmem:[%s1818] sm:$0xf]
  %v1821 = vlaneseq
  %v1822 = vshrl.u32 %v1821, 7
  %v1823 = vsub.s32 0, %v1822
  %v1824 = vrot.slane %v1819, %v1823
  %v1825 = vlaneseq
  %v1826 = vshrl.u32 %v1825, 7
  %v1827 = vsub.s32 1, %v1826
  %v1828 = vrot.slane %v1819, %v1827
  %v1829 = vlaneseq
  %v1830 = vshrl.u32 %v1829, 7
  %v1831 = vsub.s32 2, %v1830
  %v1832 = vrot.slane %v1819, %v1831
  %v1833 = vlaneseq
  %v1834 = vshrl.u32 %v1833, 7
  %v1835 = vsub.s32 3, %v1834
  %v1836 = vrot.slane %v1819, %v1835
  %1837 = vrot.lane.b32.xlu0 %v1824, 1
  %v1838 = vpop.permute.xlu0 %1837
  %1839 = vrot.lane.b32.xlu0 %v1828, 1
  %v1840 = vpop.permute.xlu0 %1839
  %1841 = vrot.lane.b32.xlu0 %v1832, 1
  %v1842 = vpop.permute.xlu0 %1841
  %1843 = vrot.lane.b32.xlu0 %v1836, 1
  %v1844 = vpop.permute.xlu0 %1843
  %v1845 = vsel %vm790, %v1838, %v1840
  %v1846 = vsel %vm790, %v1840, %v1842
  %v1847 = vsel %vm790, %v1842, %v1844
  %v1853 = vmul.f32 %v1813, %v1838
  %v1854 = vmul.f32 %v1814, %v1845
  %v1855 = vmul.f32 %v1815, %v1846
  %v1856 = vmul.f32 %v1816, %v1847
  %v1857 = vmul.f32 %v1817, %v1844
  %1863 = vrot.lane.b32.xlu0 %v1853, 127
  %v1864 = vpop.permute.xlu0 %1863
  %1865 = vrot.lane.b32.xlu0 %v1854, 127
  %v1866 = vpop.permute.xlu0 %1865
  %1867 = vrot.lane.b32.xlu0 %v1855, 127
  %v1868 = vpop.permute.xlu0 %1867
  %1869 = vrot.lane.b32.xlu0 %v1856, 127
  %v1870 = vpop.permute.xlu0 %1869
  %1871 = vrot.lane.b32.xlu0 %v1857, 127
  %v1872 = vpop.permute.xlu0 %1871
  %v1873 = vsel %vm761, %v1864, %v1866
  %v1874 = vsel %vm761, %v1866, %v1868
  %v1875 = vsel %vm761, %v1868, %v1870
  %v1876 = vsel %vm761, %v1870, %v1872
  %v1881 = vadd.f32 %v1809, %v1873
  %v1882 = vadd.f32 %v1810, %v1874
  %v1883 = vadd.f32 %v1811, %v1875
  %v1884 = vadd.f32 %v1812, %v1876
  %s1885 = scalar_lea.vmem %s6, 96
  %v1886 = vld [vmem:[%s1885] sm:$0xf]
  %v1888 = vlaneseq
  %v1889 = vshrl.u32 %v1888, 7
  %v1890 = vsub.s32 0, %v1889
  %v1891 = vrot.slane %v1886, %v1890
  %v1892 = vlaneseq
  %v1893 = vshrl.u32 %v1892, 7
  %v1894 = vsub.s32 1, %v1893
  %v1895 = vrot.slane %v1886, %v1894
  %v1896 = vlaneseq
  %v1897 = vshrl.u32 %v1896, 7
  %v1898 = vsub.s32 2, %v1897
  %v1899 = vrot.slane %v1886, %v1898
  %v1900 = vlaneseq
  %v1901 = vshrl.u32 %v1900, 7
  %v1902 = vsub.s32 3, %v1901
  %v1903 = vrot.slane %v1886, %v1902
  %1904 = vrot.lane.b32.xlu0 %v1891, 2
  %v1905 = vpop.permute.xlu0 %1904
  %1906 = vrot.lane.b32.xlu0 %v1895, 2
  %v1907 = vpop.permute.xlu0 %1906
  %1908 = vrot.lane.b32.xlu0 %v1899, 2
  %v1909 = vpop.permute.xlu0 %1908
  %1910 = vrot.lane.b32.xlu0 %v1903, 2
  %v1911 = vpop.permute.xlu0 %1910
  %v1912 = vsel %vm721, %v1905, %v1907
  %v1913 = vsel %vm721, %v1907, %v1909
  %v1914 = vsel %vm721, %v1909, %v1911
  %v1920 = vmul.f32 %v1813, %v1905
  %v1921 = vmul.f32 %v1814, %v1912
  %v1922 = vmul.f32 %v1815, %v1913
  %v1923 = vmul.f32 %v1816, %v1914
  %v1924 = vmul.f32 %v1817, %v1911
  %1930 = vrot.lane.b32.xlu0 %v1920, 126
  %v1931 = vpop.permute.xlu0 %1930
  %1932 = vrot.lane.b32.xlu0 %v1921, 126
  %v1933 = vpop.permute.xlu0 %1932
  %1934 = vrot.lane.b32.xlu0 %v1922, 126
  %v1935 = vpop.permute.xlu0 %1934
  %1936 = vrot.lane.b32.xlu0 %v1923, 126
  %v1937 = vpop.permute.xlu0 %1936
  %1938 = vrot.lane.b32.xlu0 %v1924, 126
  %v1939 = vpop.permute.xlu0 %1938
  %v1940 = vsel %vm692, %v1931, %v1933
  %v1941 = vsel %vm692, %v1933, %v1935
  %v1942 = vsel %vm692, %v1935, %v1937
  %v1943 = vsel %vm692, %v1937, %v1939
  %v1948 = vadd.f32 %v1881, %v1940
  %v1949 = vadd.f32 %v1882, %v1941
  %v1950 = vadd.f32 %v1883, %v1942
  %v1951 = vadd.f32 %v1884, %v1943
  %s1952 = scalar_lea.vmem %s6, 100
  %v1953 = vld [vmem:[%s1952] sm:$0xf]
  %v1955 = vlaneseq
  %v1956 = vshrl.u32 %v1955, 7
  %v1957 = vsub.s32 0, %v1956
  %v1958 = vrot.slane %v1953, %v1957
  %v1959 = vlaneseq
  %v1960 = vshrl.u32 %v1959, 7
  %v1961 = vsub.s32 1, %v1960
  %v1962 = vrot.slane %v1953, %v1961
  %v1963 = vlaneseq
  %v1964 = vshrl.u32 %v1963, 7
  %v1965 = vsub.s32 2, %v1964
  %v1966 = vrot.slane %v1953, %v1965
  %v1967 = vlaneseq
  %v1968 = vshrl.u32 %v1967, 7
  %v1969 = vsub.s32 3, %v1968
  %v1970 = vrot.slane %v1953, %v1969
  %1971 = vrot.lane.b32.xlu0 %v1958, 3
  %v1972 = vpop.permute.xlu0 %1971
  %1973 = vrot.lane.b32.xlu0 %v1962, 3
  %v1974 = vpop.permute.xlu0 %1973
  %1975 = vrot.lane.b32.xlu0 %v1966, 3
  %v1976 = vpop.permute.xlu0 %1975
  %1977 = vrot.lane.b32.xlu0 %v1970, 3
  %v1978 = vpop.permute.xlu0 %1977
  %v1979 = vsel %vm652, %v1972, %v1974
  %v1980 = vsel %vm652, %v1974, %v1976
  %v1981 = vsel %vm652, %v1976, %v1978
  %v1987 = vmul.f32 %v1813, %v1972
  %v1988 = vmul.f32 %v1814, %v1979
  %v1989 = vmul.f32 %v1815, %v1980
  %v1990 = vmul.f32 %v1816, %v1981
  %v1991 = vmul.f32 %v1817, %v1978
  %1997 = vrot.lane.b32.xlu0 %v1987, 125
  %v1998 = vpop.permute.xlu0 %1997
  %1999 = vrot.lane.b32.xlu0 %v1988, 125
  %v2000 = vpop.permute.xlu0 %1999
  %2001 = vrot.lane.b32.xlu0 %v1989, 125
  %v2002 = vpop.permute.xlu0 %2001
  %2003 = vrot.lane.b32.xlu0 %v1990, 125
  %v2004 = vpop.permute.xlu0 %2003
  %2005 = vrot.lane.b32.xlu0 %v1991, 125
  %v2006 = vpop.permute.xlu0 %2005
  %v2007 = vsel %vm623, %v1998, %v2000
  %v2008 = vsel %vm623, %v2000, %v2002
  %v2009 = vsel %vm623, %v2002, %v2004
  %v2010 = vsel %vm623, %v2004, %v2006
  %v2015 = vadd.f32 %v1948, %v2007
  %v2016 = vadd.f32 %v1949, %v2008
  %v2017 = vadd.f32 %v1950, %v2009
  %v2018 = vadd.f32 %v1951, %v2010
  %s2019 = scalar_lea.vmem %s6, 104
  %v2020 = vld [vmem:[%s2019] sm:$0xf]
  %v2022 = vlaneseq
  %v2023 = vshrl.u32 %v2022, 7
  %v2024 = vsub.s32 0, %v2023
  %v2025 = vrot.slane %v2020, %v2024
  %v2026 = vlaneseq
  %v2027 = vshrl.u32 %v2026, 7
  %v2028 = vsub.s32 1, %v2027
  %v2029 = vrot.slane %v2020, %v2028
  %v2030 = vlaneseq
  %v2031 = vshrl.u32 %v2030, 7
  %v2032 = vsub.s32 2, %v2031
  %v2033 = vrot.slane %v2020, %v2032
  %v2034 = vlaneseq
  %v2035 = vshrl.u32 %v2034, 7
  %v2036 = vsub.s32 3, %v2035
  %v2037 = vrot.slane %v2020, %v2036
  %2038 = vrot.lane.b32.xlu0 %v2025, 4
  %v2039 = vpop.permute.xlu0 %2038
  %2040 = vrot.lane.b32.xlu0 %v2029, 4
  %v2041 = vpop.permute.xlu0 %2040
  %2042 = vrot.lane.b32.xlu0 %v2033, 4
  %v2043 = vpop.permute.xlu0 %2042
  %2044 = vrot.lane.b32.xlu0 %v2037, 4
  %v2045 = vpop.permute.xlu0 %2044
  %v2046 = vsel %vm583, %v2039, %v2041
  %v2047 = vsel %vm583, %v2041, %v2043
  %v2048 = vsel %vm583, %v2043, %v2045
  %v2054 = vmul.f32 %v1813, %v2039
  %v2055 = vmul.f32 %v1814, %v2046
  %v2056 = vmul.f32 %v1815, %v2047
  %v2057 = vmul.f32 %v1816, %v2048
  %v2058 = vmul.f32 %v1817, %v2045
  %2064 = vrot.lane.b32.xlu0 %v2054, 124
  %v2065 = vpop.permute.xlu0 %2064
  %2066 = vrot.lane.b32.xlu0 %v2055, 124
  %v2067 = vpop.permute.xlu0 %2066
  %2068 = vrot.lane.b32.xlu0 %v2056, 124
  %v2069 = vpop.permute.xlu0 %2068
  %2070 = vrot.lane.b32.xlu0 %v2057, 124
  %v2071 = vpop.permute.xlu0 %2070
  %2072 = vrot.lane.b32.xlu0 %v2058, 124
  %v2073 = vpop.permute.xlu0 %2072
  %v2074 = vsel %vm554, %v2065, %v2067
  %v2075 = vsel %vm554, %v2067, %v2069
  %v2076 = vsel %vm554, %v2069, %v2071
  %v2077 = vsel %vm554, %v2071, %v2073
  %v2082 = vadd.f32 %v2015, %v2074
  %v2083 = vadd.f32 %v2016, %v2075
  %v2084 = vadd.f32 %v2017, %v2076
  %v2085 = vadd.f32 %v2018, %v2077
  %s2086 = scalar_lea.vmem %s6, 108
  %v2087 = vld [vmem:[%s2086] sm:$0xf]
  %v2089 = vlaneseq
  %v2090 = vshrl.u32 %v2089, 7
  %v2091 = vsub.s32 0, %v2090
  %v2092 = vrot.slane %v2087, %v2091
  %v2093 = vlaneseq
  %v2094 = vshrl.u32 %v2093, 7
  %v2095 = vsub.s32 1, %v2094
  %v2096 = vrot.slane %v2087, %v2095
  %v2097 = vlaneseq
  %v2098 = vshrl.u32 %v2097, 7
  %v2099 = vsub.s32 2, %v2098
  %v2100 = vrot.slane %v2087, %v2099
  %v2101 = vlaneseq
  %v2102 = vshrl.u32 %v2101, 7
  %v2103 = vsub.s32 3, %v2102
  %v2104 = vrot.slane %v2087, %v2103
  %2105 = vrot.lane.b32.xlu0 %v2092, 5
  %v2106 = vpop.permute.xlu0 %2105
  %2107 = vrot.lane.b32.xlu0 %v2096, 5
  %v2108 = vpop.permute.xlu0 %2107
  %2109 = vrot.lane.b32.xlu0 %v2100, 5
  %v2110 = vpop.permute.xlu0 %2109
  %2111 = vrot.lane.b32.xlu0 %v2104, 5
  %v2112 = vpop.permute.xlu0 %2111
  %v2113 = vsel %vm514, %v2106, %v2108
  %v2114 = vsel %vm514, %v2108, %v2110
  %v2115 = vsel %vm514, %v2110, %v2112
  %v2121 = vmul.f32 %v1813, %v2106
  %v2122 = vmul.f32 %v1814, %v2113
  %v2123 = vmul.f32 %v1815, %v2114
  %v2124 = vmul.f32 %v1816, %v2115
  %v2125 = vmul.f32 %v1817, %v2112
  %2131 = vrot.lane.b32.xlu0 %v2121, 123
  %v2132 = vpop.permute.xlu0 %2131
  %2133 = vrot.lane.b32.xlu0 %v2122, 123
  %v2134 = vpop.permute.xlu0 %2133
  %2135 = vrot.lane.b32.xlu0 %v2123, 123
  %v2136 = vpop.permute.xlu0 %2135
  %2137 = vrot.lane.b32.xlu0 %v2124, 123
  %v2138 = vpop.permute.xlu0 %2137
  %2139 = vrot.lane.b32.xlu0 %v2125, 123
  %v2140 = vpop.permute.xlu0 %2139
  %v2141 = vsel %vm485, %v2132, %v2134
  %v2142 = vsel %vm485, %v2134, %v2136
  %v2143 = vsel %vm485, %v2136, %v2138
  %v2144 = vsel %vm485, %v2138, %v2140
  %v2149 = vadd.f32 %v2082, %v2141
  %v2150 = vadd.f32 %v2083, %v2142
  %v2151 = vadd.f32 %v2084, %v2143
  %v2152 = vadd.f32 %v2085, %v2144
  %s2153 = scalar_lea.vmem %s6, 112
  %v2154 = vld [vmem:[%s2153] sm:$0xf]
  %v2156 = vlaneseq
  %v2157 = vshrl.u32 %v2156, 7
  %v2158 = vsub.s32 0, %v2157
  %v2159 = vrot.slane %v2154, %v2158
  %v2160 = vlaneseq
  %v2161 = vshrl.u32 %v2160, 7
  %v2162 = vsub.s32 1, %v2161
  %v2163 = vrot.slane %v2154, %v2162
  %v2164 = vlaneseq
  %v2165 = vshrl.u32 %v2164, 7
  %v2166 = vsub.s32 2, %v2165
  %v2167 = vrot.slane %v2154, %v2166
  %v2168 = vlaneseq
  %v2169 = vshrl.u32 %v2168, 7
  %v2170 = vsub.s32 3, %v2169
  %v2171 = vrot.slane %v2154, %v2170
  %2172 = vrot.lane.b32.xlu0 %v2159, 6
  %v2173 = vpop.permute.xlu0 %2172
  %2174 = vrot.lane.b32.xlu0 %v2163, 6
  %v2175 = vpop.permute.xlu0 %2174
  %2176 = vrot.lane.b32.xlu0 %v2167, 6
  %v2177 = vpop.permute.xlu0 %2176
  %2178 = vrot.lane.b32.xlu0 %v2171, 6
  %v2179 = vpop.permute.xlu0 %2178
  %v2180 = vsel %vm445, %v2173, %v2175
  %v2181 = vsel %vm445, %v2175, %v2177
  %v2182 = vsel %vm445, %v2177, %v2179
  %v2188 = vmul.f32 %v1813, %v2173
  %v2189 = vmul.f32 %v1814, %v2180
  %v2190 = vmul.f32 %v1815, %v2181
  %v2191 = vmul.f32 %v1816, %v2182
  %v2192 = vmul.f32 %v1817, %v2179
  %2198 = vrot.lane.b32.xlu0 %v2188, 122
  %v2199 = vpop.permute.xlu0 %2198
  %2200 = vrot.lane.b32.xlu0 %v2189, 122
  %v2201 = vpop.permute.xlu0 %2200
  %2202 = vrot.lane.b32.xlu0 %v2190, 122
  %v2203 = vpop.permute.xlu0 %2202
  %2204 = vrot.lane.b32.xlu0 %v2191, 122
  %v2205 = vpop.permute.xlu0 %2204
  %2206 = vrot.lane.b32.xlu0 %v2192, 122
  %v2207 = vpop.permute.xlu0 %2206
  %v2208 = vsel %vm416, %v2199, %v2201
  %v2209 = vsel %vm416, %v2201, %v2203
  %v2210 = vsel %vm416, %v2203, %v2205
  %v2211 = vsel %vm416, %v2205, %v2207
  %v2216 = vadd.f32 %v2149, %v2208
  %v2217 = vadd.f32 %v2150, %v2209
  %v2218 = vadd.f32 %v2151, %v2210
  %v2219 = vadd.f32 %v2152, %v2211
  %s2220 = scalar_lea.vmem %s6, 116
  %v2221 = vld [vmem:[%s2220] sm:$0xf]
  %v2223 = vlaneseq
  %v2224 = vshrl.u32 %v2223, 7
  %v2225 = vsub.s32 0, %v2224
  %v2226 = vrot.slane %v2221, %v2225
  %v2227 = vlaneseq
  %v2228 = vshrl.u32 %v2227, 7
  %v2229 = vsub.s32 1, %v2228
  %v2230 = vrot.slane %v2221, %v2229
  %v2231 = vlaneseq
  %v2232 = vshrl.u32 %v2231, 7
  %v2233 = vsub.s32 2, %v2232
  %v2234 = vrot.slane %v2221, %v2233
  %v2235 = vlaneseq
  %v2236 = vshrl.u32 %v2235, 7
  %v2237 = vsub.s32 3, %v2236
  %v2238 = vrot.slane %v2221, %v2237
  %2239 = vrot.lane.b32.xlu0 %v2226, 7
  %v2240 = vpop.permute.xlu0 %2239
  %2241 = vrot.lane.b32.xlu0 %v2230, 7
  %v2242 = vpop.permute.xlu0 %2241
  %2243 = vrot.lane.b32.xlu0 %v2234, 7
  %v2244 = vpop.permute.xlu0 %2243
  %2245 = vrot.lane.b32.xlu0 %v2238, 7
  %v2246 = vpop.permute.xlu0 %2245
  %v2247 = vsel %vm376, %v2240, %v2242
  %v2248 = vsel %vm376, %v2242, %v2244
  %v2249 = vsel %vm376, %v2244, %v2246
  %v2255 = vmul.f32 %v1813, %v2240
  %v2256 = vmul.f32 %v1814, %v2247
  %v2257 = vmul.f32 %v1815, %v2248
  %v2258 = vmul.f32 %v1816, %v2249
  %v2259 = vmul.f32 %v1817, %v2246
  %2265 = vrot.lane.b32.xlu0 %v2255, 121
  %v2266 = vpop.permute.xlu0 %2265
  %2267 = vrot.lane.b32.xlu0 %v2256, 121
  %v2268 = vpop.permute.xlu0 %2267
  %2269 = vrot.lane.b32.xlu0 %v2257, 121
  %v2270 = vpop.permute.xlu0 %2269
  %2271 = vrot.lane.b32.xlu0 %v2258, 121
  %v2272 = vpop.permute.xlu0 %2271
  %2273 = vrot.lane.b32.xlu0 %v2259, 121
  %v2274 = vpop.permute.xlu0 %2273
  %v2275 = vsel %vm347, %v2266, %v2268
  %v2276 = vsel %vm347, %v2268, %v2270
  %v2277 = vsel %vm347, %v2270, %v2272
  %v2278 = vsel %vm347, %v2272, %v2274
  %v2283 = vadd.f32 %v2216, %v2275
  %v2284 = vadd.f32 %v2217, %v2276
  %v2285 = vadd.f32 %v2218, %v2277
  %v2286 = vadd.f32 %v2219, %v2278
  %v2287 = vmax.f32 %v2283, 0.0
  %v2288 = vmax.f32 %v2284, 0.0
  %v2289 = vmax.f32 %v2285, 0.0
  %v2290 = vmax.f32 %v2286, 0.0
  %2291 = vst [vmem:[#allocation2 + $0x8] sm:$0xff] %v2287
  %2292 = vst [vmem:[#allocation2 + $0x10] sm:$0xff] %v2288
  %2293 = vst [vmem:[#allocation2 + $0x18] sm:$0xff] %v2289
  %2294 = vst [vmem:[#allocation2 + $0x20] sm:$0xff] %v2290
  %s2295 = scalar_lea.vmem %s6, 148
  %v2296 = vld [vmem:[%s2295] sm:$0xf]
  %v2298 = vlaneseq
  %v2299 = vshrl.u32 %v2298, 7
  %v2300 = vsub.s32 0, %v2299
  %v2301 = vrot.slane %v2296, %v2300
  %v2302 = vlaneseq
  %v2303 = vshrl.u32 %v2302, 7
  %v2304 = vsub.s32 1, %v2303
  %v2305 = vrot.slane %v2296, %v2304
  %v2306 = vlaneseq
  %v2307 = vshrl.u32 %v2306, 7
  %v2308 = vsub.s32 2, %v2307
  %v2309 = vrot.slane %v2296, %v2308
  %v2310 = vlaneseq
  %v2311 = vshrl.u32 %v2310, 7
  %v2312 = vsub.s32 3, %v2311
  %v2313 = vrot.slane %v2296, %v2312
  %v2318 = vmul.f32 %v2287, %v2301
  %v2319 = vmul.f32 %v2288, %v2305
  %v2320 = vmul.f32 %v2289, %v2309
  %v2321 = vmul.f32 %v2290, %v2313
  %s2322 = scalar_lea.vmem %s7, 8
  %v2323 = vld [vmem:[%s2322] sm:$0xf]
  %v2325 = vlaneseq
  %v2326 = vshrl.u32 %v2325, 7
  %v2327 = vsub.s32 0, %v2326
  %v2328 = vrot.slane %v2323, %v2327
  %v2329 = vlaneseq
  %v2330 = vshrl.u32 %v2329, 7
  %v2331 = vsub.s32 1, %v2330
  %v2332 = vrot.slane %v2323, %v2331
  %v2333 = vlaneseq
  %v2334 = vshrl.u32 %v2333, 7
  %v2335 = vsub.s32 2, %v2334
  %v2336 = vrot.slane %v2323, %v2335
  %v2337 = vlaneseq
  %v2338 = vshrl.u32 %v2337, 7
  %v2339 = vsub.s32 3, %v2338
  %v2340 = vrot.slane %v2323, %v2339
  %v2345 = vadd.f32 %v2318, %v2328
  %v2346 = vadd.f32 %v2319, %v2332
  %v2347 = vadd.f32 %v2320, %v2336
  %v2348 = vadd.f32 %v2321, %v2340
  %v2349 = vld [vmem:[#allocation2] sm:$0xff]
  %v2350 = vld [vmem:[#allocation2 + $0x8] sm:$0xff]
  %v2351 = vld [vmem:[#allocation2 + $0x10] sm:$0xff]
  %v2352 = vld [vmem:[#allocation2 + $0x18] sm:$0xff]
  %v2353 = vld [vmem:[#allocation2 + $0x20] sm:$0xff]
  %s2354 = scalar_lea.vmem %s6, 120
  %v2355 = vld [vmem:[%s2354] sm:$0xf]
  %v2357 = vlaneseq
  %v2358 = vshrl.u32 %v2357, 7
  %v2359 = vsub.s32 0, %v2358
  %v2360 = vrot.slane %v2355, %v2359
  %v2361 = vlaneseq
  %v2362 = vshrl.u32 %v2361, 7
  %v2363 = vsub.s32 1, %v2362
  %v2364 = vrot.slane %v2355, %v2363
  %v2365 = vlaneseq
  %v2366 = vshrl.u32 %v2365, 7
  %v2367 = vsub.s32 2, %v2366
  %v2368 = vrot.slane %v2355, %v2367
  %v2369 = vlaneseq
  %v2370 = vshrl.u32 %v2369, 7
  %v2371 = vsub.s32 3, %v2370
  %v2372 = vrot.slane %v2355, %v2371
  %2373 = vrot.lane.b32.xlu0 %v2360, 121
  %v2374 = vpop.permute.xlu0 %2373
  %2375 = vrot.lane.b32.xlu0 %v2364, 121
  %v2376 = vpop.permute.xlu0 %2375
  %2377 = vrot.lane.b32.xlu0 %v2368, 121
  %v2378 = vpop.permute.xlu0 %2377
  %2379 = vrot.lane.b32.xlu0 %v2372, 121
  %v2380 = vpop.permute.xlu0 %2379
  %v2381 = vsel %vm347, %v2374, %v2376
  %v2382 = vsel %vm347, %v2376, %v2378
  %v2383 = vsel %vm347, %v2378, %v2380
  %v2389 = vmul.f32 %v2349, %v2374
  %v2390 = vmul.f32 %v2350, %v2381
  %v2391 = vmul.f32 %v2351, %v2382
  %v2392 = vmul.f32 %v2352, %v2383
  %v2393 = vmul.f32 %v2353, %v2380
  %2399 = vrot.lane.b32.xlu0 %v2389, 7
  %v2400 = vpop.permute.xlu0 %2399
  %2401 = vrot.lane.b32.xlu0 %v2390, 7
  %v2402 = vpop.permute.xlu0 %2401
  %2403 = vrot.lane.b32.xlu0 %v2391, 7
  %v2404 = vpop.permute.xlu0 %2403
  %2405 = vrot.lane.b32.xlu0 %v2392, 7
  %v2406 = vpop.permute.xlu0 %2405
  %2407 = vrot.lane.b32.xlu0 %v2393, 7
  %v2408 = vpop.permute.xlu0 %2407
  %v2409 = vsel %vm376, %v2400, %v2402
  %v2410 = vsel %vm376, %v2402, %v2404
  %v2411 = vsel %vm376, %v2404, %v2406
  %v2412 = vsel %vm376, %v2406, %v2408
  %v2417 = vadd.f32 %v2345, %v2409
  %v2418 = vadd.f32 %v2346, %v2410
  %v2419 = vadd.f32 %v2347, %v2411
  %v2420 = vadd.f32 %v2348, %v2412
  %s2421 = scalar_lea.vmem %s6, 124
  %v2422 = vld [vmem:[%s2421] sm:$0xf]
  %v2424 = vlaneseq
  %v2425 = vshrl.u32 %v2424, 7
  %v2426 = vsub.s32 0, %v2425
  %v2427 = vrot.slane %v2422, %v2426
  %v2428 = vlaneseq
  %v2429 = vshrl.u32 %v2428, 7
  %v2430 = vsub.s32 1, %v2429
  %v2431 = vrot.slane %v2422, %v2430
  %v2432 = vlaneseq
  %v2433 = vshrl.u32 %v2432, 7
  %v2434 = vsub.s32 2, %v2433
  %v2435 = vrot.slane %v2422, %v2434
  %v2436 = vlaneseq
  %v2437 = vshrl.u32 %v2436, 7
  %v2438 = vsub.s32 3, %v2437
  %v2439 = vrot.slane %v2422, %v2438
  %2440 = vrot.lane.b32.xlu0 %v2427, 122
  %v2441 = vpop.permute.xlu0 %2440
  %2442 = vrot.lane.b32.xlu0 %v2431, 122
  %v2443 = vpop.permute.xlu0 %2442
  %2444 = vrot.lane.b32.xlu0 %v2435, 122
  %v2445 = vpop.permute.xlu0 %2444
  %2446 = vrot.lane.b32.xlu0 %v2439, 122
  %v2447 = vpop.permute.xlu0 %2446
  %v2448 = vsel %vm416, %v2441, %v2443
  %v2449 = vsel %vm416, %v2443, %v2445
  %v2450 = vsel %vm416, %v2445, %v2447
  %v2456 = vmul.f32 %v2349, %v2441
  %v2457 = vmul.f32 %v2350, %v2448
  %v2458 = vmul.f32 %v2351, %v2449
  %v2459 = vmul.f32 %v2352, %v2450
  %v2460 = vmul.f32 %v2353, %v2447
  %2466 = vrot.lane.b32.xlu0 %v2456, 6
  %v2467 = vpop.permute.xlu0 %2466
  %2468 = vrot.lane.b32.xlu0 %v2457, 6
  %v2469 = vpop.permute.xlu0 %2468
  %2470 = vrot.lane.b32.xlu0 %v2458, 6
  %v2471 = vpop.permute.xlu0 %2470
  %2472 = vrot.lane.b32.xlu0 %v2459, 6
  %v2473 = vpop.permute.xlu0 %2472
  %2474 = vrot.lane.b32.xlu0 %v2460, 6
  %v2475 = vpop.permute.xlu0 %2474
  %v2476 = vsel %vm445, %v2467, %v2469
  %v2477 = vsel %vm445, %v2469, %v2471
  %v2478 = vsel %vm445, %v2471, %v2473
  %v2479 = vsel %vm445, %v2473, %v2475
  %v2484 = vadd.f32 %v2417, %v2476
  %v2485 = vadd.f32 %v2418, %v2477
  %v2486 = vadd.f32 %v2419, %v2478
  %v2487 = vadd.f32 %v2420, %v2479
  %s2488 = scalar_lea.vmem %s6, 128
  %v2489 = vld [vmem:[%s2488] sm:$0xf]
  %v2491 = vlaneseq
  %v2492 = vshrl.u32 %v2491, 7
  %v2493 = vsub.s32 0, %v2492
  %v2494 = vrot.slane %v2489, %v2493
  %v2495 = vlaneseq
  %v2496 = vshrl.u32 %v2495, 7
  %v2497 = vsub.s32 1, %v2496
  %v2498 = vrot.slane %v2489, %v2497
  %v2499 = vlaneseq
  %v2500 = vshrl.u32 %v2499, 7
  %v2501 = vsub.s32 2, %v2500
  %v2502 = vrot.slane %v2489, %v2501
  %v2503 = vlaneseq
  %v2504 = vshrl.u32 %v2503, 7
  %v2505 = vsub.s32 3, %v2504
  %v2506 = vrot.slane %v2489, %v2505
  %2507 = vrot.lane.b32.xlu0 %v2494, 123
  %v2508 = vpop.permute.xlu0 %2507
  %2509 = vrot.lane.b32.xlu0 %v2498, 123
  %v2510 = vpop.permute.xlu0 %2509
  %2511 = vrot.lane.b32.xlu0 %v2502, 123
  %v2512 = vpop.permute.xlu0 %2511
  %2513 = vrot.lane.b32.xlu0 %v2506, 123
  %v2514 = vpop.permute.xlu0 %2513
  %v2515 = vsel %vm485, %v2508, %v2510
  %v2516 = vsel %vm485, %v2510, %v2512
  %v2517 = vsel %vm485, %v2512, %v2514
  %v2523 = vmul.f32 %v2349, %v2508
  %v2524 = vmul.f32 %v2350, %v2515
  %v2525 = vmul.f32 %v2351, %v2516
  %v2526 = vmul.f32 %v2352, %v2517
  %v2527 = vmul.f32 %v2353, %v2514
  %2533 = vrot.lane.b32.xlu0 %v2523, 5
  %v2534 = vpop.permute.xlu0 %2533
  %2535 = vrot.lane.b32.xlu0 %v2524, 5
  %v2536 = vpop.permute.xlu0 %2535
  %2537 = vrot.lane.b32.xlu0 %v2525, 5
  %v2538 = vpop.permute.xlu0 %2537
  %2539 = vrot.lane.b32.xlu0 %v2526, 5
  %v2540 = vpop.permute.xlu0 %2539
  %2541 = vrot.lane.b32.xlu0 %v2527, 5
  %v2542 = vpop.permute.xlu0 %2541
  %v2543 = vsel %vm514, %v2534, %v2536
  %v2544 = vsel %vm514, %v2536, %v2538
  %v2545 = vsel %vm514, %v2538, %v2540
  %v2546 = vsel %vm514, %v2540, %v2542
  %v2551 = vadd.f32 %v2484, %v2543
  %v2552 = vadd.f32 %v2485, %v2544
  %v2553 = vadd.f32 %v2486, %v2545
  %v2554 = vadd.f32 %v2487, %v2546
  %s2555 = scalar_lea.vmem %s6, 132
  %v2556 = vld [vmem:[%s2555] sm:$0xf]
  %v2558 = vlaneseq
  %v2559 = vshrl.u32 %v2558, 7
  %v2560 = vsub.s32 0, %v2559
  %v2561 = vrot.slane %v2556, %v2560
  %v2562 = vlaneseq
  %v2563 = vshrl.u32 %v2562, 7
  %v2564 = vsub.s32 1, %v2563
  %v2565 = vrot.slane %v2556, %v2564
  %v2566 = vlaneseq
  %v2567 = vshrl.u32 %v2566, 7
  %v2568 = vsub.s32 2, %v2567
  %v2569 = vrot.slane %v2556, %v2568
  %v2570 = vlaneseq
  %v2571 = vshrl.u32 %v2570, 7
  %v2572 = vsub.s32 3, %v2571
  %v2573 = vrot.slane %v2556, %v2572
  %2574 = vrot.lane.b32.xlu0 %v2561, 124
  %v2575 = vpop.permute.xlu0 %2574
  %2576 = vrot.lane.b32.xlu0 %v2565, 124
  %v2577 = vpop.permute.xlu0 %2576
  %2578 = vrot.lane.b32.xlu0 %v2569, 124
  %v2579 = vpop.permute.xlu0 %2578
  %2580 = vrot.lane.b32.xlu0 %v2573, 124
  %v2581 = vpop.permute.xlu0 %2580
  %v2582 = vsel %vm554, %v2575, %v2577
  %v2583 = vsel %vm554, %v2577, %v2579
  %v2584 = vsel %vm554, %v2579, %v2581
  %v2590 = vmul.f32 %v2349, %v2575
  %v2591 = vmul.f32 %v2350, %v2582
  %v2592 = vmul.f32 %v2351, %v2583
  %v2593 = vmul.f32 %v2352, %v2584
  %v2594 = vmul.f32 %v2353, %v2581
  %2600 = vrot.lane.b32.xlu0 %v2590, 4
  %v2601 = vpop.permute.xlu0 %2600
  %2602 = vrot.lane.b32.xlu0 %v2591, 4
  %v2603 = vpop.permute.xlu0 %2602
  %2604 = vrot.lane.b32.xlu0 %v2592, 4
  %v2605 = vpop.permute.xlu0 %2604
  %2606 = vrot.lane.b32.xlu0 %v2593, 4
  %v2607 = vpop.permute.xlu0 %2606
  %2608 = vrot.lane.b32.xlu0 %v2594, 4
  %v2609 = vpop.permute.xlu0 %2608
  %v2610 = vsel %vm583, %v2601, %v2603
  %v2611 = vsel %vm583, %v2603, %v2605
  %v2612 = vsel %vm583, %v2605, %v2607
  %v2613 = vsel %vm583, %v2607, %v2609
  %v2618 = vadd.f32 %v2551, %v2610
  %v2619 = vadd.f32 %v2552, %v2611
  %v2620 = vadd.f32 %v2553, %v2612
  %v2621 = vadd.f32 %v2554, %v2613
  %s2622 = scalar_lea.vmem %s6, 136
  %v2623 = vld [vmem:[%s2622] sm:$0xf]
  %v2625 = vlaneseq
  %v2626 = vshrl.u32 %v2625, 7
  %v2627 = vsub.s32 0, %v2626
  %v2628 = vrot.slane %v2623, %v2627
  %v2629 = vlaneseq
  %v2630 = vshrl.u32 %v2629, 7
  %v2631 = vsub.s32 1, %v2630
  %v2632 = vrot.slane %v2623, %v2631
  %v2633 = vlaneseq
  %v2634 = vshrl.u32 %v2633, 7
  %v2635 = vsub.s32 2, %v2634
  %v2636 = vrot.slane %v2623, %v2635
  %v2637 = vlaneseq
  %v2638 = vshrl.u32 %v2637, 7
  %v2639 = vsub.s32 3, %v2638
  %v2640 = vrot.slane %v2623, %v2639
  %2641 = vrot.lane.b32.xlu0 %v2628, 125
  %v2642 = vpop.permute.xlu0 %2641
  %2643 = vrot.lane.b32.xlu0 %v2632, 125
  %v2644 = vpop.permute.xlu0 %2643
  %2645 = vrot.lane.b32.xlu0 %v2636, 125
  %v2646 = vpop.permute.xlu0 %2645
  %2647 = vrot.lane.b32.xlu0 %v2640, 125
  %v2648 = vpop.permute.xlu0 %2647
  %v2649 = vsel %vm623, %v2642, %v2644
  %v2650 = vsel %vm623, %v2644, %v2646
  %v2651 = vsel %vm623, %v2646, %v2648
  %v2657 = vmul.f32 %v2349, %v2642
  %v2658 = vmul.f32 %v2350, %v2649
  %v2659 = vmul.f32 %v2351, %v2650
  %v2660 = vmul.f32 %v2352, %v2651
  %v2661 = vmul.f32 %v2353, %v2648
  %2667 = vrot.lane.b32.xlu0 %v2657, 3
  %v2668 = vpop.permute.xlu0 %2667
  %2669 = vrot.lane.b32.xlu0 %v2658, 3
  %v2670 = vpop.permute.xlu0 %2669
  %2671 = vrot.lane.b32.xlu0 %v2659, 3
  %v2672 = vpop.permute.xlu0 %2671
  %2673 = vrot.lane.b32.xlu0 %v2660, 3
  %v2674 = vpop.permute.xlu0 %2673
  %2675 = vrot.lane.b32.xlu0 %v2661, 3
  %v2676 = vpop.permute.xlu0 %2675
  %v2677 = vsel %vm652, %v2668, %v2670
  %v2678 = vsel %vm652, %v2670, %v2672
  %v2679 = vsel %vm652, %v2672, %v2674
  %v2680 = vsel %vm652, %v2674, %v2676
  %v2685 = vadd.f32 %v2618, %v2677
  %v2686 = vadd.f32 %v2619, %v2678
  %v2687 = vadd.f32 %v2620, %v2679
  %v2688 = vadd.f32 %v2621, %v2680
  %s2689 = scalar_lea.vmem %s6, 140
  %v2690 = vld [vmem:[%s2689] sm:$0xf]
  %v2692 = vlaneseq
  %v2693 = vshrl.u32 %v2692, 7
  %v2694 = vsub.s32 0, %v2693
  %v2695 = vrot.slane %v2690, %v2694
  %v2696 = vlaneseq
  %v2697 = vshrl.u32 %v2696, 7
  %v2698 = vsub.s32 1, %v2697
  %v2699 = vrot.slane %v2690, %v2698
  %v2700 = vlaneseq
  %v2701 = vshrl.u32 %v2700, 7
  %v2702 = vsub.s32 2, %v2701
  %v2703 = vrot.slane %v2690, %v2702
  %v2704 = vlaneseq
  %v2705 = vshrl.u32 %v2704, 7
  %v2706 = vsub.s32 3, %v2705
  %v2707 = vrot.slane %v2690, %v2706
  %2708 = vrot.lane.b32.xlu0 %v2695, 126
  %v2709 = vpop.permute.xlu0 %2708
  %2710 = vrot.lane.b32.xlu0 %v2699, 126
  %v2711 = vpop.permute.xlu0 %2710
  %2712 = vrot.lane.b32.xlu0 %v2703, 126
  %v2713 = vpop.permute.xlu0 %2712
  %2714 = vrot.lane.b32.xlu0 %v2707, 126
  %v2715 = vpop.permute.xlu0 %2714
  %v2716 = vsel %vm692, %v2709, %v2711
  %v2717 = vsel %vm692, %v2711, %v2713
  %v2718 = vsel %vm692, %v2713, %v2715
  %v2724 = vmul.f32 %v2349, %v2709
  %v2725 = vmul.f32 %v2350, %v2716
  %v2726 = vmul.f32 %v2351, %v2717
  %v2727 = vmul.f32 %v2352, %v2718
  %v2728 = vmul.f32 %v2353, %v2715
  %2734 = vrot.lane.b32.xlu0 %v2724, 2
  %v2735 = vpop.permute.xlu0 %2734
  %2736 = vrot.lane.b32.xlu0 %v2725, 2
  %v2737 = vpop.permute.xlu0 %2736
  %2738 = vrot.lane.b32.xlu0 %v2726, 2
  %v2739 = vpop.permute.xlu0 %2738
  %2740 = vrot.lane.b32.xlu0 %v2727, 2
  %v2741 = vpop.permute.xlu0 %2740
  %2742 = vrot.lane.b32.xlu0 %v2728, 2
  %v2743 = vpop.permute.xlu0 %2742
  %v2744 = vsel %vm721, %v2735, %v2737
  %v2745 = vsel %vm721, %v2737, %v2739
  %v2746 = vsel %vm721, %v2739, %v2741
  %v2747 = vsel %vm721, %v2741, %v2743
  %v2752 = vadd.f32 %v2685, %v2744
  %v2753 = vadd.f32 %v2686, %v2745
  %v2754 = vadd.f32 %v2687, %v2746
  %v2755 = vadd.f32 %v2688, %v2747
  %s2756 = scalar_lea.vmem %s6, 144
  %v2757 = vld [vmem:[%s2756] sm:$0xf]
  %v2759 = vlaneseq
  %v2760 = vshrl.u32 %v2759, 7
  %v2761 = vsub.s32 0, %v2760
  %v2762 = vrot.slane %v2757, %v2761
  %v2763 = vlaneseq
  %v2764 = vshrl.u32 %v2763, 7
  %v2765 = vsub.s32 1, %v2764
  %v2766 = vrot.slane %v2757, %v2765
  %v2767 = vlaneseq
  %v2768 = vshrl.u32 %v2767, 7
  %v2769 = vsub.s32 2, %v2768
  %v2770 = vrot.slane %v2757, %v2769
  %v2771 = vlaneseq
  %v2772 = vshrl.u32 %v2771, 7
  %v2773 = vsub.s32 3, %v2772
  %v2774 = vrot.slane %v2757, %v2773
  %2775 = vrot.lane.b32.xlu0 %v2762, 127
  %v2776 = vpop.permute.xlu0 %2775
  %2777 = vrot.lane.b32.xlu0 %v2766, 127
  %v2778 = vpop.permute.xlu0 %2777
  %2779 = vrot.lane.b32.xlu0 %v2770, 127
  %v2780 = vpop.permute.xlu0 %2779
  %2781 = vrot.lane.b32.xlu0 %v2774, 127
  %v2782 = vpop.permute.xlu0 %2781
  %v2783 = vsel %vm761, %v2776, %v2778
  %v2784 = vsel %vm761, %v2778, %v2780
  %v2785 = vsel %vm761, %v2780, %v2782
  %v2791 = vmul.f32 %v2349, %v2776
  %v2792 = vmul.f32 %v2350, %v2783
  %v2793 = vmul.f32 %v2351, %v2784
  %v2794 = vmul.f32 %v2352, %v2785
  %v2795 = vmul.f32 %v2353, %v2782
  %2801 = vrot.lane.b32.xlu0 %v2791, 1
  %v2802 = vpop.permute.xlu0 %2801
  %2803 = vrot.lane.b32.xlu0 %v2792, 1
  %v2804 = vpop.permute.xlu0 %2803
  %2805 = vrot.lane.b32.xlu0 %v2793, 1
  %v2806 = vpop.permute.xlu0 %2805
  %2807 = vrot.lane.b32.xlu0 %v2794, 1
  %v2808 = vpop.permute.xlu0 %2807
  %2809 = vrot.lane.b32.xlu0 %v2795, 1
  %v2810 = vpop.permute.xlu0 %2809
  %v2811 = vsel %vm790, %v2802, %v2804
  %v2812 = vsel %vm790, %v2804, %v2806
  %v2813 = vsel %vm790, %v2806, %v2808
  %v2814 = vsel %vm790, %v2808, %v2810
  %v2819 = vadd.f32 %v2752, %v2811
  %v2820 = vadd.f32 %v2753, %v2812
  %v2821 = vadd.f32 %v2754, %v2813
  %v2822 = vadd.f32 %v2755, %v2814
  %v2823 = vld [vmem:[#allocation2 + $0x8] sm:$0xff]
  %v2824 = vld [vmem:[#allocation2 + $0x10] sm:$0xff]
  %v2825 = vld [vmem:[#allocation2 + $0x18] sm:$0xff]
  %v2826 = vld [vmem:[#allocation2 + $0x20] sm:$0xff]
  %v2827 = vld [vmem:[#allocation2 + $0x28] sm:$0xff]
  %s2828 = scalar_lea.vmem %s6, 152
  %v2829 = vld [vmem:[%s2828] sm:$0xf]
  %v2831 = vlaneseq
  %v2832 = vshrl.u32 %v2831, 7
  %v2833 = vsub.s32 0, %v2832
  %v2834 = vrot.slane %v2829, %v2833
  %v2835 = vlaneseq
  %v2836 = vshrl.u32 %v2835, 7
  %v2837 = vsub.s32 1, %v2836
  %v2838 = vrot.slane %v2829, %v2837
  %v2839 = vlaneseq
  %v2840 = vshrl.u32 %v2839, 7
  %v2841 = vsub.s32 2, %v2840
  %v2842 = vrot.slane %v2829, %v2841
  %v2843 = vlaneseq
  %v2844 = vshrl.u32 %v2843, 7
  %v2845 = vsub.s32 3, %v2844
  %v2846 = vrot.slane %v2829, %v2845
  %2847 = vrot.lane.b32.xlu0 %v2834, 1
  %v2848 = vpop.permute.xlu0 %2847
  %2849 = vrot.lane.b32.xlu0 %v2838, 1
  %v2850 = vpop.permute.xlu0 %2849
  %2851 = vrot.lane.b32.xlu0 %v2842, 1
  %v2852 = vpop.permute.xlu0 %2851
  %2853 = vrot.lane.b32.xlu0 %v2846, 1
  %v2854 = vpop.permute.xlu0 %2853
  %v2855 = vsel %vm790, %v2848, %v2850
  %v2856 = vsel %vm790, %v2850, %v2852
  %v2857 = vsel %vm790, %v2852, %v2854
  %v2863 = vmul.f32 %v2823, %v2848
  %v2864 = vmul.f32 %v2824, %v2855
  %v2865 = vmul.f32 %v2825, %v2856
  %v2866 = vmul.f32 %v2826, %v2857
  %v2867 = vmul.f32 %v2827, %v2854
  %2873 = vrot.lane.b32.xlu0 %v2863, 127
  %v2874 = vpop.permute.xlu0 %2873
  %2875 = vrot.lane.b32.xlu0 %v2864, 127
  %v2876 = vpop.permute.xlu0 %2875
  %2877 = vrot.lane.b32.xlu0 %v2865, 127
  %v2878 = vpop.permute.xlu0 %2877
  %2879 = vrot.lane.b32.xlu0 %v2866, 127
  %v2880 = vpop.permute.xlu0 %2879
  %2881 = vrot.lane.b32.xlu0 %v2867, 127
  %v2882 = vpop.permute.xlu0 %2881
  %v2883 = vsel %vm761, %v2874, %v2876
  %v2884 = vsel %vm761, %v2876, %v2878
  %v2885 = vsel %vm761, %v2878, %v2880
  %v2886 = vsel %vm761, %v2880, %v2882
  %v2891 = vadd.f32 %v2819, %v2883
  %v2892 = vadd.f32 %v2820, %v2884
  %v2893 = vadd.f32 %v2821, %v2885
  %v2894 = vadd.f32 %v2822, %v2886
  %s2895 = scalar_lea.vmem %s6, 156
  %v2896 = vld [vmem:[%s2895] sm:$0xf]
  %v2898 = vlaneseq
  %v2899 = vshrl.u32 %v2898, 7
  %v2900 = vsub.s32 0, %v2899
  %v2901 = vrot.slane %v2896, %v2900
  %v2902 = vlaneseq
  %v2903 = vshrl.u32 %v2902, 7
  %v2904 = vsub.s32 1, %v2903
  %v2905 = vrot.slane %v2896, %v2904
  %v2906 = vlaneseq
  %v2907 = vshrl.u32 %v2906, 7
  %v2908 = vsub.s32 2, %v2907
  %v2909 = vrot.slane %v2896, %v2908
  %v2910 = vlaneseq
  %v2911 = vshrl.u32 %v2910, 7
  %v2912 = vsub.s32 3, %v2911
  %v2913 = vrot.slane %v2896, %v2912
  %2914 = vrot.lane.b32.xlu0 %v2901, 2
  %v2915 = vpop.permute.xlu0 %2914
  %2916 = vrot.lane.b32.xlu0 %v2905, 2
  %v2917 = vpop.permute.xlu0 %2916
  %2918 = vrot.lane.b32.xlu0 %v2909, 2
  %v2919 = vpop.permute.xlu0 %2918
  %2920 = vrot.lane.b32.xlu0 %v2913, 2
  %v2921 = vpop.permute.xlu0 %2920
  %v2922 = vsel %vm721, %v2915, %v2917
  %v2923 = vsel %vm721, %v2917, %v2919
  %v2924 = vsel %vm721, %v2919, %v2921
  %v2930 = vmul.f32 %v2823, %v2915
  %v2931 = vmul.f32 %v2824, %v2922
  %v2932 = vmul.f32 %v2825, %v2923
  %v2933 = vmul.f32 %v2826, %v2924
  %v2934 = vmul.f32 %v2827, %v2921
  %2940 = vrot.lane.b32.xlu0 %v2930, 126
  %v2941 = vpop.permute.xlu0 %2940
  %2942 = vrot.lane.b32.xlu0 %v2931, 126
  %v2943 = vpop.permute.xlu0 %2942
  %2944 = vrot.lane.b32.xlu0 %v2932, 126
  %v2945 = vpop.permute.xlu0 %2944
  %2946 = vrot.lane.b32.xlu0 %v2933, 126
  %v2947 = vpop.permute.xlu0 %2946
  %2948 = vrot.lane.b32.xlu0 %v2934, 126
  %v2949 = vpop.permute.xlu0 %2948
  %v2950 = vsel %vm692, %v2941, %v2943
  %v2951 = vsel %vm692, %v2943, %v2945
  %v2952 = vsel %vm692, %v2945, %v2947
  %v2953 = vsel %vm692, %v2947, %v2949
  %v2958 = vadd.f32 %v2891, %v2950
  %v2959 = vadd.f32 %v2892, %v2951
  %v2960 = vadd.f32 %v2893, %v2952
  %v2961 = vadd.f32 %v2894, %v2953
  %s2962 = scalar_lea.vmem %s6, 160
  %v2963 = vld [vmem:[%s2962] sm:$0xf]
  %v2965 = vlaneseq
  %v2966 = vshrl.u32 %v2965, 7
  %v2967 = vsub.s32 0, %v2966
  %v2968 = vrot.slane %v2963, %v2967
  %v2969 = vlaneseq
  %v2970 = vshrl.u32 %v2969, 7
  %v2971 = vsub.s32 1, %v2970
  %v2972 = vrot.slane %v2963, %v2971
  %v2973 = vlaneseq
  %v2974 = vshrl.u32 %v2973, 7
  %v2975 = vsub.s32 2, %v2974
  %v2976 = vrot.slane %v2963, %v2975
  %v2977 = vlaneseq
  %v2978 = vshrl.u32 %v2977, 7
  %v2979 = vsub.s32 3, %v2978
  %v2980 = vrot.slane %v2963, %v2979
  %2981 = vrot.lane.b32.xlu0 %v2968, 3
  %v2982 = vpop.permute.xlu0 %2981
  %2983 = vrot.lane.b32.xlu0 %v2972, 3
  %v2984 = vpop.permute.xlu0 %2983
  %2985 = vrot.lane.b32.xlu0 %v2976, 3
  %v2986 = vpop.permute.xlu0 %2985
  %2987 = vrot.lane.b32.xlu0 %v2980, 3
  %v2988 = vpop.permute.xlu0 %2987
  %v2989 = vsel %vm652, %v2982, %v2984
  %v2990 = vsel %vm652, %v2984, %v2986
  %v2991 = vsel %vm652, %v2986, %v2988
  %v2997 = vmul.f32 %v2823, %v2982
  %v2998 = vmul.f32 %v2824, %v2989
  %v2999 = vmul.f32 %v2825, %v2990
  %v3000 = vmul.f32 %v2826, %v2991
  %v3001 = vmul.f32 %v2827, %v2988
  %3007 = vrot.lane.b32.xlu0 %v2997, 125
  %v3008 = vpop.permute.xlu0 %3007
  %3009 = vrot.lane.b32.xlu0 %v2998, 125
  %v3010 = vpop.permute.xlu0 %3009
  %3011 = vrot.lane.b32.xlu0 %v2999, 125
  %v3012 = vpop.permute.xlu0 %3011
  %3013 = vrot.lane.b32.xlu0 %v3000, 125
  %v3014 = vpop.permute.xlu0 %3013
  %3015 = vrot.lane.b32.xlu0 %v3001, 125
  %v3016 = vpop.permute.xlu0 %3015
  %v3017 = vsel %vm623, %v3008, %v3010
  %v3018 = vsel %vm623, %v3010, %v3012
  %v3019 = vsel %vm623, %v3012, %v3014
  %v3020 = vsel %vm623, %v3014, %v3016
  %v3025 = vadd.f32 %v2958, %v3017
  %v3026 = vadd.f32 %v2959, %v3018
  %v3027 = vadd.f32 %v2960, %v3019
  %v3028 = vadd.f32 %v2961, %v3020
  %s3029 = scalar_lea.vmem %s6, 164
  %v3030 = vld [vmem:[%s3029] sm:$0xf]
  %v3032 = vlaneseq
  %v3033 = vshrl.u32 %v3032, 7
  %v3034 = vsub.s32 0, %v3033
  %v3035 = vrot.slane %v3030, %v3034
  %v3036 = vlaneseq
  %v3037 = vshrl.u32 %v3036, 7
  %v3038 = vsub.s32 1, %v3037
  %v3039 = vrot.slane %v3030, %v3038
  %v3040 = vlaneseq
  %v3041 = vshrl.u32 %v3040, 7
  %v3042 = vsub.s32 2, %v3041
  %v3043 = vrot.slane %v3030, %v3042
  %v3044 = vlaneseq
  %v3045 = vshrl.u32 %v3044, 7
  %v3046 = vsub.s32 3, %v3045
  %v3047 = vrot.slane %v3030, %v3046
  %3048 = vrot.lane.b32.xlu0 %v3035, 4
  %v3049 = vpop.permute.xlu0 %3048
  %3050 = vrot.lane.b32.xlu0 %v3039, 4
  %v3051 = vpop.permute.xlu0 %3050
  %3052 = vrot.lane.b32.xlu0 %v3043, 4
  %v3053 = vpop.permute.xlu0 %3052
  %3054 = vrot.lane.b32.xlu0 %v3047, 4
  %v3055 = vpop.permute.xlu0 %3054
  %v3056 = vsel %vm583, %v3049, %v3051
  %v3057 = vsel %vm583, %v3051, %v3053
  %v3058 = vsel %vm583, %v3053, %v3055
  %v3064 = vmul.f32 %v2823, %v3049
  %v3065 = vmul.f32 %v2824, %v3056
  %v3066 = vmul.f32 %v2825, %v3057
  %v3067 = vmul.f32 %v2826, %v3058
  %v3068 = vmul.f32 %v2827, %v3055
  %3074 = vrot.lane.b32.xlu0 %v3064, 124
  %v3075 = vpop.permute.xlu0 %3074
  %3076 = vrot.lane.b32.xlu0 %v3065, 124
  %v3077 = vpop.permute.xlu0 %3076
  %3078 = vrot.lane.b32.xlu0 %v3066, 124
  %v3079 = vpop.permute.xlu0 %3078
  %3080 = vrot.lane.b32.xlu0 %v3067, 124
  %v3081 = vpop.permute.xlu0 %3080
  %3082 = vrot.lane.b32.xlu0 %v3068, 124
  %v3083 = vpop.permute.xlu0 %3082
  %v3084 = vsel %vm554, %v3075, %v3077
  %v3085 = vsel %vm554, %v3077, %v3079
  %v3086 = vsel %vm554, %v3079, %v3081
  %v3087 = vsel %vm554, %v3081, %v3083
  %v3092 = vadd.f32 %v3025, %v3084
  %v3093 = vadd.f32 %v3026, %v3085
  %v3094 = vadd.f32 %v3027, %v3086
  %v3095 = vadd.f32 %v3028, %v3087
  %s3096 = scalar_lea.vmem %s6, 168
  %v3097 = vld [vmem:[%s3096] sm:$0xf]
  %v3099 = vlaneseq
  %v3100 = vshrl.u32 %v3099, 7
  %v3101 = vsub.s32 0, %v3100
  %v3102 = vrot.slane %v3097, %v3101
  %v3103 = vlaneseq
  %v3104 = vshrl.u32 %v3103, 7
  %v3105 = vsub.s32 1, %v3104
  %v3106 = vrot.slane %v3097, %v3105
  %v3107 = vlaneseq
  %v3108 = vshrl.u32 %v3107, 7
  %v3109 = vsub.s32 2, %v3108
  %v3110 = vrot.slane %v3097, %v3109
  %v3111 = vlaneseq
  %v3112 = vshrl.u32 %v3111, 7
  %v3113 = vsub.s32 3, %v3112
  %v3114 = vrot.slane %v3097, %v3113
  %3115 = vrot.lane.b32.xlu0 %v3102, 5
  %v3116 = vpop.permute.xlu0 %3115
  %3117 = vrot.lane.b32.xlu0 %v3106, 5
  %v3118 = vpop.permute.xlu0 %3117
  %3119 = vrot.lane.b32.xlu0 %v3110, 5
  %v3120 = vpop.permute.xlu0 %3119
  %3121 = vrot.lane.b32.xlu0 %v3114, 5
  %v3122 = vpop.permute.xlu0 %3121
  %v3123 = vsel %vm514, %v3116, %v3118
  %v3124 = vsel %vm514, %v3118, %v3120
  %v3125 = vsel %vm514, %v3120, %v3122
  %v3131 = vmul.f32 %v2823, %v3116
  %v3132 = vmul.f32 %v2824, %v3123
  %v3133 = vmul.f32 %v2825, %v3124
  %v3134 = vmul.f32 %v2826, %v3125
  %v3135 = vmul.f32 %v2827, %v3122
  %3141 = vrot.lane.b32.xlu0 %v3131, 123
  %v3142 = vpop.permute.xlu0 %3141
  %3143 = vrot.lane.b32.xlu0 %v3132, 123
  %v3144 = vpop.permute.xlu0 %3143
  %3145 = vrot.lane.b32.xlu0 %v3133, 123
  %v3146 = vpop.permute.xlu0 %3145
  %3147 = vrot.lane.b32.xlu0 %v3134, 123
  %v3148 = vpop.permute.xlu0 %3147
  %3149 = vrot.lane.b32.xlu0 %v3135, 123
  %v3150 = vpop.permute.xlu0 %3149
  %v3151 = vsel %vm485, %v3142, %v3144
  %v3152 = vsel %vm485, %v3144, %v3146
  %v3153 = vsel %vm485, %v3146, %v3148
  %v3154 = vsel %vm485, %v3148, %v3150
  %v3159 = vadd.f32 %v3092, %v3151
  %v3160 = vadd.f32 %v3093, %v3152
  %v3161 = vadd.f32 %v3094, %v3153
  %v3162 = vadd.f32 %v3095, %v3154
  %s3163 = scalar_lea.vmem %s6, 172
  %v3164 = vld [vmem:[%s3163] sm:$0xf]
  %v3166 = vlaneseq
  %v3167 = vshrl.u32 %v3166, 7
  %v3168 = vsub.s32 0, %v3167
  %v3169 = vrot.slane %v3164, %v3168
  %v3170 = vlaneseq
  %v3171 = vshrl.u32 %v3170, 7
  %v3172 = vsub.s32 1, %v3171
  %v3173 = vrot.slane %v3164, %v3172
  %v3174 = vlaneseq
  %v3175 = vshrl.u32 %v3174, 7
  %v3176 = vsub.s32 2, %v3175
  %v3177 = vrot.slane %v3164, %v3176
  %v3178 = vlaneseq
  %v3179 = vshrl.u32 %v3178, 7
  %v3180 = vsub.s32 3, %v3179
  %v3181 = vrot.slane %v3164, %v3180
  %3182 = vrot.lane.b32.xlu0 %v3169, 6
  %v3183 = vpop.permute.xlu0 %3182
  %3184 = vrot.lane.b32.xlu0 %v3173, 6
  %v3185 = vpop.permute.xlu0 %3184
  %3186 = vrot.lane.b32.xlu0 %v3177, 6
  %v3187 = vpop.permute.xlu0 %3186
  %3188 = vrot.lane.b32.xlu0 %v3181, 6
  %v3189 = vpop.permute.xlu0 %3188
  %v3190 = vsel %vm445, %v3183, %v3185
  %v3191 = vsel %vm445, %v3185, %v3187
  %v3192 = vsel %vm445, %v3187, %v3189
  %v3198 = vmul.f32 %v2823, %v3183
  %v3199 = vmul.f32 %v2824, %v3190
  %v3200 = vmul.f32 %v2825, %v3191
  %v3201 = vmul.f32 %v2826, %v3192
  %v3202 = vmul.f32 %v2827, %v3189
  %3208 = vrot.lane.b32.xlu0 %v3198, 122
  %v3209 = vpop.permute.xlu0 %3208
  %3210 = vrot.lane.b32.xlu0 %v3199, 122
  %v3211 = vpop.permute.xlu0 %3210
  %3212 = vrot.lane.b32.xlu0 %v3200, 122
  %v3213 = vpop.permute.xlu0 %3212
  %3214 = vrot.lane.b32.xlu0 %v3201, 122
  %v3215 = vpop.permute.xlu0 %3214
  %3216 = vrot.lane.b32.xlu0 %v3202, 122
  %v3217 = vpop.permute.xlu0 %3216
  %v3218 = vsel %vm416, %v3209, %v3211
  %v3219 = vsel %vm416, %v3211, %v3213
  %v3220 = vsel %vm416, %v3213, %v3215
  %v3221 = vsel %vm416, %v3215, %v3217
  %v3226 = vadd.f32 %v3159, %v3218
  %v3227 = vadd.f32 %v3160, %v3219
  %v3228 = vadd.f32 %v3161, %v3220
  %v3229 = vadd.f32 %v3162, %v3221
  %s3230 = scalar_lea.vmem %s6, 176
  %v3231 = vld [vmem:[%s3230] sm:$0xf]
  %v3233 = vlaneseq
  %v3234 = vshrl.u32 %v3233, 7
  %v3235 = vsub.s32 0, %v3234
  %v3236 = vrot.slane %v3231, %v3235
  %v3237 = vlaneseq
  %v3238 = vshrl.u32 %v3237, 7
  %v3239 = vsub.s32 1, %v3238
  %v3240 = vrot.slane %v3231, %v3239
  %v3241 = vlaneseq
  %v3242 = vshrl.u32 %v3241, 7
  %v3243 = vsub.s32 2, %v3242
  %v3244 = vrot.slane %v3231, %v3243
  %v3245 = vlaneseq
  %v3246 = vshrl.u32 %v3245, 7
  %v3247 = vsub.s32 3, %v3246
  %v3248 = vrot.slane %v3231, %v3247
  %3249 = vrot.lane.b32.xlu0 %v3236, 7
  %v3250 = vpop.permute.xlu0 %3249
  %3251 = vrot.lane.b32.xlu0 %v3240, 7
  %v3252 = vpop.permute.xlu0 %3251
  %3253 = vrot.lane.b32.xlu0 %v3244, 7
  %v3254 = vpop.permute.xlu0 %3253
  %3255 = vrot.lane.b32.xlu0 %v3248, 7
  %v3256 = vpop.permute.xlu0 %3255
  %v3257 = vsel %vm376, %v3250, %v3252
  %v3258 = vsel %vm376, %v3252, %v3254
  %v3259 = vsel %vm376, %v3254, %v3256
  %v3265 = vmul.f32 %v2823, %v3250
  %v3266 = vmul.f32 %v2824, %v3257
  %v3267 = vmul.f32 %v2825, %v3258
  %v3268 = vmul.f32 %v2826, %v3259
  %v3269 = vmul.f32 %v2827, %v3256
  %3275 = vrot.lane.b32.xlu0 %v3265, 121
  %v3276 = vpop.permute.xlu0 %3275
  %3277 = vrot.lane.b32.xlu0 %v3266, 121
  %v3278 = vpop.permute.xlu0 %3277
  %3279 = vrot.lane.b32.xlu0 %v3267, 121
  %v3280 = vpop.permute.xlu0 %3279
  %3281 = vrot.lane.b32.xlu0 %v3268, 121
  %v3282 = vpop.permute.xlu0 %3281
  %3283 = vrot.lane.b32.xlu0 %v3269, 121
  %v3284 = vpop.permute.xlu0 %3283
  %v3285 = vsel %vm347, %v3276, %v3278
  %v3286 = vsel %vm347, %v3278, %v3280
  %v3287 = vsel %vm347, %v3280, %v3282
  %v3288 = vsel %vm347, %v3282, %v3284
  %v3293 = vadd.f32 %v3226, %v3285
  %v3294 = vadd.f32 %v3227, %v3286
  %v3295 = vadd.f32 %v3228, %v3287
  %v3296 = vadd.f32 %v3229, %v3288
  %v3297 = vmax.f32 %v3293, 0.0
  %v3298 = vmax.f32 %v3294, 0.0
  %v3299 = vmax.f32 %v3295, 0.0
  %v3300 = vmax.f32 %v3296, 0.0
  %3301 = vst [vmem:[#allocation2 + $0x8] sm:$0xff] %v3297
  %3302 = vst [vmem:[#allocation2 + $0x10] sm:$0xff] %v3298
  %3303 = vst [vmem:[#allocation2 + $0x18] sm:$0xff] %v3299
  %3304 = vst [vmem:[#allocation2 + $0x20] sm:$0xff] %v3300
  %v3305 = vld [vmem:[#allocation2] sm:$0xff]
  %v3306 = vld [vmem:[#allocation2 + $0x8] sm:$0xff]
  %v3307 = vld [vmem:[#allocation2 + $0x10] sm:$0xff]
  %v3308 = vld [vmem:[#allocation2 + $0x18] sm:$0xff]
  %v3309 = vld [vmem:[#allocation2 + $0x20] sm:$0xff]
  %v3310 = vld [vmem:[%s5] sm:$0xf]
  %v3312 = vlaneseq
  %v3313 = vshrl.u32 %v3312, 7
  %v3314 = vsub.s32 0, %v3313
  %v3315 = vrot.slane %v3310, %v3314
  %v3316 = vlaneseq
  %v3317 = vshrl.u32 %v3316, 7
  %v3318 = vsub.s32 1, %v3317
  %v3319 = vrot.slane %v3310, %v3318
  %v3320 = vlaneseq
  %v3321 = vshrl.u32 %v3320, 7
  %v3322 = vsub.s32 2, %v3321
  %v3323 = vrot.slane %v3310, %v3322
  %v3324 = vlaneseq
  %v3325 = vshrl.u32 %v3324, 7
  %v3326 = vsub.s32 3, %v3325
  %v3327 = vrot.slane %v3310, %v3326
  %3328 = vrot.lane.b32.xlu0 %v3315, 112
  %v3329 = vpop.permute.xlu0 %3328
  %3330 = vrot.lane.b32.xlu0 %v3319, 112
  %v3331 = vpop.permute.xlu0 %3330
  %3332 = vrot.lane.b32.xlu0 %v3323, 112
  %v3333 = vpop.permute.xlu0 %3332
  %3334 = vrot.lane.b32.xlu0 %v3327, 112
  %v3335 = vpop.permute.xlu0 %3334
  %v3336 = vsel %vm52, %v3329, %v3331
  %v3337 = vsel %vm52, %v3331, %v3333
  %v3338 = vsel %vm52, %v3333, %v3335
  %v3344 = vmul.f32 %v3305, %v3329
  %v3345 = vmul.f32 %v3306, %v3336
  %v3346 = vmul.f32 %v3307, %v3337
  %v3347 = vmul.f32 %v3308, %v3338
  %v3348 = vmul.f32 %v3309, %v3335
  %v3349 = vld [vmem:[#allocation2 + $0x8] sm:$0xff]
  %v3350 = vld [vmem:[#allocation2 + $0x10] sm:$0xff]
  %v3351 = vld [vmem:[#allocation2 + $0x18] sm:$0xff]
  %v3352 = vld [vmem:[#allocation2 + $0x20] sm:$0xff]
  %v3353 = vld [vmem:[#allocation2 + $0x28] sm:$0xff]
  %s3354 = scalar_lea.vmem %s5, 8
  %v3355 = vld [vmem:[%s3354] sm:$0xf]
  %v3357 = vlaneseq
  %v3358 = vshrl.u32 %v3357, 7
  %v3359 = vsub.s32 0, %v3358
  %v3360 = vrot.slane %v3355, %v3359
  %v3361 = vlaneseq
  %v3362 = vshrl.u32 %v3361, 7
  %v3363 = vsub.s32 1, %v3362
  %v3364 = vrot.slane %v3355, %v3363
  %v3365 = vlaneseq
  %v3366 = vshrl.u32 %v3365, 7
  %v3367 = vsub.s32 2, %v3366
  %v3368 = vrot.slane %v3355, %v3367
  %v3369 = vlaneseq
  %v3370 = vshrl.u32 %v3369, 7
  %v3371 = vsub.s32 3, %v3370
  %v3372 = vrot.slane %v3355, %v3371
  %3373 = vrot.lane.b32.xlu0 %v3360, 16
  %v3374 = vpop.permute.xlu0 %3373
  %3375 = vrot.lane.b32.xlu0 %v3364, 16
  %v3376 = vpop.permute.xlu0 %3375
  %3377 = vrot.lane.b32.xlu0 %v3368, 16
  %v3378 = vpop.permute.xlu0 %3377
  %3379 = vrot.lane.b32.xlu0 %v3372, 16
  %v3380 = vpop.permute.xlu0 %3379
  %vm3381 = vcmask 130048
  %v3382 = vsel %vm3381, %v3374, %v3376
  %v3383 = vsel %vm3381, %v3376, %v3378
  %v3384 = vsel %vm3381, %v3378, %v3380
  %v3390 = vmul.f32 %v3349, %v3374
  %v3391 = vmul.f32 %v3350, %v3382
  %v3392 = vmul.f32 %v3351, %v3383
  %v3393 = vmul.f32 %v3352, %v3384
  %v3394 = vmul.f32 %v3353, %v3380
  %3399 = vrot.lane.b32.xlu0 %v3297, 112
  %v3400 = vpop.permute.xlu0 %3399
  %3401 = vrot.lane.b32.xlu0 %v3298, 112
  %v3402 = vpop.permute.xlu0 %3401
  %3403 = vrot.lane.b32.xlu0 %v3299, 112
  %v3404 = vpop.permute.xlu0 %3403
  %3405 = vrot.lane.b32.xlu0 %v3300, 112
  %v3406 = vpop.permute.xlu0 %3405
  %v3407 = vsel %vm52, %v3400, %v3402
  %v3408 = vsel %vm52, %v3402, %v3404
  %v3409 = vsel %vm52, %v3404, %v3406
  %3420 = vrot.lane.b32.xlu0 %v3390, 96
  %v3421 = vpop.permute.xlu0 %3420
  %3422 = vrot.lane.b32.xlu0 %v3391, 96
  %v3423 = vpop.permute.xlu0 %3422
  %3424 = vrot.lane.b32.xlu0 %v3392, 96
  %v3425 = vpop.permute.xlu0 %3424
  %3426 = vrot.lane.b32.xlu0 %v3393, 96
  %v3427 = vpop.permute.xlu0 %3426
  %3428 = vrot.lane.b32.xlu0 %v3394, 96
  %v3429 = vpop.permute.xlu0 %3428
  %v3430 = vsel %vm76, %v3421, %v3423
  %v3431 = vsel %vm76, %v3423, %v3425
  %v3432 = vsel %vm76, %v3425, %v3427
  %v3433 = vsel %vm76, %v3427, %v3429
  %v3439 = vld [vmem:[%s3] sm:$0xf]
  %v3440 = vpack.c.bf16 %v3400, %v3344
  %v3441 = vpack.c.bf16 %v3407, %v3345
  %v3442 = vpack.c.bf16 %v3408, %v3346
  %v3443 = vpack.c.bf16 %v3409, %v3347
  %v3444 = vpack.c.bf16 %v3406, %v3348
  %v3445 = vpack.c.bf16 %v3421, %v3421
  %v3446 = vpack.c.bf16 %v3430, %v3430
  %v3447 = vpack.c.bf16 %v3431, %v3431
  %v3448 = vpack.c.bf16 %v3432, %v3432
  %v3449 = vpack.c.bf16 %v3433, %v3433
  %v3450 = vld [vmem:[%s4] sm:$0xff]
  %3452 = vset.pattern.permute.xlu0 0
  %3453 = vperm.xlu0 %3452, %v3450
  %v3454 = vpop.permute.xlu0 %3453
  %3466 = vrot.lane.b32.xlu0 %v3440, 16
  %v3467 = vpop.permute.xlu0 %3466
  %3468 = vrot.lane.b32.xlu0 %v3441, 16
  %v3469 = vpop.permute.xlu0 %3468
  %3470 = vrot.lane.b32.xlu0 %v3442, 16
  %v3471 = vpop.permute.xlu0 %3470
  %3472 = vrot.lane.b32.xlu0 %v3443, 16
  %v3473 = vpop.permute.xlu0 %3472
  %3474 = vrot.lane.b32.xlu0 %v3444, 16
  %v3475 = vpop.permute.xlu0 %3474
  %3476 = vrot.lane.b32.xlu0 %v3445, 16
  %v3477 = vpop.permute.xlu0 %3476
  %3478 = vrot.lane.b32.xlu0 %v3446, 16
  %v3479 = vpop.permute.xlu0 %3478
  %3480 = vrot.lane.b32.xlu0 %v3447, 16
  %v3481 = vpop.permute.xlu0 %3480
  %3482 = vrot.lane.b32.xlu0 %v3448, 16
  %v3483 = vpop.permute.xlu0 %3482
  %3484 = vrot.lane.b32.xlu0 %v3449, 16
  %v3485 = vpop.permute.xlu0 %3484
  %vm3486 = vcmask 130048
  %v3487 = vsel %vm3486, %v3467, %v3469
  %v3488 = vsel %vm3486, %v3469, %v3471
  %v3489 = vsel %vm3486, %v3471, %v3473
  %v3490 = vsel %vm3486, %v3473, %v3475
  %v3491 = vsel %vm3486, %v3477, %v3479
  %v3492 = vsel %vm3486, %v3479, %v3481
  %v3493 = vsel %vm3486, %v3481, %v3483
  %v3494 = vsel %vm3486, %v3483, %v3485
  %v3500 = vsel %vm118, %v3439, 0
  %v3503 = vsel %vm122, %v3491, 0
  %v3506 = vsel %vm122, %v3492, 0
  %v3509 = vsel %vm122, %v3493, 0
  %v3512 = vsel %vm122, %v3494, 0
  %3514 = vmatprep.subr.bf16.mxu0 %v3488
  %3515 = vmatpush1.bf16.msra.mxu0 %v3487
  %3516 = vmatprep.subr.bf16.mxu0 %v3506
  %3517 = vmatpush1.bf16.msra.mxu0 %v3503
  %3518 = vmatprep.subr.bf16.mxu0 0
  %3519 = vmatpush1.bf16.msra.mxu0 0
  %3520 = vmatprep.subr.bf16.mxu0 0
  %3521 = vmatpush1.bf16.msra.mxu0 0
  %3522 = vmatprep.subr.bf16.mxu0 0
  %3523 = vmatpush1.bf16.msra.mxu0 0
  %3524 = vmatprep.subr.bf16.mxu0 0
  %3525 = vmatpush1.bf16.msra.mxu0 0
  %3526 = vmatprep.subr.bf16.mxu0 0
  %3527 = vmatpush1.bf16.msra.mxu0 0
  %3528 = vmatprep.subr.bf16.mxu0 0
  %3529 = vmatpush1.bf16.msra.mxu0 0
  %3530 = vmatprep.subr.bf16.mxu0 0
  %3531 = vmatpush1.bf16.msra.mxu0 0
  %3532 = vmatprep.subr.bf16.mxu0 0
  %3533 = vmatpush1.bf16.msra.mxu0 0
  %3534 = vmatprep.subr.bf16.mxu0 0
  %3535 = vmatpush1.bf16.msra.mxu0 0
  %3536 = vmatprep.subr.bf16.mxu0 0
  %3537 = vmatpush1.bf16.msra.mxu0 0
  %3538 = vmatprep.subr.bf16.mxu0 0
  %3539 = vmatpush1.bf16.msra.mxu0 0
  %3540 = vmatprep.subr.bf16.mxu0 0
  %3541 = vmatpush1.bf16.msra.mxu0 0
  %3542 = vmatprep.subr.bf16.mxu0 0
  %3543 = vmatpush1.bf16.msra.mxu0 0
  %3544 = vmatprep.subr.bf16.mxu0 0
  %3545 = vmatpush1.bf16.msra.mxu0 0
  %3546 = vmatprep.mubr.bf16.mxu0 0
  %3547 = vmatmul.mubr.bf16.gmra.mrb[0].mxu0 %v3500
  %v3548 = vpop.f32.mrb[0].mxu0
  %v3549 = vadd.f32 %v3454, %v3548
  %v3550 = vpop.f32.mrb[0].mxu0
  %v3551 = vadd.f32 %v3454, %v3550
  %v3552 = vpop.f32.mrb[0].mxu0
  %v3553 = vpop.f32.mrb[0].mxu0
  %3554 = vdwg.mxu0
  %3555 = vmatprep.subr.bf16.mxu0 %v3490
  %3556 = vmatpush1.bf16.msra.mxu0 %v3489
  %3557 = vmatprep.subr.bf16.mxu0 %v3512
  %3558 = vmatpush1.bf16.msra.mxu0 %v3509
  %3559 = vmatprep.subr.bf16.mxu0 0
  %3560 = vmatpush1.bf16.msra.mxu0 0
  %3561 = vmatprep.subr.bf16.mxu0 0
  %3562 = vmatpush1.bf16.msra.mxu0 0
  %3563 = vmatprep.subr.bf16.mxu0 0
  %3564 = vmatpush1.bf16.msra.mxu0 0
  %3565 = vmatprep.subr.bf16.mxu0 0
  %3566 = vmatpush1.bf16.msra.mxu0 0
  %3567 = vmatprep.subr.bf16.mxu0 0
  %3568 = vmatpush1.bf16.msra.mxu0 0
  %3569 = vmatprep.subr.bf16.mxu0 0
  %3570 = vmatpush1.bf16.msra.mxu0 0
  %3571 = vmatprep.subr.bf16.mxu0 0
  %3572 = vmatpush1.bf16.msra.mxu0 0
  %3573 = vmatprep.subr.bf16.mxu0 0
  %3574 = vmatpush1.bf16.msra.mxu0 0
  %3575 = vmatprep.subr.bf16.mxu0 0
  %3576 = vmatpush1.bf16.msra.mxu0 0
  %3577 = vmatprep.subr.bf16.mxu0 0
  %3578 = vmatpush1.bf16.msra.mxu0 0
  %3579 = vmatprep.subr.bf16.mxu0 0
  %3580 = vmatpush1.bf16.msra.mxu0 0
  %3581 = vmatprep.subr.bf16.mxu0 0
  %3582 = vmatpush1.bf16.msra.mxu0 0
  %3583 = vmatprep.subr.bf16.mxu0 0
  %3584 = vmatpush1.bf16.msra.mxu0 0
  %3585 = vmatprep.subr.bf16.mxu0 0
  %3586 = vmatpush1.bf16.msra.mxu0 0
  %3587 = vmatprep.mubr.bf16.mxu0 0
  %3588 = vmatmul.mubr.bf16.gmra.mrb[0].mxu0 %v3500
  %v3589 = vpop.f32.mrb[0].mxu0
  %v3590 = vadd.f32 %v3454, %v3589
  %v3591 = vpop.f32.mrb[0].mxu0
  %v3592 = vadd.f32 %v3454, %v3591
  %v3593 = vpop.f32.mrb[0].mxu0
  %v3594 = vpop.f32.mrb[0].mxu0
  %3595 = vdwg.mxu0
  %v3596 = vadd.f32 %v3549, %v3297
  %v3597 = vadd.f32 %v3551, %v3298
  %v3598 = vadd.f32 %v3590, %v3299
  %v3599 = vadd.f32 %v3592, %v3300
  %v3600 = vmax.f32 %v3596, 0.0
  %v3601 = vmax.f32 %v3597, 0.0
  %v3602 = vmax.f32 %v3598, 0.0
  %v3603 = vmax.f32 %v3599, 0.0
  %v3604 = vadd.f32 %v3600, %v3601
  %v3605 = vadd.f32 %v3604, %v3602
  %v3606 = vadd.f32 %v3605, %v3603
  %3607 = vadd.xlane.f32.xlu0 %v3606
  %v3608 = vpop.xlane.xlu0 %3607
  %v3609 = vmul.f32 %v3608, 0.001953125
  %v3610 = vsub.f32 %v3600, %v3609
  %v3611 = vsub.f32 %v3601, %v3609
  %v3612 = vsub.f32 %v3602, %v3609
  %v3613 = vsub.f32 %v3603, %v3609
  %v3614 = vmul.f32 %v3610, %v3610
  %v3615 = vmul.f32 %v3611, %v3611
  %v3616 = vmul.f32 %v3612, %v3612
  %v3617 = vmul.f32 %v3613, %v3613
  %v3618 = vadd.f32 %v3614, %v3615
  %v3619 = vadd.f32 %v3618, %v3616
  %v3620 = vadd.f32 %v3619, %v3617
  %3621 = vadd.xlane.f32.xlu0 %v3620
  %v3622 = vpop.xlane.xlu0 %3621
  %v3623 = vmul.f32 %v3622, 0.001953125
  %v3624 = vld [vmem:[%s8] sm:$0xff]
  %v3625 = vadd.f32 %v3623, 1e-05
  %v3626 = vrsqrt.pop %v3625
  %v3627 = vmul.f32 %v3624, %v3626
  %3629 = vset.pattern.permute.xlu0 0
  %3630 = vperm.xlu0 %3629, %v3627
  %v3631 = vpop.permute.xlu0 %3630
  %v3633 = vmul.f32 %v3610, %v3631
  %v3634 = vmul.f32 %v3611, %v3631
  %v3635 = vmul.f32 %v3612, %v3631
  %v3636 = vmul.f32 %v3613, %v3631
  %v3637 = vld [vmem:[%s9] sm:$0xff]
  %3639 = vset.pattern.permute.xlu0 0
  %3640 = vperm.xlu0 %3639, %v3637
  %v3641 = vpop.permute.xlu0 %3640
  %v3643 = vadd.f32 %v3633, %v3641
  %v3644 = vadd.f32 %v3634, %v3641
  %v3645 = vadd.f32 %v3635, %v3641
  %v3646 = vadd.f32 %v3636, %v3641
  %3647 = vst [vmem:[%s10] sm:$0xff] %v3643
  %3648 = vst [vmem:[%s10 + $0x8] sm:$0xff] %v3644
  %s3649 = scalar_lea.vmem %s10, 16
  %3650 = vst [vmem:[%s3649] sm:$0xff] %v3645
  %3651 = vst [vmem:[%s3649 + $0x8] sm:$0xff] %v3646
  // Predicated region
  $region42: #{st_conv_block_forward.1} parent=0 // pred_check
    _
  $region43: #{st_conv_block_forward.1} parent=0 // pred_check_branch
    %3653 = sbr.rel (0) target = $region45
  $region44: #{st_conv_block_forward.1} parent=0 // pred_region
    _
  $region45: #{st_conv_block_forward.1} parent=0 // pred_fallthru
    _
  // Predicated region
  $region46: #{st_conv_block_forward.1} parent=0 // pred_check
    _
  $region47: #{st_conv_block_forward.1} parent=0 // pred_check_branch
    %3655 = sbr.rel (0) target = $region49
  $region48: #{st_conv_block_forward.1} parent=0 // pred_region
    _
  $region49: #{st_conv_block_forward.1} parent=0 // pred_fallthru
    _

</llo_original>
